<compile_context>
chip_gen: v7x
topology: tpu7x:2x2x1
jax: 0.10.0
libtpu: 0.0.40
codegen_flags: <defaults>
</compile_context>

<pallas_src>
import jax
import jax.numpy as jnp
import numpy as np
from jax.experimental import pallas as pl
from jax.experimental.pallas import tpu as pltpu

_LANE = 128  # TPU lane width; each gate is padded to a multiple of this.


def _round_up(n, m):
    return ((n + m - 1) // m) * m


def _gru_fused_kernel(x_ref, wih1_ref, whh1_ref, bx1_ref, bn1_ref,
                      wih2_ref, whh2_ref, bx2_ref, bn2_ref,
                      out_ref, gx1_ref, y1_ref, gx2_ref):
    """Fused 2-layer GRU forward.

    x_ref    : (T*B, D)      time-major input, flattened over (T, B)
    wih*_ref : (Din_pad,3*G) input->gate weights, lane-padded per gate
    whh*_ref : (G, 3*G)      hidden->gate weights, lane-padded per gate
    bx*_ref  : (1, 3*G)      b_ih (+ b_hh for r,z gates) folded into GX
    bn*_ref  : (1, G)        b_hh of the n gate (applied inside r * (...))
    out_ref  : (B, H2)       final hidden state of layer 2 (model output)
    gx*_ref  : (T*B, 3*G)    VMEM scratch: precomputed input projections
    y1_ref   : (T*B, G1)     VMEM scratch: layer-1 output sequence (padded)
    """
    TB = gx1_ref.shape[0]
    B = out_ref.shape[0]
    T = TB // B
    G1 = y1_ref.shape[1]
    G2 = bn2_ref.shape[1]
    H2 = out_ref.shape[1]

    # ---------------- layer 1 ----------------
    # Hoisted, time-independent input projection: one batched MXU matmul for
    # all T steps, biases pre-folded.  Gate order (PyTorch): [r, z, n].
    gx1_ref[...] = jnp.dot(x_ref[...], wih1_ref[...],
                           preferred_element_type=jnp.float32) + bx1_ref[...]

    whh1 = whh1_ref[...]
    bn1 = bn1_ref[...]

    def step1(t, h):
        base = pl.multiple_of(t * B, B)
        gx = gx1_ref[pl.ds(base, B), :]                          # (B, 3*G1)
        gh = jnp.dot(h, whh1, preferred_element_type=jnp.float32)
        r = jax.nn.sigmoid(gx[:, :G1] + gh[:, :G1])
        z = jax.nn.sigmoid(gx[:, G1:2 * G1] + gh[:, G1:2 * G1])
        n = jnp.tanh(gx[:, 2 * G1:] + r * (gh[:, 2 * G1:] + bn1))
        h_new = (1.0 - z) * n + z * h
        y1_ref[pl.ds(base, B), :] = h_new                        # stays in VMEM
        return h_new

    h1 = jnp.zeros((B, G1), jnp.float32)                         # torch h0 = 0
    jax.lax.fori_loop(0, T, step1, h1, unroll=True)

    # ---------------- layer 2 ----------------
    # Layer-1 outputs never leave VMEM; hoisted input projection again.
    gx2_ref[...] = jnp.dot(y1_ref[...], wih2_ref[...],
                           preferred_element_type=jnp.float32) + bx2_ref[...]

    whh2 = whh2_ref[...]
    bn2 = bn2_ref[...]

    def step2(t, h):
        base = pl.multiple_of(t * B, B)
        gx = gx2_ref[pl.ds(base, B), :]                          # (B, 3*G2)
        gh = jnp.dot(h, whh2, preferred_element_type=jnp.float32)
        r = jax.nn.sigmoid(gx[:, :G2] + gh[:, :G2])
        z = jax.nn.sigmoid(gx[:, G2:2 * G2] + gh[:, G2:2 * G2])
        n = jnp.tanh(gx[:, 2 * G2:] + r * (gh[:, 2 * G2:] + bn2))
        return (1.0 - z) * n + z * h

    h2 = jnp.zeros((B, G2), jnp.float32)
    h2 = jax.lax.fori_loop(0, T, step2, h2, unroll=True)

    # Only the final hidden state of layer 2 is the model output; the full
    # (T, B, H) sequences are never written back to HBM.
    out_ref[...] = h2[:, :H2].astype(out_ref.dtype)


def _prep_gru_params(w_ih, w_hh, b_ih, b_hh, d_in_pad):
    """Repack torch-layout GRU params into lane-aligned, bias-folded form."""
    w_ih = jnp.asarray(w_ih, jnp.float32)
    w_hh = jnp.asarray(w_hh, jnp.float32)
    b_ih = jnp.asarray(b_ih, jnp.float32)
    b_hh = jnp.asarray(b_hh, jnp.float32)
    h3, d_in = w_ih.shape
    h = h3 // 3
    g = _round_up(h, _LANE)

    wih_p = jnp.zeros((d_in_pad, 3 * g), jnp.float32)
    whh_p = jnp.zeros((g, 3 * g), jnp.float32)
    bx = jnp.zeros((1, 3 * g), jnp.float32)
    bn = jnp.zeros((1, g), jnp.float32)
    for k in range(3):                               # gate order: r, z, n
        wih_p = wih_p.at[:d_in, k * g:k * g + h].set(w_ih[k * h:(k + 1) * h, :].T)
        whh_p = whh_p.at[:h, k * g:k * g + h].set(w_hh[k * h:(k + 1) * h, :].T)
        if k < 2:                                    # r, z: fold b_ih + b_hh into GX
            bx = bx.at[0, k * g:k * g + h].set(
                b_ih[k * h:(k + 1) * h] + b_hh[k * h:(k + 1) * h])
        else:                                        # n: b_hh stays inside r * (...)
            bx = bx.at[0, k * g:k * g + h].set(b_ih[k * h:(k + 1) * h])
            bn = bn.at[0, :h].set(b_hh[k * h:(k + 1) * h])
    return wih_p, whh_p, bx, bn, h, g


def gru_model_forward(x, params1, params2):
    """Equivalent of GRUModel.forward: returns final hidden of layer 2, (B, H)."""
    T, B, D = x.shape
    wih1, whh1, bx1, bn1, _hid1, g1 = _prep_gru_params(*params1, d_in_pad=D)
    # Layer 2 consumes the lane-padded layer-1 outputs (width g1).
    wih2, whh2, bx2, bn2, hid2, g2 = _prep_gru_params(*params2, d_in_pad=g1)

    x2d = x.reshape(T * B, D).astype(jnp.float32)

    return pl.pallas_call(
        _gru_fused_kernel,
        out_shape=jax.ShapeDtypeStruct((B, hid2), jnp.float32),
        grid_spec=pltpu.PrefetchScalarGridSpec(
            num_scalar_prefetch=0,
            grid=(1,),                    # single invocation: everything fits VMEM
            in_specs=[
                pl.BlockSpec((T * B, D), lambda i: (0, 0)),
                pl.BlockSpec((D, 3 * g1), lambda i: (0, 0)),
                pl.BlockSpec((g1, 3 * g1), lambda i: (0, 0)),
                pl.BlockSpec((1, 3 * g1), lambda i: (0, 0)),
                pl.BlockSpec((1, g1), lambda i: (0, 0)),
                pl.BlockSpec((g1, 3 * g2), lambda i: (0, 0)),
                pl.BlockSpec((g2, 3 * g2), lambda i: (0, 0)),
                pl.BlockSpec((1, 3 * g2), lambda i: (0, 0)),
                pl.BlockSpec((1, g2), lambda i: (0, 0)),
            ],
            out_specs=pl.BlockSpec((B, hid2), lambda i: (0, 0)),
            scratch_shapes=[
                pltpu.VMEM((T * B, 3 * g1), jnp.float32),   # GX1 (hoisted proj)
                pltpu.VMEM((T * B, g1), jnp.float32),       # layer-1 output seq
                pltpu.VMEM((T * B, 3 * g2), jnp.float32),   # GX2 (hoisted proj)
            ],
        ),
        compiler_params=pltpu.CompilerParams(
            dimension_semantics=("arbitrary",)),            # recurrence
    )(x2d, wih1, whh1, bx1, bn1, wih2, whh2, bx2, bn2)


def gru_layer_ref(x, w_ih, w_hh, b_ih, b_hh):
    """Pure-JAX reference (torch.nn.GRU semantics)."""
    H = w_hh.shape[1]

    def step(h, x_t):
        gx = x_t @ w_ih.T + b_ih
        gh = h @ w_hh.T + b_hh
        r = jax.nn.sigmoid(gx[:, :H] + gh[:, :H])
        z = jax.nn.sigmoid(gx[:, H:2 * H] + gh[:, H:2 * H])
        n = jnp.tanh(gx[:, 2 * H:] + r * gh[:, 2 * H:])
        h_new = (1.0 - z) * n + z * h
        return h_new, h_new

    h0 = jnp.zeros((x.shape[1], H), jnp.float32)
    _, ys = jax.lax.scan(step, h0, x)
    return ys


def init_gru_params(key, input_size, hidden_size):
    """Deterministic init matching torch.nn.GRU parameter shapes."""
    k = 1.0 / np.sqrt(hidden_size)
    k1, k2, k3, k4 = jax.random.split(key, 4)
    w_ih = jax.random.uniform(k1, (3 * hidden_size, input_size), jnp.float32, -k, k)
    w_hh = jax.random.uniform(k2, (3 * hidden_size, hidden_size), jnp.float32, -k, k)
    b_ih = jax.random.uniform(k3, (3 * hidden_size,), jnp.float32, -k, k)
    b_hh = jax.random.uniform(k4, (3 * hidden_size,), jnp.float32, -k, k)
    return w_ih, w_hh, b_ih, b_hh


if __name__ == "__main__":
    T, B = 8, 8
    input_dim, hidden_dim = 16, 32

    key = jax.random.PRNGKey(0)
    kx, kp1, kp2 = jax.random.split(key, 3)

    x = jax.random.normal(kx, (T, B, input_dim), jnp.float32)
    params1 = init_gru_params(kp1, input_dim, 2 * hidden_dim)   # GRU_layer1
    params2 = init_gru_params(kp2, 2 * hidden_dim, hidden_dim)  # GRU_layer2

    fwd = jax.jit(gru_model_forward)
    hidden = fwd(x, params1, params2)
    jax.block_until_ready(hidden)
    assert hidden.shape == (B, hidden_dim)

    # correctness check against pure-JAX reference of the same semantics
    y1_ref = gru_layer_ref(x, *params1)
    y2_ref = gru_layer_ref(y1_ref, *params2)
    hidden_ref = y2_ref[-1]
    np.testing.assert_allclose(np.asarray(hidden), np.asarray(hidden_ref),
                               rtol=1e-4, atol=1e-5)

    print("KERNEL_OK")
</pallas_src>

<mosaic_0001>
module attributes {stable_mosaic.version = 11 : i64} {
  func.func @_gru_fused_kernel(%arg0: i32, %arg1: memref<64x16xf32, #tpu.memory_space<vmem>>, %arg2: memref<16x384xf32, #tpu.memory_space<vmem>>, %arg3: memref<128x384xf32, #tpu.memory_space<vmem>>, %arg4: memref<1x384xf32, #tpu.memory_space<vmem>>, %arg5: memref<1x128xf32, #tpu.memory_space<vmem>>, %arg6: memref<128x384xf32, #tpu.memory_space<vmem>>, %arg7: memref<128x384xf32, #tpu.memory_space<vmem>>, %arg8: memref<1x384xf32, #tpu.memory_space<vmem>>, %arg9: memref<1x128xf32, #tpu.memory_space<vmem>>, %arg10: memref<8x32xf32, #tpu.memory_space<vmem>>, %arg11: memref<64x384xf32, #tpu.memory_space<vmem>>, %arg12: memref<64x128xf32, #tpu.memory_space<vmem>>, %arg13: memref<64x384xf32, #tpu.memory_space<vmem>>) attributes {dimension_semantics = [#tpu.dimension_semantics<arbitrary>], iteration_bounds = array<i64: 1>, scalar_prefetch = 0 : i64, scratch_operands = 3 : i64, tpu.core_type = #tpu.core_type<tc>, window_params = [{pipeline_mode = #tpu.pipeline_mode<synchronous>, transform_indices = @transform_0, window_bounds = array<i64: 64, 16>}, {pipeline_mode = #tpu.pipeline_mode<synchronous>, transform_indices = @transform_1, window_bounds = array<i64: 16, 384>}, {pipeline_mode = #tpu.pipeline_mode<synchronous>, transform_indices = @transform_2, window_bounds = array<i64: 128, 384>}, {pipeline_mode = #tpu.pipeline_mode<synchronous>, transform_indices = @transform_3, window_bounds = array<i64: 1, 384>}, {pipeline_mode = #tpu.pipeline_mode<synchronous>, transform_indices = @transform_4, window_bounds = array<i64: 1, 128>}, {pipeline_mode = #tpu.pipeline_mode<synchronous>, transform_indices = @transform_5, window_bounds = array<i64: 128, 384>}, {pipeline_mode = #tpu.pipeline_mode<synchronous>, transform_indices = @transform_6, window_bounds = array<i64: 128, 384>}, {pipeline_mode = #tpu.pipeline_mode<synchronous>, transform_indices = @transform_7, window_bounds = array<i64: 1, 384>}, {pipeline_mode = #tpu.pipeline_mode<synchronous>, transform_indices = @transform_8, window_bounds = array<i64: 1, 128>}, {pipeline_mode = #tpu.pipeline_mode<synchronous>, transform_indices = @transform_9, window_bounds = array<i64: 8, 32>}]} {
    %c0 = arith.constant 0 : index
    %c0_0 = arith.constant 0 : index
    %0 = vector.load %arg1[%c0, %c0_0] : memref<64x16xf32, #tpu.memory_space<vmem>>, vector<64x16xf32>
    %c0_1 = arith.constant 0 : index
    %c0_2 = arith.constant 0 : index
    %1 = vector.load %arg2[%c0_1, %c0_2] : memref<16x384xf32, #tpu.memory_space<vmem>>, vector<16x384xf32>
    %cst = arith.constant dense<0.000000e+00> : vector<64x384xf32>
    %2 = tpu.matmul %0, %1, %cst {dimension_numbers = #tpu.dot_dimension_numbers<[1], [0], [0], [1], [0, 0, 1, 1], [], []>} : vector<64x16xf32>, vector<16x384xf32>, vector<64x384xf32> -> vector<64x384xf32>
    %c0_3 = arith.constant 0 : index
    %c0_4 = arith.constant 0 : index
    %3 = vector.load %arg4[%c0_3, %c0_4] : memref<1x384xf32, #tpu.memory_space<vmem>>, vector<1x384xf32>
    %4 = vector.broadcast %3 : vector<1x384xf32> to vector<64x384xf32>
    %5 = arith.addf %2, %4 : vector<64x384xf32>
    %c0_5 = arith.constant 0 : index
    %c0_6 = arith.constant 0 : index
    %6 = vector.load %arg11[%c0_5, %c0_6] : memref<64x384xf32, #tpu.memory_space<vmem>>, vector<64x384xf32>
    tpu.vector_store %arg11[%c0_5, %c0_6], %5 {strides = array<i32>} : memref<64x384xf32, #tpu.memory_space<vmem>>, vector<64x384xf32>,
    %c0_7 = arith.constant 0 : index
    %c0_8 = arith.constant 0 : index
    %7 = vector.load %arg3[%c0_7, %c0_8] : memref<128x384xf32, #tpu.memory_space<vmem>>, vector<128x384xf32>
    %c0_9 = arith.constant 0 : index
    %c0_10 = arith.constant 0 : index
    %8 = vector.load %arg5[%c0_9, %c0_10] : memref<1x128xf32, #tpu.memory_space<vmem>>, vector<1x128xf32>
    %cst_11 = arith.constant 0.000000e+00 : f32
    %9 = vector.broadcast %cst_11 : f32 to vector<8x128xf32>
    %c0_i32 = arith.constant 0 : i32
    %c8_i32 = arith.constant 8 : i32
    %10 = arith.muli %c0_i32, %c8_i32 : i32
    %11 = tpu.assume_multiple %10, 8 : i32
    %12 = arith.index_cast %11 : i32 to index
    %c0_12 = arith.constant 0 : index
    %13 = vector.load %arg11[%12, %c0_12] : memref<64x384xf32, #tpu.memory_space<vmem>>, vector<8x384xf32>
    %cst_13 = arith.constant dense<0.000000e+00> : vector<8x384xf32>
    %14 = tpu.matmul %9, %7, %cst_13 {dimension_numbers = #tpu.dot_dimension_numbers<[1], [0], [0], [1], [0, 0, 1, 1], [], []>} : vector<8x128xf32>, vector<128x384xf32>, vector<8x384xf32> -> vector<8x384xf32>
    %15 = vector.extract_strided_slice %13 {offsets = [0, 0], sizes = [8, 128], strides = [1, 1]} : vector<8x384xf32> to vector<8x128xf32>
    %16 = vector.extract_strided_slice %14 {offsets = [0, 0], sizes = [8, 128], strides = [1, 1]} : vector<8x384xf32> to vector<8x128xf32>
    %17 = arith.addf %15, %16 : vector<8x128xf32>
    %18 = arith.negf %17 : vector<8x128xf32>
    %19 = math.exp %18 : vector<8x128xf32>
    %cst_14 = arith.constant 1.000000e+00 : f32
    %20 = vector.broadcast %cst_14 : f32 to vector<8x128xf32>
    %21 = arith.addf %20, %19 : vector<8x128xf32>
    %22 = arith.divf %20, %21 : vector<8x128xf32>
    %23 = vector.extract_strided_slice %13 {offsets = [0, 128], sizes = [8, 128], strides = [1, 1]} : vector<8x384xf32> to vector<8x128xf32>
    %24 = vector.extract_strided_slice %14 {offsets = [0, 128], sizes = [8, 128], strides = [1, 1]} : vector<8x384xf32> to vector<8x128xf32>
    %25 = arith.addf %23, %24 : vector<8x128xf32>
    %26 = arith.negf %25 : vector<8x128xf32>
    %27 = math.exp %26 : vector<8x128xf32>
    %cst_15 = arith.constant 1.000000e+00 : f32
    %28 = vector.broadcast %cst_15 : f32 to vector<8x128xf32>
    %29 = arith.addf %28, %27 : vector<8x128xf32>
    %30 = arith.divf %28, %29 : vector<8x128xf32>
    %31 = vector.extract_strided_slice %13 {offsets = [0, 256], sizes = [8, 128], strides = [1, 1]} : vector<8x384xf32> to vector<8x128xf32>
    %32 = vector.extract_strided_slice %14 {offsets = [0, 256], sizes = [8, 128], strides = [1, 1]} : vector<8x384xf32> to vector<8x128xf32>
    %33 = vector.broadcast %8 : vector<1x128xf32> to vector<8x128xf32>
    %34 = arith.addf %32, %33 : vector<8x128xf32>
    %35 = arith.mulf %22, %34 : vector<8x128xf32>
    %36 = arith.addf %31, %35 : vector<8x128xf32>
    %37 = math.tanh %36 : vector<8x128xf32>
    %cst_16 = arith.constant 1.000000e+00 : f32
    %38 = vector.broadcast %cst_16 : f32 to vector<8x128xf32>
    %39 = arith.subf %38, %30 : vector<8x128xf32>
    %40 = arith.mulf %39, %37 : vector<8x128xf32>
    %41 = arith.mulf %30, %9 : vector<8x128xf32>
    %42 = arith.addf %40, %41 : vector<8x128xf32>
    %43 = arith.index_cast %11 : i32 to index
    %c0_17 = arith.constant 0 : index
    %44 = vector.load %arg12[%43, %c0_17] : memref<64x128xf32, #tpu.memory_space<vmem>>, vector<8x128xf32>
    tpu.vector_store %arg12[%43, %c0_17], %42 {strides = array<i32>} : memref<64x128xf32, #tpu.memory_space<vmem>>, vector<8x128xf32>,
    %c1_i32 = arith.constant 1 : i32
    %c8_i32_18 = arith.constant 8 : i32
    %45 = arith.muli %c1_i32, %c8_i32_18 : i32
    %46 = tpu.assume_multiple %45, 8 : i32
    %47 = arith.index_cast %46 : i32 to index
    %c0_19 = arith.constant 0 : index
    %48 = vector.load %arg11[%47, %c0_19] : memref<64x384xf32, #tpu.memory_space<vmem>>, vector<8x384xf32>
    %cst_20 = arith.constant dense<0.000000e+00> : vector<8x384xf32>
    %49 = tpu.matmul %42, %7, %cst_20 {dimension_numbers = #tpu.dot_dimension_numbers<[1], [0], [0], [1], [0, 0, 1, 1], [], []>} : vector<8x128xf32>, vector<128x384xf32>, vector<8x384xf32> -> vector<8x384xf32>
    %50 = vector.extract_strided_slice %48 {offsets = [0, 0], sizes = [8, 128], strides = [1, 1]} : vector<8x384xf32> to vector<8x128xf32>
    %51 = vector.extract_strided_slice %49 {offsets = [0, 0], sizes = [8, 128], strides = [1, 1]} : vector<8x384xf32> to vector<8x128xf32>
    %52 = arith.addf %50, %51 : vector<8x128xf32>
    %53 = arith.negf %52 : vector<8x128xf32>
    %54 = math.exp %53 : vector<8x128xf32>
    %cst_21 = arith.constant 1.000000e+00 : f32
    %55 = vector.broadcast %cst_21 : f32 to vector<8x128xf32>
    %56 = arith.addf %55, %54 : vector<8x128xf32>
    %57 = arith.divf %55, %56 : vector<8x128xf32>
    %58 = vector.extract_strided_slice %48 {offsets = [0, 128], sizes = [8, 128], strides = [1, 1]} : vector<8x384xf32> to vector<8x128xf32>
    %59 = vector.extract_strided_slice %49 {offsets = [0, 128], sizes = [8, 128], strides = [1, 1]} : vector<8x384xf32> to vector<8x128xf32>
    %60 = arith.addf %58, %59 : vector<8x128xf32>
    %61 = arith.negf %60 : vector<8x128xf32>
    %62 = math.exp %61 : vector<8x128xf32>
    %cst_22 = arith.constant 1.000000e+00 : f32
    %63 = vector.broadcast %cst_22 : f32 to vector<8x128xf32>
    %64 = arith.addf %63, %62 : vector<8x128xf32>
    %65 = arith.divf %63, %64 : vector<8x128xf32>
    %66 = vector.extract_strided_slice %48 {offsets = [0, 256], sizes = [8, 128], strides = [1, 1]} : vector<8x384xf32> to vector<8x128xf32>
    %67 = vector.extract_strided_slice %49 {offsets = [0, 256], sizes = [8, 128], strides = [1, 1]} : vector<8x384xf32> to vector<8x128xf32>
    %68 = vector.broadcast %8 : vector<1x128xf32> to vector<8x128xf32>
    %69 = arith.addf %67, %68 : vector<8x128xf32>
    %70 = arith.mulf %57, %69 : vector<8x128xf32>
    %71 = arith.addf %66, %70 : vector<8x128xf32>
    %72 = math.tanh %71 : vector<8x128xf32>
    %cst_23 = arith.constant 1.000000e+00 : f32
    %73 = vector.broadcast %cst_23 : f32 to vector<8x128xf32>
    %74 = arith.subf %73, %65 : vector<8x128xf32>
    %75 = arith.mulf %74, %72 : vector<8x128xf32>
    %76 = arith.mulf %65, %42 : vector<8x128xf32>
    %77 = arith.addf %75, %76 : vector<8x128xf32>
    %78 = arith.index_cast %46 : i32 to index
    %c0_24 = arith.constant 0 : index
    %79 = vector.load %arg12[%78, %c0_24] : memref<64x128xf32, #tpu.memory_space<vmem>>, vector<8x128xf32>
    tpu.vector_store %arg12[%78, %c0_24], %77 {strides = array<i32>} : memref<64x128xf32, #tpu.memory_space<vmem>>, vector<8x128xf32>,
    %c2_i32 = arith.constant 2 : i32
    %c8_i32_25 = arith.constant 8 : i32
    %80 = arith.muli %c2_i32, %c8_i32_25 : i32
    %81 = tpu.assume_multiple %80, 8 : i32
    %82 = arith.index_cast %81 : i32 to index
    %c0_26 = arith.constant 0 : index
    %83 = vector.load %arg11[%82, %c0_26] : memref<64x384xf32, #tpu.memory_space<vmem>>, vector<8x384xf32>
    %cst_27 = arith.constant dense<0.000000e+00> : vector<8x384xf32>
    %84 = tpu.matmul %77, %7, %cst_27 {dimension_numbers = #tpu.dot_dimension_numbers<[1], [0], [0], [1], [0, 0, 1, 1], [], []>} : vector<8x128xf32>, vector<128x384xf32>, vector<8x384xf32> -> vector<8x384xf32>
    %85 = vector.extract_strided_slice %83 {offsets = [0, 0], sizes = [8, 128], strides = [1, 1]} : vector<8x384xf32> to vector<8x128xf32>
    %86 = vector.extract_strided_slice %84 {offsets = [0, 0], sizes = [8, 128], strides = [1, 1]} : vector<8x384xf32> to vector<8x128xf32>
    %87 = arith.addf %85, %86 : vector<8x128xf32>
    %88 = arith.negf %87 : vector<8x128xf32>
    %89 = math.exp %88 : vector<8x128xf32>
    %cst_28 = arith.constant 1.000000e+00 : f32
    %90 = vector.broadcast %cst_28 : f32 to vector<8x128xf32>
    %91 = arith.addf %90, %89 : vector<8x128xf32>
    %92 = arith.divf %90, %91 : vector<8x128xf32>
    %93 = vector.extract_strided_slice %83 {offsets = [0, 128], sizes = [8, 128], strides = [1, 1]} : vector<8x384xf32> to vector<8x128xf32>
    %94 = vector.extract_strided_slice %84 {offsets = [0, 128], sizes = [8, 128], strides = [1, 1]} : vector<8x384xf32> to vector<8x128xf32>
    %95 = arith.addf %93, %94 : vector<8x128xf32>
    %96 = arith.negf %95 : vector<8x128xf32>
    %97 = math.exp %96 : vector<8x128xf32>
    %cst_29 = arith.constant 1.000000e+00 : f32
    %98 = vector.broadcast %cst_29 : f32 to vector<8x128xf32>
    %99 = arith.addf %98, %97 : vector<8x128xf32>
    %100 = arith.divf %98, %99 : vector<8x128xf32>
    %101 = vector.extract_strided_slice %83 {offsets = [0, 256], sizes = [8, 128], strides = [1, 1]} : vector<8x384xf32> to vector<8x128xf32>
    %102 = vector.extract_strided_slice %84 {offsets = [0, 256], sizes = [8, 128], strides = [1, 1]} : vector<8x384xf32> to vector<8x128xf32>
    %103 = vector.broadcast %8 : vector<1x128xf32> to vector<8x128xf32>
    %104 = arith.addf %102, %103 : vector<8x128xf32>
    %105 = arith.mulf %92, %104 : vector<8x128xf32>
    %106 = arith.addf %101, %105 : vector<8x128xf32>
    %107 = math.tanh %106 : vector<8x128xf32>
    %cst_30 = arith.constant 1.000000e+00 : f32
    %108 = vector.broadcast %cst_30 : f32 to vector<8x128xf32>
    %109 = arith.subf %108, %100 : vector<8x128xf32>
    %110 = arith.mulf %109, %107 : vector<8x128xf32>
    %111 = arith.mulf %100, %77 : vector<8x128xf32>
    %112 = arith.addf %110, %111 : vector<8x128xf32>
    %113 = arith.index_cast %81 : i32 to index
    %c0_31 = arith.constant 0 : index
    %114 = vector.load %arg12[%113, %c0_31] : memref<64x128xf32, #tpu.memory_space<vmem>>, vector<8x128xf32>
    tpu.vector_store %arg12[%113, %c0_31], %112 {strides = array<i32>} : memref<64x128xf32, #tpu.memory_space<vmem>>, vector<8x128xf32>,
    %c3_i32 = arith.constant 3 : i32
    %c8_i32_32 = arith.constant 8 : i32
    %115 = arith.muli %c3_i32, %c8_i32_32 : i32
    %116 = tpu.assume_multiple %115, 8 : i32
    %117 = arith.index_cast %116 : i32 to index
    %c0_33 = arith.constant 0 : index
    %118 = vector.load %arg11[%117, %c0_33] : memref<64x384xf32, #tpu.memory_space<vmem>>, vector<8x384xf32>
    %cst_34 = arith.constant dense<0.000000e+00> : vector<8x384xf32>
    %119 = tpu.matmul %112, %7, %cst_34 {dimension_numbers = #tpu.dot_dimension_numbers<[1], [0], [0], [1], [0, 0, 1, 1], [], []>} : vector<8x128xf32>, vector<128x384xf32>, vector<8x384xf32> -> vector<8x384xf32>
    %120 = vector.extract_strided_slice %118 {offsets = [0, 0], sizes = [8, 128], strides = [1, 1]} : vector<8x384xf32> to vector<8x128xf32>
    %121 = vector.extract_strided_slice %119 {offsets = [0, 0], sizes = [8, 128], strides = [1, 1]} : vector<8x384xf32> to vector<8x128xf32>
    %122 = arith.addf %120, %121 : vector<8x128xf32>
    %123 = arith.negf %122 : vector<8x128xf32>
    %124 = math.exp %123 : vector<8x128xf32>
    %cst_35 = arith.constant 1.000000e+00 : f32
    %125 = vector.broadcast %cst_35 : f32 to vector<8x128xf32>
    %126 = arith.addf %125, %124 : vector<8x128xf32>
    %127 = arith.divf %125, %126 : vector<8x128xf32>
    %128 = vector.extract_strided_slice %118 {offsets = [0, 128], sizes = [8, 128], strides = [1, 1]} : vector<8x384xf32> to vector<8x128xf32>
    %129 = vector.extract_strided_slice %119 {offsets = [0, 128], sizes = [8, 128], strides = [1, 1]} : vector<8x384xf32> to vector<8x128xf32>
    %130 = arith.addf %128, %129 : vector<8x128xf32>
    %131 = arith.negf %130 : vector<8x128xf32>
    %132 = math.exp %131 : vector<8x128xf32>
    %cst_36 = arith.constant 1.000000e+00 : f32
    %133 = vector.broadcast %cst_36 : f32 to vector<8x128xf32>
    %134 = arith.addf %133, %132 : vector<8x128xf32>
    %135 = arith.divf %133, %134 : vector<8x128xf32>
    %136 = vector.extract_strided_slice %118 {offsets = [0, 256], sizes = [8, 128], strides = [1, 1]} : vector<8x384xf32> to vector<8x128xf32>
    %137 = vector.extract_strided_slice %119 {offsets = [0, 256], sizes = [8, 128], strides = [1, 1]} : vector<8x384xf32> to vector<8x128xf32>
    %138 = vector.broadcast %8 : vector<1x128xf32> to vector<8x128xf32>
    %139 = arith.addf %137, %138 : vector<8x128xf32>
    %140 = arith.mulf %127, %139 : vector<8x128xf32>
    %141 = arith.addf %136, %140 : vector<8x128xf32>
    %142 = math.tanh %141 : vector<8x128xf32>
    %cst_37 = arith.constant 1.000000e+00 : f32
    %143 = vector.broadcast %cst_37 : f32 to vector<8x128xf32>
    %144 = arith.subf %143, %135 : vector<8x128xf32>
    %145 = arith.mulf %144, %142 : vector<8x128xf32>
    %146 = arith.mulf %135, %112 : vector<8x128xf32>
    %147 = arith.addf %145, %146 : vector<8x128xf32>
    %148 = arith.index_cast %116 : i32 to index
    %c0_38 = arith.constant 0 : index
    %149 = vector.load %arg12[%148, %c0_38] : memref<64x128xf32, #tpu.memory_space<vmem>>, vector<8x128xf32>
    tpu.vector_store %arg12[%148, %c0_38], %147 {strides = array<i32>} : memref<64x128xf32, #tpu.memory_space<vmem>>, vector<8x128xf32>,
    %c4_i32 = arith.constant 4 : i32
    %c8_i32_39 = arith.constant 8 : i32
    %150 = arith.muli %c4_i32, %c8_i32_39 : i32
    %151 = tpu.assume_multiple %150, 8 : i32
    %152 = arith.index_cast %151 : i32 to index
    %c0_40 = arith.constant 0 : index
    %153 = vector.load %arg11[%152, %c0_40] : memref<64x384xf32, #tpu.memory_space<vmem>>, vector<8x384xf32>
    %cst_41 = arith.constant dense<0.000000e+00> : vector<8x384xf32>
    %154 = tpu.matmul %147, %7, %cst_41 {dimension_numbers = #tpu.dot_dimension_numbers<[1], [0], [0], [1], [0, 0, 1, 1], [], []>} : vector<8x128xf32>, vector<128x384xf32>, vector<8x384xf32> -> vector<8x384xf32>
    %155 = vector.extract_strided_slice %153 {offsets = [0, 0], sizes = [8, 128], strides = [1, 1]} : vector<8x384xf32> to vector<8x128xf32>
    %156 = vector.extract_strided_slice %154 {offsets = [0, 0], sizes = [8, 128], strides = [1, 1]} : vector<8x384xf32> to vector<8x128xf32>
    %157 = arith.addf %155, %156 : vector<8x128xf32>
    %158 = arith.negf %157 : vector<8x128xf32>
    %159 = math.exp %158 : vector<8x128xf32>
    %cst_42 = arith.constant 1.000000e+00 : f32
    %160 = vector.broadcast %cst_42 : f32 to vector<8x128xf32>
    %161 = arith.addf %160, %159 : vector<8x128xf32>
    %162 = arith.divf %160, %161 : vector<8x128xf32>
    %163 = vector.extract_strided_slice %153 {offsets = [0, 128], sizes = [8, 128], strides = [1, 1]} : vector<8x384xf32> to vector<8x128xf32>
    %164 = vector.extract_strided_slice %154 {offsets = [0, 128], sizes = [8, 128], strides = [1, 1]} : vector<8x384xf32> to vector<8x128xf32>
    %165 = arith.addf %163, %164 : vector<8x128xf32>
    %166 = arith.negf %165 : vector<8x128xf32>
    %167 = math.exp %166 : vector<8x128xf32>
    %cst_43 = arith.constant 1.000000e+00 : f32
    %168 = vector.broadcast %cst_43 : f32 to vector<8x128xf32>
    %169 = arith.addf %168, %167 : vector<8x128xf32>
    %170 = arith.divf %168, %169 : vector<8x128xf32>
    %171 = vector.extract_strided_slice %153 {offsets = [0, 256], sizes = [8, 128], strides = [1, 1]} : vector<8x384xf32> to vector<8x128xf32>
    %172 = vector.extract_strided_slice %154 {offsets = [0, 256], sizes = [8, 128], strides = [1, 1]} : vector<8x384xf32> to vector<8x128xf32>
    %173 = vector.broadcast %8 : vector<1x128xf32> to vector<8x128xf32>
    %174 = arith.addf %172, %173 : vector<8x128xf32>
    %175 = arith.mulf %162, %174 : vector<8x128xf32>
    %176 = arith.addf %171, %175 : vector<8x128xf32>
    %177 = math.tanh %176 : vector<8x128xf32>
    %cst_44 = arith.constant 1.000000e+00 : f32
    %178 = vector.broadcast %cst_44 : f32 to vector<8x128xf32>
    %179 = arith.subf %178, %170 : vector<8x128xf32>
    %180 = arith.mulf %179, %177 : vector<8x128xf32>
    %181 = arith.mulf %170, %147 : vector<8x128xf32>
    %182 = arith.addf %180, %181 : vector<8x128xf32>
    %183 = arith.index_cast %151 : i32 to index
    %c0_45 = arith.constant 0 : index
    %184 = vector.load %arg12[%183, %c0_45] : memref<64x128xf32, #tpu.memory_space<vmem>>, vector<8x128xf32>
    tpu.vector_store %arg12[%183, %c0_45], %182 {strides = array<i32>} : memref<64x128xf32, #tpu.memory_space<vmem>>, vector<8x128xf32>,
    %c5_i32 = arith.constant 5 : i32
    %c8_i32_46 = arith.constant 8 : i32
    %185 = arith.muli %c5_i32, %c8_i32_46 : i32
    %186 = tpu.assume_multiple %185, 8 : i32
    %187 = arith.index_cast %186 : i32 to index
    %c0_47 = arith.constant 0 : index
    %188 = vector.load %arg11[%187, %c0_47] : memref<64x384xf32, #tpu.memory_space<vmem>>, vector<8x384xf32>
    %cst_48 = arith.constant dense<0.000000e+00> : vector<8x384xf32>
    %189 = tpu.matmul %182, %7, %cst_48 {dimension_numbers = #tpu.dot_dimension_numbers<[1], [0], [0], [1], [0, 0, 1, 1], [], []>} : vector<8x128xf32>, vector<128x384xf32>, vector<8x384xf32> -> vector<8x384xf32>
    %190 = vector.extract_strided_slice %188 {offsets = [0, 0], sizes = [8, 128], strides = [1, 1]} : vector<8x384xf32> to vector<8x128xf32>
    %191 = vector.extract_strided_slice %189 {offsets = [0, 0], sizes = [8, 128], strides = [1, 1]} : vector<8x384xf32> to vector<8x128xf32>
    %192 = arith.addf %190, %191 : vector<8x128xf32>
    %193 = arith.negf %192 : vector<8x128xf32>
    %194 = math.exp %193 : vector<8x128xf32>
    %cst_49 = arith.constant 1.000000e+00 : f32
    %195 = vector.broadcast %cst_49 : f32 to vector<8x128xf32>
    %196 = arith.addf %195, %194 : vector<8x128xf32>
    %197 = arith.divf %195, %196 : vector<8x128xf32>
    %198 = vector.extract_strided_slice %188 {offsets = [0, 128], sizes = [8, 128], strides = [1, 1]} : vector<8x384xf32> to vector<8x128xf32>
    %199 = vector.extract_strided_slice %189 {offsets = [0, 128], sizes = [8, 128], strides = [1, 1]} : vector<8x384xf32> to vector<8x128xf32>
    %200 = arith.addf %198, %199 : vector<8x128xf32>
    %201 = arith.negf %200 : vector<8x128xf32>
    %202 = math.exp %201 : vector<8x128xf32>
    %cst_50 = arith.constant 1.000000e+00 : f32
    %203 = vector.broadcast %cst_50 : f32 to vector<8x128xf32>
    %204 = arith.addf %203, %202 : vector<8x128xf32>
    %205 = arith.divf %203, %204 : vector<8x128xf32>
    %206 = vector.extract_strided_slice %188 {offsets = [0, 256], sizes = [8, 128], strides = [1, 1]} : vector<8x384xf32> to vector<8x128xf32>
    %207 = vector.extract_strided_slice %189 {offsets = [0, 256], sizes = [8, 128], strides = [1, 1]} : vector<8x384xf32> to vector<8x128xf32>
    %208 = vector.broadcast %8 : vector<1x128xf32> to vector<8x128xf32>
    %209 = arith.addf %207, %208 : vector<8x128xf32>
    %210 = arith.mulf %197, %209 : vector<8x128xf32>
    %211 = arith.addf %206, %210 : vector<8x128xf32>
    %212 = math.tanh %211 : vector<8x128xf32>
    %cst_51 = arith.constant 1.000000e+00 : f32
    %213 = vector.broadcast %cst_51 : f32 to vector<8x128xf32>
    %214 = arith.subf %213, %205 : vector<8x128xf32>
    %215 = arith.mulf %214, %212 : vector<8x128xf32>
    %216 = arith.mulf %205, %182 : vector<8x128xf32>
    %217 = arith.addf %215, %216 : vector<8x128xf32>
    %218 = arith.index_cast %186 : i32 to index
    %c0_52 = arith.constant 0 : index
    %219 = vector.load %arg12[%218, %c0_52] : memref<64x128xf32, #tpu.memory_space<vmem>>, vector<8x128xf32>
    tpu.vector_store %arg12[%218, %c0_52], %217 {strides = array<i32>} : memref<64x128xf32, #tpu.memory_space<vmem>>, vector<8x128xf32>,
    %c6_i32 = arith.constant 6 : i32
    %c8_i32_53 = arith.constant 8 : i32
    %220 = arith.muli %c6_i32, %c8_i32_53 : i32
    %221 = tpu.assume_multiple %220, 8 : i32
    %222 = arith.index_cast %221 : i32 to index
    %c0_54 = arith.constant 0 : index
    %223 = vector.load %arg11[%222, %c0_54] : memref<64x384xf32, #tpu.memory_space<vmem>>, vector<8x384xf32>
    %cst_55 = arith.constant dense<0.000000e+00> : vector<8x384xf32>
    %224 = tpu.matmul %217, %7, %cst_55 {dimension_numbers = #tpu.dot_dimension_numbers<[1], [0], [0], [1], [0, 0, 1, 1], [], []>} : vector<8x128xf32>, vector<128x384xf32>, vector<8x384xf32> -> vector<8x384xf32>
    %225 = vector.extract_strided_slice %223 {offsets = [0, 0], sizes = [8, 128], strides = [1, 1]} : vector<8x384xf32> to vector<8x128xf32>
    %226 = vector.extract_strided_slice %224 {offsets = [0, 0], sizes = [8, 128], strides = [1, 1]} : vector<8x384xf32> to vector<8x128xf32>
    %227 = arith.addf %225, %226 : vector<8x128xf32>
    %228 = arith.negf %227 : vector<8x128xf32>
    %229 = math.exp %228 : vector<8x128xf32>
    %cst_56 = arith.constant 1.000000e+00 : f32
    %230 = vector.broadcast %cst_56 : f32 to vector<8x128xf32>
    %231 = arith.addf %230, %229 : vector<8x128xf32>
    %232 = arith.divf %230, %231 : vector<8x128xf32>
    %233 = vector.extract_strided_slice %223 {offsets = [0, 128], sizes = [8, 128], strides = [1, 1]} : vector<8x384xf32> to vector<8x128xf32>
    %234 = vector.extract_strided_slice %224 {offsets = [0, 128], sizes = [8, 128], strides = [1, 1]} : vector<8x384xf32> to vector<8x128xf32>
    %235 = arith.addf %233, %234 : vector<8x128xf32>
    %236 = arith.negf %235 : vector<8x128xf32>
    %237 = math.exp %236 : vector<8x128xf32>
    %cst_57 = arith.constant 1.000000e+00 : f32
    %238 = vector.broadcast %cst_57 : f32 to vector<8x128xf32>
    %239 = arith.addf %238, %237 : vector<8x128xf32>
    %240 = arith.divf %238, %239 : vector<8x128xf32>
    %241 = vector.extract_strided_slice %223 {offsets = [0, 256], sizes = [8, 128], strides = [1, 1]} : vector<8x384xf32> to vector<8x128xf32>
    %242 = vector.extract_strided_slice %224 {offsets = [0, 256], sizes = [8, 128], strides = [1, 1]} : vector<8x384xf32> to vector<8x128xf32>
    %243 = vector.broadcast %8 : vector<1x128xf32> to vector<8x128xf32>
    %244 = arith.addf %242, %243 : vector<8x128xf32>
    %245 = arith.mulf %232, %244 : vector<8x128xf32>
    %246 = arith.addf %241, %245 : vector<8x128xf32>
    %247 = math.tanh %246 : vector<8x128xf32>
    %cst_58 = arith.constant 1.000000e+00 : f32
    %248 = vector.broadcast %cst_58 : f32 to vector<8x128xf32>
    %249 = arith.subf %248, %240 : vector<8x128xf32>
    %250 = arith.mulf %249, %247 : vector<8x128xf32>
    %251 = arith.mulf %240, %217 : vector<8x128xf32>
    %252 = arith.addf %250, %251 : vector<8x128xf32>
    %253 = arith.index_cast %221 : i32 to index
    %c0_59 = arith.constant 0 : index
    %254 = vector.load %arg12[%253, %c0_59] : memref<64x128xf32, #tpu.memory_space<vmem>>, vector<8x128xf32>
    tpu.vector_store %arg12[%253, %c0_59], %252 {strides = array<i32>} : memref<64x128xf32, #tpu.memory_space<vmem>>, vector<8x128xf32>,
    %c7_i32 = arith.constant 7 : i32
    %c8_i32_60 = arith.constant 8 : i32
    %255 = arith.muli %c7_i32, %c8_i32_60 : i32
    %256 = tpu.assume_multiple %255, 8 : i32
    %257 = arith.index_cast %256 : i32 to index
    %c0_61 = arith.constant 0 : index
    %258 = vector.load %arg11[%257, %c0_61] : memref<64x384xf32, #tpu.memory_space<vmem>>, vector<8x384xf32>
    %cst_62 = arith.constant dense<0.000000e+00> : vector<8x384xf32>
    %259 = tpu.matmul %252, %7, %cst_62 {dimension_numbers = #tpu.dot_dimension_numbers<[1], [0], [0], [1], [0, 0, 1, 1], [], []>} : vector<8x128xf32>, vector<128x384xf32>, vector<8x384xf32> -> vector<8x384xf32>
    %260 = vector.extract_strided_slice %258 {offsets = [0, 0], sizes = [8, 128], strides = [1, 1]} : vector<8x384xf32> to vector<8x128xf32>
    %261 = vector.extract_strided_slice %259 {offsets = [0, 0], sizes = [8, 128], strides = [1, 1]} : vector<8x384xf32> to vector<8x128xf32>
    %262 = arith.addf %260, %261 : vector<8x128xf32>
    %263 = arith.negf %262 : vector<8x128xf32>
    %264 = math.exp %263 : vector<8x128xf32>
    %cst_63 = arith.constant 1.000000e+00 : f32
    %265 = vector.broadcast %cst_63 : f32 to vector<8x128xf32>
    %266 = arith.addf %265, %264 : vector<8x128xf32>
    %267 = arith.divf %265, %266 : vector<8x128xf32>
    %268 = vector.extract_strided_slice %258 {offsets = [0, 128], sizes = [8, 128], strides = [1, 1]} : vector<8x384xf32> to vector<8x128xf32>
    %269 = vector.extract_strided_slice %259 {offsets = [0, 128], sizes = [8, 128], strides = [1, 1]} : vector<8x384xf32> to vector<8x128xf32>
    %270 = arith.addf %268, %269 : vector<8x128xf32>
    %271 = arith.negf %270 : vector<8x128xf32>
    %272 = math.exp %271 : vector<8x128xf32>
    %cst_64 = arith.constant 1.000000e+00 : f32
    %273 = vector.broadcast %cst_64 : f32 to vector<8x128xf32>
    %274 = arith.addf %273, %272 : vector<8x128xf32>
    %275 = arith.divf %273, %274 : vector<8x128xf32>
    %276 = vector.extract_strided_slice %258 {offsets = [0, 256], sizes = [8, 128], strides = [1, 1]} : vector<8x384xf32> to vector<8x128xf32>
    %277 = vector.extract_strided_slice %259 {offsets = [0, 256], sizes = [8, 128], strides = [1, 1]} : vector<8x384xf32> to vector<8x128xf32>
    %278 = vector.broadcast %8 : vector<1x128xf32> to vector<8x128xf32>
    %279 = arith.addf %277, %278 : vector<8x128xf32>
    %280 = arith.mulf %267, %279 : vector<8x128xf32>
    %281 = arith.addf %276, %280 : vector<8x128xf32>
    %282 = math.tanh %281 : vector<8x128xf32>
    %cst_65 = arith.constant 1.000000e+00 : f32
    %283 = vector.broadcast %cst_65 : f32 to vector<8x128xf32>
    %284 = arith.subf %283, %275 : vector<8x128xf32>
    %285 = arith.mulf %284, %282 : vector<8x128xf32>
    %286 = arith.mulf %275, %252 : vector<8x128xf32>
    %287 = arith.addf %285, %286 : vector<8x128xf32>
    %288 = arith.index_cast %256 : i32 to index
    %c0_66 = arith.constant 0 : index
    %289 = vector.load %arg12[%288, %c0_66] : memref<64x128xf32, #tpu.memory_space<vmem>>, vector<8x128xf32>
    tpu.vector_store %arg12[%288, %c0_66], %287 {strides = array<i32>} : memref<64x128xf32, #tpu.memory_space<vmem>>, vector<8x128xf32>,
    %c8_i32_67 = arith.constant 8 : i32
    %c0_68 = arith.constant 0 : index
    %c0_69 = arith.constant 0 : index
    %290 = vector.load %arg12[%c0_68, %c0_69] : memref<64x128xf32, #tpu.memory_space<vmem>>, vector<64x128xf32>
    %c0_70 = arith.constant 0 : index
    %c0_71 = arith.constant 0 : index
    %291 = vector.load %arg6[%c0_70, %c0_71] : memref<128x384xf32, #tpu.memory_space<vmem>>, vector<128x384xf32>
    %cst_72 = arith.constant dense<0.000000e+00> : vector<64x384xf32>
    %292 = tpu.matmul %290, %291, %cst_72 {dimension_numbers = #tpu.dot_dimension_numbers<[1], [0], [0], [1], [0, 0, 1, 1], [], []>} : vector<64x128xf32>, vector<128x384xf32>, vector<64x384xf32> -> vector<64x384xf32>
    %c0_73 = arith.constant 0 : index
    %c0_74 = arith.constant 0 : index
    %293 = vector.load %arg8[%c0_73, %c0_74] : memref<1x384xf32, #tpu.memory_space<vmem>>, vector<1x384xf32>
    %294 = vector.broadcast %293 : vector<1x384xf32> to vector<64x384xf32>
    %295 = arith.addf %292, %294 : vector<64x384xf32>
    %c0_75 = arith.constant 0 : index
    %c0_76 = arith.constant 0 : index
    %296 = vector.load %arg13[%c0_75, %c0_76] : memref<64x384xf32, #tpu.memory_space<vmem>>, vector<64x384xf32>
    tpu.vector_store %arg13[%c0_75, %c0_76], %295 {strides = array<i32>} : memref<64x384xf32, #tpu.memory_space<vmem>>, vector<64x384xf32>,
    %c0_77 = arith.constant 0 : index
    %c0_78 = arith.constant 0 : index
    %297 = vector.load %arg7[%c0_77, %c0_78] : memref<128x384xf32, #tpu.memory_space<vmem>>, vector<128x384xf32>
    %c0_79 = arith.constant 0 : index
    %c0_80 = arith.constant 0 : index
    %298 = vector.load %arg9[%c0_79, %c0_80] : memref<1x128xf32, #tpu.memory_space<vmem>>, vector<1x128xf32>
    %cst_81 = arith.constant 0.000000e+00 : f32
    %299 = vector.broadcast %cst_81 : f32 to vector<8x128xf32>
    %c0_i32_82 = arith.constant 0 : i32
    %c8_i32_83 = arith.constant 8 : i32
    %300 = arith.muli %c0_i32_82, %c8_i32_83 : i32
    %301 = tpu.assume_multiple %300, 8 : i32
    %302 = arith.index_cast %301 : i32 to index
    %c0_84 = arith.constant 0 : index
    %303 = vector.load %arg13[%302, %c0_84] : memref<64x384xf32, #tpu.memory_space<vmem>>, vector<8x384xf32>
    %cst_85 = arith.constant dense<0.000000e+00> : vector<8x384xf32>
    %304 = tpu.matmul %299, %297, %cst_85 {dimension_numbers = #tpu.dot_dimension_numbers<[1], [0], [0], [1], [0, 0, 1, 1], [], []>} : vector<8x128xf32>, vector<128x384xf32>, vector<8x384xf32> -> vector<8x384xf32>
    %305 = vector.extract_strided_slice %303 {offsets = [0, 0], sizes = [8, 128], strides = [1, 1]} : vector<8x384xf32> to vector<8x128xf32>
    %306 = vector.extract_strided_slice %304 {offsets = [0, 0], sizes = [8, 128], strides = [1, 1]} : vector<8x384xf32> to vector<8x128xf32>
    %307 = arith.addf %305, %306 : vector<8x128xf32>
    %308 = arith.negf %307 : vector<8x128xf32>
    %309 = math.exp %308 : vector<8x128xf32>
    %cst_86 = arith.constant 1.000000e+00 : f32
    %310 = vector.broadcast %cst_86 : f32 to vector<8x128xf32>
    %311 = arith.addf %310, %309 : vector<8x128xf32>
    %312 = arith.divf %310, %311 : vector<8x128xf32>
    %313 = vector.extract_strided_slice %303 {offsets = [0, 128], sizes = [8, 128], strides = [1, 1]} : vector<8x384xf32> to vector<8x128xf32>
    %314 = vector.extract_strided_slice %304 {offsets = [0, 128], sizes = [8, 128], strides = [1, 1]} : vector<8x384xf32> to vector<8x128xf32>
    %315 = arith.addf %313, %314 : vector<8x128xf32>
    %316 = arith.negf %315 : vector<8x128xf32>
    %317 = math.exp %316 : vector<8x128xf32>
    %cst_87 = arith.constant 1.000000e+00 : f32
    %318 = vector.broadcast %cst_87 : f32 to vector<8x128xf32>
    %319 = arith.addf %318, %317 : vector<8x128xf32>
    %320 = arith.divf %318, %319 : vector<8x128xf32>
    %321 = vector.extract_strided_slice %303 {offsets = [0, 256], sizes = [8, 128], strides = [1, 1]} : vector<8x384xf32> to vector<8x128xf32>
    %322 = vector.extract_strided_slice %304 {offsets = [0, 256], sizes = [8, 128], strides = [1, 1]} : vector<8x384xf32> to vector<8x128xf32>
    %323 = vector.broadcast %298 : vector<1x128xf32> to vector<8x128xf32>
    %324 = arith.addf %322, %323 : vector<8x128xf32>
    %325 = arith.mulf %312, %324 : vector<8x128xf32>
    %326 = arith.addf %321, %325 : vector<8x128xf32>
    %327 = math.tanh %326 : vector<8x128xf32>
    %cst_88 = arith.constant 1.000000e+00 : f32
    %328 = vector.broadcast %cst_88 : f32 to vector<8x128xf32>
    %329 = arith.subf %328, %320 : vector<8x128xf32>
    %330 = arith.mulf %329, %327 : vector<8x128xf32>
    %331 = arith.mulf %320, %299 : vector<8x128xf32>
    %332 = arith.addf %330, %331 : vector<8x128xf32>
    %c1_i32_89 = arith.constant 1 : i32
    %c8_i32_90 = arith.constant 8 : i32
    %333 = arith.muli %c1_i32_89, %c8_i32_90 : i32
    %334 = tpu.assume_multiple %333, 8 : i32
    %335 = arith.index_cast %334 : i32 to index
    %c0_91 = arith.constant 0 : index
    %336 = vector.load %arg13[%335, %c0_91] : memref<64x384xf32, #tpu.memory_space<vmem>>, vector<8x384xf32>
    %cst_92 = arith.constant dense<0.000000e+00> : vector<8x384xf32>
    %337 = tpu.matmul %332, %297, %cst_92 {dimension_numbers = #tpu.dot_dimension_numbers<[1], [0], [0], [1], [0, 0, 1, 1], [], []>} : vector<8x128xf32>, vector<128x384xf32>, vector<8x384xf32> -> vector<8x384xf32>
    %338 = vector.extract_strided_slice %336 {offsets = [0, 0], sizes = [8, 128], strides = [1, 1]} : vector<8x384xf32> to vector<8x128xf32>
    %339 = vector.extract_strided_slice %337 {offsets = [0, 0], sizes = [8, 128], strides = [1, 1]} : vector<8x384xf32> to vector<8x128xf32>
    %340 = arith.addf %338, %339 : vector<8x128xf32>
    %341 = arith.negf %340 : vector<8x128xf32>
    %342 = math.exp %341 : vector<8x128xf32>
    %cst_93 = arith.constant 1.000000e+00 : f32
    %343 = vector.broadcast %cst_93 : f32 to vector<8x128xf32>
    %344 = arith.addf %343, %342 : vector<8x128xf32>
    %345 = arith.divf %343, %344 : vector<8x128xf32>
    %346 = vector.extract_strided_slice %336 {offsets = [0, 128], sizes = [8, 128], strides = [1, 1]} : vector<8x384xf32> to vector<8x128xf32>
    %347 = vector.extract_strided_slice %337 {offsets = [0, 128], sizes = [8, 128], strides = [1, 1]} : vector<8x384xf32> to vector<8x128xf32>
    %348 = arith.addf %346, %347 : vector<8x128xf32>
    %349 = arith.negf %348 : vector<8x128xf32>
    %350 = math.exp %349 : vector<8x128xf32>
    %cst_94 = arith.constant 1.000000e+00 : f32
    %351 = vector.broadcast %cst_94 : f32 to vector<8x128xf32>
    %352 = arith.addf %351, %350 : vector<8x128xf32>
    %353 = arith.divf %351, %352 : vector<8x128xf32>
    %354 = vector.extract_strided_slice %336 {offsets = [0, 256], sizes = [8, 128], strides = [1, 1]} : vector<8x384xf32> to vector<8x128xf32>
    %355 = vector.extract_strided_slice %337 {offsets = [0, 256], sizes = [8, 128], strides = [1, 1]} : vector<8x384xf32> to vector<8x128xf32>
    %356 = vector.broadcast %298 : vector<1x128xf32> to vector<8x128xf32>
    %357 = arith.addf %355, %356 : vector<8x128xf32>
    %358 = arith.mulf %345, %357 : vector<8x128xf32>
    %359 = arith.addf %354, %358 : vector<8x128xf32>
    %360 = math.tanh %359 : vector<8x128xf32>
    %cst_95 = arith.constant 1.000000e+00 : f32
    %361 = vector.broadcast %cst_95 : f32 to vector<8x128xf32>
    %362 = arith.subf %361, %353 : vector<8x128xf32>
    %363 = arith.mulf %362, %360 : vector<8x128xf32>
    %364 = arith.mulf %353, %332 : vector<8x128xf32>
    %365 = arith.addf %363, %364 : vector<8x128xf32>
    %c2_i32_96 = arith.constant 2 : i32
    %c8_i32_97 = arith.constant 8 : i32
    %366 = arith.muli %c2_i32_96, %c8_i32_97 : i32
    %367 = tpu.assume_multiple %366, 8 : i32
    %368 = arith.index_cast %367 : i32 to index
    %c0_98 = arith.constant 0 : index
    %369 = vector.load %arg13[%368, %c0_98] : memref<64x384xf32, #tpu.memory_space<vmem>>, vector<8x384xf32>
    %cst_99 = arith.constant dense<0.000000e+00> : vector<8x384xf32>
    %370 = tpu.matmul %365, %297, %cst_99 {dimension_numbers = #tpu.dot_dimension_numbers<[1], [0], [0], [1], [0, 0, 1, 1], [], []>} : vector<8x128xf32>, vector<128x384xf32>, vector<8x384xf32> -> vector<8x384xf32>
    %371 = vector.extract_strided_slice %369 {offsets = [0, 0], sizes = [8, 128], strides = [1, 1]} : vector<8x384xf32> to vector<8x128xf32>
    %372 = vector.extract_strided_slice %370 {offsets = [0, 0], sizes = [8, 128], strides = [1, 1]} : vector<8x384xf32> to vector<8x128xf32>
    %373 = arith.addf %371, %372 : vector<8x128xf32>
    %374 = arith.negf %373 : vector<8x128xf32>
    %375 = math.exp %374 : vector<8x128xf32>
    %cst_100 = arith.constant 1.000000e+00 : f32
    %376 = vector.broadcast %cst_100 : f32 to vector<8x128xf32>
    %377 = arith.addf %376, %375 : vector<8x128xf32>
    %378 = arith.divf %376, %377 : vector<8x128xf32>
    %379 = vector.extract_strided_slice %369 {offsets = [0, 128], sizes = [8, 128], strides = [1, 1]} : vector<8x384xf32> to vector<8x128xf32>
    %380 = vector.extract_strided_slice %370 {offsets = [0, 128], sizes = [8, 128], strides = [1, 1]} : vector<8x384xf32> to vector<8x128xf32>
    %381 = arith.addf %379, %380 : vector<8x128xf32>
    %382 = arith.negf %381 : vector<8x128xf32>
    %383 = math.exp %382 : vector<8x128xf32>
    %cst_101 = arith.constant 1.000000e+00 : f32
    %384 = vector.broadcast %cst_101 : f32 to vector<8x128xf32>
    %385 = arith.addf %384, %383 : vector<8x128xf32>
    %386 = arith.divf %384, %385 : vector<8x128xf32>
    %387 = vector.extract_strided_slice %369 {offsets = [0, 256], sizes = [8, 128], strides = [1, 1]} : vector<8x384xf32> to vector<8x128xf32>
    %388 = vector.extract_strided_slice %370 {offsets = [0, 256], sizes = [8, 128], strides = [1, 1]} : vector<8x384xf32> to vector<8x128xf32>
    %389 = vector.broadcast %298 : vector<1x128xf32> to vector<8x128xf32>
    %390 = arith.addf %388, %389 : vector<8x128xf32>
    %391 = arith.mulf %378, %390 : vector<8x128xf32>
    %392 = arith.addf %387, %391 : vector<8x128xf32>
    %393 = math.tanh %392 : vector<8x128xf32>
    %cst_102 = arith.constant 1.000000e+00 : f32
    %394 = vector.broadcast %cst_102 : f32 to vector<8x128xf32>
    %395 = arith.subf %394, %386 : vector<8x128xf32>
    %396 = arith.mulf %395, %393 : vector<8x128xf32>
    %397 = arith.mulf %386, %365 : vector<8x128xf32>
    %398 = arith.addf %396, %397 : vector<8x128xf32>
    %c3_i32_103 = arith.constant 3 : i32
    %c8_i32_104 = arith.constant 8 : i32
    %399 = arith.muli %c3_i32_103, %c8_i32_104 : i32
    %400 = tpu.assume_multiple %399, 8 : i32
    %401 = arith.index_cast %400 : i32 to index
    %c0_105 = arith.constant 0 : index
    %402 = vector.load %arg13[%401, %c0_105] : memref<64x384xf32, #tpu.memory_space<vmem>>, vector<8x384xf32>
    %cst_106 = arith.constant dense<0.000000e+00> : vector<8x384xf32>
    %403 = tpu.matmul %398, %297, %cst_106 {dimension_numbers = #tpu.dot_dimension_numbers<[1], [0], [0], [1], [0, 0, 1, 1], [], []>} : vector<8x128xf32>, vector<128x384xf32>, vector<8x384xf32> -> vector<8x384xf32>
    %404 = vector.extract_strided_slice %402 {offsets = [0, 0], sizes = [8, 128], strides = [1, 1]} : vector<8x384xf32> to vector<8x128xf32>
    %405 = vector.extract_strided_slice %403 {offsets = [0, 0], sizes = [8, 128], strides = [1, 1]} : vector<8x384xf32> to vector<8x128xf32>
    %406 = arith.addf %404, %405 : vector<8x128xf32>
    %407 = arith.negf %406 : vector<8x128xf32>
    %408 = math.exp %407 : vector<8x128xf32>
    %cst_107 = arith.constant 1.000000e+00 : f32
    %409 = vector.broadcast %cst_107 : f32 to vector<8x128xf32>
    %410 = arith.addf %409, %408 : vector<8x128xf32>
    %411 = arith.divf %409, %410 : vector<8x128xf32>
    %412 = vector.extract_strided_slice %402 {offsets = [0, 128], sizes = [8, 128], strides = [1, 1]} : vector<8x384xf32> to vector<8x128xf32>
    %413 = vector.extract_strided_slice %403 {offsets = [0, 128], sizes = [8, 128], strides = [1, 1]} : vector<8x384xf32> to vector<8x128xf32>
    %414 = arith.addf %412, %413 : vector<8x128xf32>
    %415 = arith.negf %414 : vector<8x128xf32>
    %416 = math.exp %415 : vector<8x128xf32>
    %cst_108 = arith.constant 1.000000e+00 : f32
    %417 = vector.broadcast %cst_108 : f32 to vector<8x128xf32>
    %418 = arith.addf %417, %416 : vector<8x128xf32>
    %419 = arith.divf %417, %418 : vector<8x128xf32>
    %420 = vector.extract_strided_slice %402 {offsets = [0, 256], sizes = [8, 128], strides = [1, 1]} : vector<8x384xf32> to vector<8x128xf32>
    %421 = vector.extract_strided_slice %403 {offsets = [0, 256], sizes = [8, 128], strides = [1, 1]} : vector<8x384xf32> to vector<8x128xf32>
    %422 = vector.broadcast %298 : vector<1x128xf32> to vector<8x128xf32>
    %423 = arith.addf %421, %422 : vector<8x128xf32>
    %424 = arith.mulf %411, %423 : vector<8x128xf32>
    %425 = arith.addf %420, %424 : vector<8x128xf32>
    %426 = math.tanh %425 : vector<8x128xf32>
    %cst_109 = arith.constant 1.000000e+00 : f32
    %427 = vector.broadcast %cst_109 : f32 to vector<8x128xf32>
    %428 = arith.subf %427, %419 : vector<8x128xf32>
    %429 = arith.mulf %428, %426 : vector<8x128xf32>
    %430 = arith.mulf %419, %398 : vector<8x128xf32>
    %431 = arith.addf %429, %430 : vector<8x128xf32>
    %c4_i32_110 = arith.constant 4 : i32
    %c8_i32_111 = arith.constant 8 : i32
    %432 = arith.muli %c4_i32_110, %c8_i32_111 : i32
    %433 = tpu.assume_multiple %432, 8 : i32
    %434 = arith.index_cast %433 : i32 to index
    %c0_112 = arith.constant 0 : index
    %435 = vector.load %arg13[%434, %c0_112] : memref<64x384xf32, #tpu.memory_space<vmem>>, vector<8x384xf32>
    %cst_113 = arith.constant dense<0.000000e+00> : vector<8x384xf32>
    %436 = tpu.matmul %431, %297, %cst_113 {dimension_numbers = #tpu.dot_dimension_numbers<[1], [0], [0], [1], [0, 0, 1, 1], [], []>} : vector<8x128xf32>, vector<128x384xf32>, vector<8x384xf32> -> vector<8x384xf32>
    %437 = vector.extract_strided_slice %435 {offsets = [0, 0], sizes = [8, 128], strides = [1, 1]} : vector<8x384xf32> to vector<8x128xf32>
    %438 = vector.extract_strided_slice %436 {offsets = [0, 0], sizes = [8, 128], strides = [1, 1]} : vector<8x384xf32> to vector<8x128xf32>
    %439 = arith.addf %437, %438 : vector<8x128xf32>
    %440 = arith.negf %439 : vector<8x128xf32>
    %441 = math.exp %440 : vector<8x128xf32>
    %cst_114 = arith.constant 1.000000e+00 : f32
    %442 = vector.broadcast %cst_114 : f32 to vector<8x128xf32>
    %443 = arith.addf %442, %441 : vector<8x128xf32>
    %444 = arith.divf %442, %443 : vector<8x128xf32>
    %445 = vector.extract_strided_slice %435 {offsets = [0, 128], sizes = [8, 128], strides = [1, 1]} : vector<8x384xf32> to vector<8x128xf32>
    %446 = vector.extract_strided_slice %436 {offsets = [0, 128], sizes = [8, 128], strides = [1, 1]} : vector<8x384xf32> to vector<8x128xf32>
    %447 = arith.addf %445, %446 : vector<8x128xf32>
    %448 = arith.negf %447 : vector<8x128xf32>
    %449 = math.exp %448 : vector<8x128xf32>
    %cst_115 = arith.constant 1.000000e+00 : f32
    %450 = vector.broadcast %cst_115 : f32 to vector<8x128xf32>
    %451 = arith.addf %450, %449 : vector<8x128xf32>
    %452 = arith.divf %450, %451 : vector<8x128xf32>
    %453 = vector.extract_strided_slice %435 {offsets = [0, 256], sizes = [8, 128], strides = [1, 1]} : vector<8x384xf32> to vector<8x128xf32>
    %454 = vector.extract_strided_slice %436 {offsets = [0, 256], sizes = [8, 128], strides = [1, 1]} : vector<8x384xf32> to vector<8x128xf32>
    %455 = vector.broadcast %298 : vector<1x128xf32> to vector<8x128xf32>
    %456 = arith.addf %454, %455 : vector<8x128xf32>
    %457 = arith.mulf %444, %456 : vector<8x128xf32>
    %458 = arith.addf %453, %457 : vector<8x128xf32>
    %459 = math.tanh %458 : vector<8x128xf32>
    %cst_116 = arith.constant 1.000000e+00 : f32
    %460 = vector.broadcast %cst_116 : f32 to vector<8x128xf32>
    %461 = arith.subf %460, %452 : vector<8x128xf32>
    %462 = arith.mulf %461, %459 : vector<8x128xf32>
    %463 = arith.mulf %452, %431 : vector<8x128xf32>
    %464 = arith.addf %462, %463 : vector<8x128xf32>
    %c5_i32_117 = arith.constant 5 : i32
    %c8_i32_118 = arith.constant 8 : i32
    %465 = arith.muli %c5_i32_117, %c8_i32_118 : i32
    %466 = tpu.assume_multiple %465, 8 : i32
    %467 = arith.index_cast %466 : i32 to index
    %c0_119 = arith.constant 0 : index
    %468 = vector.load %arg13[%467, %c0_119] : memref<64x384xf32, #tpu.memory_space<vmem>>, vector<8x384xf32>
    %cst_120 = arith.constant dense<0.000000e+00> : vector<8x384xf32>
    %469 = tpu.matmul %464, %297, %cst_120 {dimension_numbers = #tpu.dot_dimension_numbers<[1], [0], [0], [1], [0, 0, 1, 1], [], []>} : vector<8x128xf32>, vector<128x384xf32>, vector<8x384xf32> -> vector<8x384xf32>
    %470 = vector.extract_strided_slice %468 {offsets = [0, 0], sizes = [8, 128], strides = [1, 1]} : vector<8x384xf32> to vector<8x128xf32>
    %471 = vector.extract_strided_slice %469 {offsets = [0, 0], sizes = [8, 128], strides = [1, 1]} : vector<8x384xf32> to vector<8x128xf32>
    %472 = arith.addf %470, %471 : vector<8x128xf32>
    %473 = arith.negf %472 : vector<8x128xf32>
    %474 = math.exp %473 : vector<8x128xf32>
    %cst_121 = arith.constant 1.000000e+00 : f32
    %475 = vector.broadcast %cst_121 : f32 to vector<8x128xf32>
    %476 = arith.addf %475, %474 : vector<8x128xf32>
    %477 = arith.divf %475, %476 : vector<8x128xf32>
    %478 = vector.extract_strided_slice %468 {offsets = [0, 128], sizes = [8, 128], strides = [1, 1]} : vector<8x384xf32> to vector<8x128xf32>
    %479 = vector.extract_strided_slice %469 {offsets = [0, 128], sizes = [8, 128], strides = [1, 1]} : vector<8x384xf32> to vector<8x128xf32>
    %480 = arith.addf %478, %479 : vector<8x128xf32>
    %481 = arith.negf %480 : vector<8x128xf32>
    %482 = math.exp %481 : vector<8x128xf32>
    %cst_122 = arith.constant 1.000000e+00 : f32
    %483 = vector.broadcast %cst_122 : f32 to vector<8x128xf32>
    %484 = arith.addf %483, %482 : vector<8x128xf32>
    %485 = arith.divf %483, %484 : vector<8x128xf32>
    %486 = vector.extract_strided_slice %468 {offsets = [0, 256], sizes = [8, 128], strides = [1, 1]} : vector<8x384xf32> to vector<8x128xf32>
    %487 = vector.extract_strided_slice %469 {offsets = [0, 256], sizes = [8, 128], strides = [1, 1]} : vector<8x384xf32> to vector<8x128xf32>
    %488 = vector.broadcast %298 : vector<1x128xf32> to vector<8x128xf32>
    %489 = arith.addf %487, %488 : vector<8x128xf32>
    %490 = arith.mulf %477, %489 : vector<8x128xf32>
    %491 = arith.addf %486, %490 : vector<8x128xf32>
    %492 = math.tanh %491 : vector<8x128xf32>
    %cst_123 = arith.constant 1.000000e+00 : f32
    %493 = vector.broadcast %cst_123 : f32 to vector<8x128xf32>
    %494 = arith.subf %493, %485 : vector<8x128xf32>
    %495 = arith.mulf %494, %492 : vector<8x128xf32>
    %496 = arith.mulf %485, %464 : vector<8x128xf32>
    %497 = arith.addf %495, %496 : vector<8x128xf32>
    %c6_i32_124 = arith.constant 6 : i32
    %c8_i32_125 = arith.constant 8 : i32
    %498 = arith.muli %c6_i32_124, %c8_i32_125 : i32
    %499 = tpu.assume_multiple %498, 8 : i32
    %500 = arith.index_cast %499 : i32 to index
    %c0_126 = arith.constant 0 : index
    %501 = vector.load %arg13[%500, %c0_126] : memref<64x384xf32, #tpu.memory_space<vmem>>, vector<8x384xf32>
    %cst_127 = arith.constant dense<0.000000e+00> : vector<8x384xf32>
    %502 = tpu.matmul %497, %297, %cst_127 {dimension_numbers = #tpu.dot_dimension_numbers<[1], [0], [0], [1], [0, 0, 1, 1], [], []>} : vector<8x128xf32>, vector<128x384xf32>, vector<8x384xf32> -> vector<8x384xf32>
    %503 = vector.extract_strided_slice %501 {offsets = [0, 0], sizes = [8, 128], strides = [1, 1]} : vector<8x384xf32> to vector<8x128xf32>
    %504 = vector.extract_strided_slice %502 {offsets = [0, 0], sizes = [8, 128], strides = [1, 1]} : vector<8x384xf32> to vector<8x128xf32>
    %505 = arith.addf %503, %504 : vector<8x128xf32>
    %506 = arith.negf %505 : vector<8x128xf32>
    %507 = math.exp %506 : vector<8x128xf32>
    %cst_128 = arith.constant 1.000000e+00 : f32
    %508 = vector.broadcast %cst_128 : f32 to vector<8x128xf32>
    %509 = arith.addf %508, %507 : vector<8x128xf32>
    %510 = arith.divf %508, %509 : vector<8x128xf32>
    %511 = vector.extract_strided_slice %501 {offsets = [0, 128], sizes = [8, 128], strides = [1, 1]} : vector<8x384xf32> to vector<8x128xf32>
    %512 = vector.extract_strided_slice %502 {offsets = [0, 128], sizes = [8, 128], strides = [1, 1]} : vector<8x384xf32> to vector<8x128xf32>
    %513 = arith.addf %511, %512 : vector<8x128xf32>
    %514 = arith.negf %513 : vector<8x128xf32>
    %515 = math.exp %514 : vector<8x128xf32>
    %cst_129 = arith.constant 1.000000e+00 : f32
    %516 = vector.broadcast %cst_129 : f32 to vector<8x128xf32>
    %517 = arith.addf %516, %515 : vector<8x128xf32>
    %518 = arith.divf %516, %517 : vector<8x128xf32>
    %519 = vector.extract_strided_slice %501 {offsets = [0, 256], sizes = [8, 128], strides = [1, 1]} : vector<8x384xf32> to vector<8x128xf32>
    %520 = vector.extract_strided_slice %502 {offsets = [0, 256], sizes = [8, 128], strides = [1, 1]} : vector<8x384xf32> to vector<8x128xf32>
    %521 = vector.broadcast %298 : vector<1x128xf32> to vector<8x128xf32>
    %522 = arith.addf %520, %521 : vector<8x128xf32>
    %523 = arith.mulf %510, %522 : vector<8x128xf32>
    %524 = arith.addf %519, %523 : vector<8x128xf32>
    %525 = math.tanh %524 : vector<8x128xf32>
    %cst_130 = arith.constant 1.000000e+00 : f32
    %526 = vector.broadcast %cst_130 : f32 to vector<8x128xf32>
    %527 = arith.subf %526, %518 : vector<8x128xf32>
    %528 = arith.mulf %527, %525 : vector<8x128xf32>
    %529 = arith.mulf %518, %497 : vector<8x128xf32>
    %530 = arith.addf %528, %529 : vector<8x128xf32>
    %c7_i32_131 = arith.constant 7 : i32
    %c8_i32_132 = arith.constant 8 : i32
    %531 = arith.muli %c7_i32_131, %c8_i32_132 : i32
    %532 = tpu.assume_multiple %531, 8 : i32
    %533 = arith.index_cast %532 : i32 to index
    %c0_133 = arith.constant 0 : index
    %534 = vector.load %arg13[%533, %c0_133] : memref<64x384xf32, #tpu.memory_space<vmem>>, vector<8x384xf32>
    %cst_134 = arith.constant dense<0.000000e+00> : vector<8x384xf32>
    %535 = tpu.matmul %530, %297, %cst_134 {dimension_numbers = #tpu.dot_dimension_numbers<[1], [0], [0], [1], [0, 0, 1, 1], [], []>} : vector<8x128xf32>, vector<128x384xf32>, vector<8x384xf32> -> vector<8x384xf32>
    %536 = vector.extract_strided_slice %534 {offsets = [0, 0], sizes = [8, 128], strides = [1, 1]} : vector<8x384xf32> to vector<8x128xf32>
    %537 = vector.extract_strided_slice %535 {offsets = [0, 0], sizes = [8, 128], strides = [1, 1]} : vector<8x384xf32> to vector<8x128xf32>
    %538 = arith.addf %536, %537 : vector<8x128xf32>
    %539 = arith.negf %538 : vector<8x128xf32>
    %540 = math.exp %539 : vector<8x128xf32>
    %cst_135 = arith.constant 1.000000e+00 : f32
    %541 = vector.broadcast %cst_135 : f32 to vector<8x128xf32>
    %542 = arith.addf %541, %540 : vector<8x128xf32>
    %543 = arith.divf %541, %542 : vector<8x128xf32>
    %544 = vector.extract_strided_slice %534 {offsets = [0, 128], sizes = [8, 128], strides = [1, 1]} : vector<8x384xf32> to vector<8x128xf32>
    %545 = vector.extract_strided_slice %535 {offsets = [0, 128], sizes = [8, 128], strides = [1, 1]} : vector<8x384xf32> to vector<8x128xf32>
    %546 = arith.addf %544, %545 : vector<8x128xf32>
    %547 = arith.negf %546 : vector<8x128xf32>
    %548 = math.exp %547 : vector<8x128xf32>
    %cst_136 = arith.constant 1.000000e+00 : f32
    %549 = vector.broadcast %cst_136 : f32 to vector<8x128xf32>
    %550 = arith.addf %549, %548 : vector<8x128xf32>
    %551 = arith.divf %549, %550 : vector<8x128xf32>
    %552 = vector.extract_strided_slice %534 {offsets = [0, 256], sizes = [8, 128], strides = [1, 1]} : vector<8x384xf32> to vector<8x128xf32>
    %553 = vector.extract_strided_slice %535 {offsets = [0, 256], sizes = [8, 128], strides = [1, 1]} : vector<8x384xf32> to vector<8x128xf32>
    %554 = vector.broadcast %298 : vector<1x128xf32> to vector<8x128xf32>
    %555 = arith.addf %553, %554 : vector<8x128xf32>
    %556 = arith.mulf %543, %555 : vector<8x128xf32>
    %557 = arith.addf %552, %556 : vector<8x128xf32>
    %558 = math.tanh %557 : vector<8x128xf32>
    %cst_137 = arith.constant 1.000000e+00 : f32
    %559 = vector.broadcast %cst_137 : f32 to vector<8x128xf32>
    %560 = arith.subf %559, %551 : vector<8x128xf32>
    %561 = arith.mulf %560, %558 : vector<8x128xf32>
    %562 = arith.mulf %551, %530 : vector<8x128xf32>
    %563 = arith.addf %561, %562 : vector<8x128xf32>
    %c8_i32_138 = arith.constant 8 : i32
    %564 = vector.extract_strided_slice %563 {offsets = [0, 0], sizes = [8, 32], strides = [1, 1]} : vector<8x128xf32> to vector<8x32xf32>
    %c0_139 = arith.constant 0 : index
    %c0_140 = arith.constant 0 : index
    %565 = vector.load %arg10[%c0_139, %c0_140] : memref<8x32xf32, #tpu.memory_space<vmem>>, vector<8x32xf32>
    tpu.vector_store %arg10[%c0_139, %c0_140], %564 {strides = array<i32>} : memref<8x32xf32, #tpu.memory_space<vmem>>, vector<8x32xf32>,
    return
  }
  func.func @transform_0(%arg0: i32) -> (i32, i32) {
    %c0_i32 = arith.constant 0 : i32
    %c0_i32_0 = arith.constant 0 : i32
    %c0_i32_1 = arith.constant 0 : i32
    return %c0_i32, %c0_i32_0 : i32, i32
  }
  func.func @transform_1(%arg0: i32) -> (i32, i32) {
    %c0_i32 = arith.constant 0 : i32
    %c0_i32_0 = arith.constant 0 : i32
    %c0_i32_1 = arith.constant 0 : i32
    return %c0_i32, %c0_i32_0 : i32, i32
  }
  func.func @transform_2(%arg0: i32) -> (i32, i32) {
    %c0_i32 = arith.constant 0 : i32
    %c0_i32_0 = arith.constant 0 : i32
    %c0_i32_1 = arith.constant 0 : i32
    return %c0_i32, %c0_i32_0 : i32, i32
  }
  func.func @transform_3(%arg0: i32) -> (i32, i32) {
    %c0_i32 = arith.constant 0 : i32
    %c0_i32_0 = arith.constant 0 : i32
    %c0_i32_1 = arith.constant 0 : i32
    return %c0_i32, %c0_i32_0 : i32, i32
  }
  func.func @transform_4(%arg0: i32) -> (i32, i32) {
    %c0_i32 = arith.constant 0 : i32
    %c0_i32_0 = arith.constant 0 : i32
    %c0_i32_1 = arith.constant 0 : i32
    return %c0_i32, %c0_i32_0 : i32, i32
  }
  func.func @transform_5(%arg0: i32) -> (i32, i32) {
    %c0_i32 = arith.constant 0 : i32
    %c0_i32_0 = arith.constant 0 : i32
    %c0_i32_1 = arith.constant 0 : i32
    return %c0_i32, %c0_i32_0 : i32, i32
  }
  func.func @transform_6(%arg0: i32) -> (i32, i32) {
    %c0_i32 = arith.constant 0 : i32
    %c0_i32_0 = arith.constant 0 : i32
    %c0_i32_1 = arith.constant 0 : i32
    return %c0_i32, %c0_i32_0 : i32, i32
  }
  func.func @transform_7(%arg0: i32) -> (i32, i32) {
    %c0_i32 = arith.constant 0 : i32
    %c0_i32_0 = arith.constant 0 : i32
    %c0_i32_1 = arith.constant 0 : i32
    return %c0_i32, %c0_i32_0 : i32, i32
  }
  func.func @transform_8(%arg0: i32) -> (i32, i32) {
    %c0_i32 = arith.constant 0 : i32
    %c0_i32_0 = arith.constant 0 : i32
    %c0_i32_1 = arith.constant 0 : i32
    return %c0_i32, %c0_i32_0 : i32, i32
  }
  func.func @transform_9(%arg0: i32) -> (i32, i32) {
    %c0_i32 = arith.constant 0 : i32
    %c0_i32_0 = arith.constant 0 : i32
    %c0_i32_1 = arith.constant 0 : i32
    return %c0_i32, %c0_i32_0 : i32, i32
  }
}

</mosaic_0001>

<llo_original>
// kernel: gru_model_forward.1
$region0: #{gru_model_forward.1}
  #allocation0 [shape = 'u32[]', space=smem, size = 0x4, offset = 0x4, fixed_abs, tag = 'smem constant byte address 0x4 - core index']
  #allocation1 [shape = 'u32[144,128]{1,0:T(1,128)}', space=vmem, size = 0x12000, scoped, tag = 'internal scratch']
  #allocation2 [shape = 'f32[64,384]{1,0:T(8,128)}', space=vmem, size = 0x18000, scoped, tag = 'scratch operand']
  #allocation3 [shape = 'f32[64,128]{1,0:T(8,128)}', space=vmem, size = 0x8000, scoped, tag = 'scratch operand']
  #allocation4 [shape = 'f32[64,384]{1,0:T(8,128)}', space=vmem, size = 0x18000, scoped, tag = 'scratch operand']
  %s0 = inlined_call_operand.vmem [shape: f32[64,16], index: 0, kind: input, shape index: {}]
  %s1 = inlined_call_operand.vmem [shape: f32[16,384], index: 1, kind: input, shape index: {}]
  %s2 = inlined_call_operand.vmem [shape: f32[128,384], index: 2, kind: input, shape index: {}]
  %s3 = inlined_call_operand.vmem [shape: f32[1,384], index: 3, kind: input, shape index: {}]
  %s4 = inlined_call_operand.vmem [shape: f32[1,128], index: 4, kind: input, shape index: {}]
  %s5 = inlined_call_operand.vmem [shape: f32[128,384], index: 5, kind: input, shape index: {}]
  %s6 = inlined_call_operand.vmem [shape: f32[128,384], index: 6, kind: input, shape index: {}]
  %s7 = inlined_call_operand.vmem [shape: f32[1,384], index: 7, kind: input, shape index: {}]
  %s8 = inlined_call_operand.vmem [shape: f32[1,128], index: 8, kind: input, shape index: {}]
  %s9 = inlined_call_operand.hbm [shape: f32[8,32], index: 9, kind: output, shape index: {}]
  %s10 = sld [smem:[#allocation0]]
  $region46: #{gru_model_forward.1} parent=0
    _
  %s12 = ssub.s32 1, %s10
  %s13 = scalar_select 0, %s12, %s10
  $region1: #{gru_model_forward.1} parent=0
    #allocation5 [shape = 'u8[4096]{0}', space=vmem, size = 0x1000, scoped, tag = 'output window, operand 0, single buffered']
    #allocation6 [shape = 's32[1]{0}', space=sflag, size = 0x4, scoped, tag = 'scoped memory for gru_model_forward.1']
    %14 = vsyncpa [#allocation6], 0
    // Predicated region
    $region2: #{gru_model_forward.1} parent=1 // pred_check
      _
    $region3: #{gru_model_forward.1} parent=1 // pred_check_branch
      %16 = sbr.rel (0) target = $region5
    $region4: #{gru_model_forward.1} parent=1 // pred_region
      _
    $region5: #{gru_model_forward.1} parent=1 // pred_fallthru
      _
    // Predicated region
    $region6: #{gru_model_forward.1} parent=1 // pred_check
      _
    $region7: #{gru_model_forward.1} parent=1 // pred_check_branch
      %18 = sbr.rel (0) target = $region9
    $region8: #{gru_model_forward.1} parent=1 // pred_region
      _
    $region9: #{gru_model_forward.1} parent=1 // pred_fallthru
      _
    // Predicated region
    $region10: #{gru_model_forward.1} parent=1 // pred_check
      _
    $region11: #{gru_model_forward.1} parent=1 // pred_check_branch
      %20 = sbr.rel (0) target = $region13
    $region12: #{gru_model_forward.1} parent=1 // pred_region
      _
    $region13: #{gru_model_forward.1} parent=1 // pred_fallthru
      _
    // Predicated region
    $region14: #{gru_model_forward.1} parent=1 // pred_check
      _
    $region15: #{gru_model_forward.1} parent=1 // pred_check_branch
      %22 = sbr.rel (0) target = $region17
    $region16: #{gru_model_forward.1} parent=1 // pred_region
      _
    $region17: #{gru_model_forward.1} parent=1 // pred_fallthru
      _
    // Predicated region
    $region18: #{gru_model_forward.1} parent=1 // pred_check
      _
    $region19: #{gru_model_forward.1} parent=1 // pred_check_branch
      %24 = sbr.rel (0) target = $region21
    $region20: #{gru_model_forward.1} parent=1 // pred_region
      _
    $region21: #{gru_model_forward.1} parent=1 // pred_fallthru
      _
    // Predicated region
    $region22: #{gru_model_forward.1} parent=1 // pred_check
      _
    $region23: #{gru_model_forward.1} parent=1 // pred_check_branch
      %26 = sbr.rel (0) target = $region25
    $region24: #{gru_model_forward.1} parent=1 // pred_region
      _
    $region25: #{gru_model_forward.1} parent=1 // pred_fallthru
      _
    // Predicated region
    $region26: #{gru_model_forward.1} parent=1 // pred_check
      _
    $region27: #{gru_model_forward.1} parent=1 // pred_check_branch
      %28 = sbr.rel (0) target = $region29
    $region28: #{gru_model_forward.1} parent=1 // pred_region
      _
    $region29: #{gru_model_forward.1} parent=1 // pred_fallthru
      _
    // Predicated region
    $region30: #{gru_model_forward.1} parent=1 // pred_check
      _
    $region31: #{gru_model_forward.1} parent=1 // pred_check_branch
      %30 = sbr.rel (0) target = $region33
    $region32: #{gru_model_forward.1} parent=1 // pred_region
      _
    $region33: #{gru_model_forward.1} parent=1 // pred_fallthru
      _
    // Predicated region
    $region34: #{gru_model_forward.1} parent=1 // pred_check
      _
    $region35: #{gru_model_forward.1} parent=1 // pred_check_branch
      %32 = sbr.rel (0) target = $region37
    $region36: #{gru_model_forward.1} parent=1 // pred_region
      _
    $region37: #{gru_model_forward.1} parent=1 // pred_fallthru
      _
    %v33 = vld [vmem:[%s0] sm:$0xff]
    %v34 = vld [vmem:[%s0 + $0x8] sm:$0xff]
    %v35 = vld [vmem:[%s0 + $0x10] sm:$0xff]
    %v36 = vld [vmem:[%s0 + $0x18] sm:$0xff]
    %v37 = vld [vmem:[%s0 + $0x20] sm:$0xff]
    %v38 = vld [vmem:[%s0 + $0x28] sm:$0xff]
    %v39 = vld [vmem:[%s0 + $0x30] sm:$0xff]
    %v40 = vld [vmem:[%s0 + $0x38] sm:$0xff]
    %v41 = vld [vmem:[%s1] sm:$0xff]
    %v42 = vld [vmem:[%s1 + $0x8] sm:$0xff]
    %v43 = vld [vmem:[%s1 + $0x10] sm:$0xff]
    %v44 = vld [vmem:[%s1 + $0x18] sm:$0xff]
    %v45 = vld [vmem:[%s1 + $0x20] sm:$0xff]
    %v46 = vld [vmem:[%s1 + $0x28] sm:$0xff]
    %v47 = vld [vmem:[%s3] sm:$0x7]
    %v49 = vlaneseq
    %v50 = vshrl.u32 %v49, 7
    %v51 = vsub.s32 0, %v50
    %v52 = vrot.slane %v47, %v51
    %v53 = vlaneseq
    %v54 = vshrl.u32 %v53, 7
    %v55 = vsub.s32 1, %v54
    %v56 = vrot.slane %v47, %v55
    %v57 = vlaneseq
    %v58 = vshrl.u32 %v57, 7
    %v59 = vsub.s32 2, %v58
    %v60 = vrot.slane %v47, %v59
    %vm64 = vcmask 130048
    %v66 = vsel %vm64, %v33, 0
    %v69 = vsel %vm64, %v34, 0
    %v72 = vsel %vm64, %v35, 0
    %v75 = vsel %vm64, %v36, 0
    %v78 = vsel %vm64, %v37, 0
    %v81 = vsel %vm64, %v38, 0
    %v84 = vsel %vm64, %v39, 0
    %v87 = vsel %vm64, %v40, 0
    %89 = vmatprep.subr.mxu0 %v42
    %90 = vmatpush1.msra.mxu0 %v41
    %91 = vmatprep.subr.mxu0 %v45
    %92 = vmatpush1.msra.mxu0 %v44
    %93 = vmatprep.subr.mxu0 0.0
    %94 = vmatpush1.msra.mxu0 0.0
    %95 = vmatprep.subr.mxu0 0.0
    %96 = vmatpush1.msra.mxu0 0.0
    %97 = vmatprep.subr.mxu0 0.0
    %98 = vmatpush1.msra.mxu0 0.0
    %99 = vmatprep.subr.mxu0 0.0
    %100 = vmatpush1.msra.mxu0 0.0
    %101 = vmatprep.subr.mxu0 0.0
    %102 = vmatpush1.msra.mxu0 0.0
    %103 = vmatprep.subr.mxu0 0.0
    %104 = vmatpush1.msra.mxu0 0.0
    %105 = vmatprep.subr.mxu0 0.0
    %106 = vmatpush1.msra.mxu0 0.0
    %107 = vmatprep.subr.mxu0 0.0
    %108 = vmatpush1.msra.mxu0 0.0
    %109 = vmatprep.subr.mxu0 0.0
    %110 = vmatpush1.msra.mxu0 0.0
    %111 = vmatprep.subr.mxu0 0.0
    %112 = vmatpush1.msra.mxu0 0.0
    %113 = vmatprep.subr.mxu0 0.0
    %114 = vmatpush1.msra.mxu0 0.0
    %115 = vmatprep.subr.mxu0 0.0
    %116 = vmatpush1.msra.mxu0 0.0
    %117 = vmatprep.subr.mxu0 0.0
    %118 = vmatpush1.msra.mxu0 0.0
    %119 = vmatprep.subr.mxu0 0.0
    %120 = vmatpush1.msra.mxu0 0.0
    %121 = vmatprep.subr.mxu0 0.0
    %122 = vmatpush1.msra.mxu0 0.0
    %123 = vmatprep.subr.mxu0 0.0
    %124 = vmatpush1.msra.mxu0 0.0
    %125 = vmatprep.subr.mxu0 0.0
    %126 = vmatpush1.msra.mxu0 0.0
    %127 = vmatprep.subr.mxu0 0.0
    %128 = vmatpush1.msra.mxu0 0.0
    %129 = vmatprep.subr.mxu0 0.0
    %130 = vmatpush1.msra.mxu0 0.0
    %131 = vmatprep.subr.mxu0 0.0
    %132 = vmatpush1.msra.mxu0 0.0
    %133 = vmatprep.subr.mxu0 0.0
    %134 = vmatpush1.msra.mxu0 0.0
    %135 = vmatprep.subr.mxu0 0.0
    %136 = vmatpush1.msra.mxu0 0.0
    %137 = vmatprep.subr.mxu0 0.0
    %138 = vmatpush1.msra.mxu0 0.0
    %139 = vmatprep.subr.mxu0 0.0
    %140 = vmatpush1.msra.mxu0 0.0
    %141 = vmatprep.subr.mxu0 0.0
    %142 = vmatpush1.msra.mxu0 0.0
    %143 = vmatprep.subr.mxu0 0.0
    %144 = vmatpush1.msra.mxu0 0.0
    %145 = vmatprep.subr.mxu0 0.0
    %146 = vmatpush1.msra.mxu0 0.0
    %147 = vmatprep.subr.mxu0 0.0
    %148 = vmatpush1.msra.mxu0 0.0
    %149 = vmatprep.subr.mxu0 0.0
    %150 = vmatpush1.msra.mxu0 0.0
    %151 = vmatprep.subr.mxu0 0.0
    %152 = vmatpush1.msra.mxu0 0.0
    %153 = vmatprep.mubr.f32.mxu0 0.0
    %154 = vmatmul.mubr.f32.gmra.mrb[0].mxu0 %v66
    %v155 = vpop.f32.mrb[0].mxu0
    %v156 = vadd.f32 %v52, %v155
    %v157 = vpop.f32.mrb[0].mxu0
    %v158 = vadd.f32 %v56, %v157
    %159 = vmatprep.mubr.f32.mxu0 0.0
    %160 = vmatmul.mubr.f32.gmra.mrb[0].mxu0 %v69
    %v161 = vpop.f32.mrb[0].mxu0
    %v162 = vadd.f32 %v52, %v161
    %v163 = vpop.f32.mrb[0].mxu0
    %v164 = vadd.f32 %v56, %v163
    %165 = vmatprep.mubr.f32.mxu0 0.0
    %166 = vmatmul.mubr.f32.gmra.mrb[0].mxu0 %v72
    %v167 = vpop.f32.mrb[0].mxu0
    %v168 = vadd.f32 %v52, %v167
    %v169 = vpop.f32.mrb[0].mxu0
    %v170 = vadd.f32 %v56, %v169
    %171 = vmatprep.mubr.f32.mxu0 0.0
    %172 = vmatmul.mubr.f32.gmra.mrb[0].mxu0 %v75
    %v173 = vpop.f32.mrb[0].mxu0
    %v174 = vadd.f32 %v52, %v173
    %v175 = vpop.f32.mrb[0].mxu0
    %v176 = vadd.f32 %v56, %v175
    %177 = vmatprep.mubr.f32.mxu0 0.0
    %178 = vmatmul.mubr.f32.gmra.mrb[0].mxu0 %v78
    %v179 = vpop.f32.mrb[0].mxu0
    %v180 = vadd.f32 %v52, %v179
    %v181 = vpop.f32.mrb[0].mxu0
    %v182 = vadd.f32 %v56, %v181
    %183 = vmatprep.mubr.f32.mxu0 0.0
    %184 = vmatmul.mubr.f32.gmra.mrb[0].mxu0 %v81
    %v185 = vpop.f32.mrb[0].mxu0
    %v186 = vadd.f32 %v52, %v185
    %v187 = vpop.f32.mrb[0].mxu0
    %v188 = vadd.f32 %v56, %v187
    %189 = vmatprep.mubr.f32.mxu0 0.0
    %190 = vmatmul.mubr.f32.gmra.mrb[0].mxu0 %v84
    %v191 = vpop.f32.mrb[0].mxu0
    %v192 = vadd.f32 %v52, %v191
    %v193 = vpop.f32.mrb[0].mxu0
    %v194 = vadd.f32 %v56, %v193
    %195 = vmatprep.mubr.f32.mxu0 0.0
    %196 = vmatmul.mubr.f32.gmra.mrb[0].mxu0 %v87
    %v197 = vpop.f32.mrb[0].mxu0
    %v198 = vadd.f32 %v52, %v197
    %v199 = vpop.f32.mrb[0].mxu0
    %v200 = vadd.f32 %v56, %v199
    %201 = vdwg.mxu0
    %202 = vmatprep.subr.mxu0 0.0
    %203 = vmatpush1.msra.mxu0 %v43
    %204 = vmatprep.subr.mxu0 0.0
    %205 = vmatpush1.msra.mxu0 %v46
    %206 = vmatprep.subr.mxu0 0.0
    %207 = vmatpush1.msra.mxu0 0.0
    %208 = vmatprep.subr.mxu0 0.0
    %209 = vmatpush1.msra.mxu0 0.0
    %210 = vmatprep.subr.mxu0 0.0
    %211 = vmatpush1.msra.mxu0 0.0
    %212 = vmatprep.subr.mxu0 0.0
    %213 = vmatpush1.msra.mxu0 0.0
    %214 = vmatprep.subr.mxu0 0.0
    %215 = vmatpush1.msra.mxu0 0.0
    %216 = vmatprep.subr.mxu0 0.0
    %217 = vmatpush1.msra.mxu0 0.0
    %218 = vmatprep.subr.mxu0 0.0
    %219 = vmatpush1.msra.mxu0 0.0
    %220 = vmatprep.subr.mxu0 0.0
    %221 = vmatpush1.msra.mxu0 0.0
    %222 = vmatprep.subr.mxu0 0.0
    %223 = vmatpush1.msra.mxu0 0.0
    %224 = vmatprep.subr.mxu0 0.0
    %225 = vmatpush1.msra.mxu0 0.0
    %226 = vmatprep.subr.mxu0 0.0
    %227 = vmatpush1.msra.mxu0 0.0
    %228 = vmatprep.subr.mxu0 0.0
    %229 = vmatpush1.msra.mxu0 0.0
    %230 = vmatprep.subr.mxu0 0.0
    %231 = vmatpush1.msra.mxu0 0.0
    %232 = vmatprep.subr.mxu0 0.0
    %233 = vmatpush1.msra.mxu0 0.0
    %234 = vmatprep.subr.mxu0 0.0
    %235 = vmatpush1.msra.mxu0 0.0
    %236 = vmatprep.subr.mxu0 0.0
    %237 = vmatpush1.msra.mxu0 0.0
    %238 = vmatprep.subr.mxu0 0.0
    %239 = vmatpush1.msra.mxu0 0.0
    %240 = vmatprep.subr.mxu0 0.0
    %241 = vmatpush1.msra.mxu0 0.0
    %242 = vmatprep.subr.mxu0 0.0
    %243 = vmatpush1.msra.mxu0 0.0
    %244 = vmatprep.subr.mxu0 0.0
    %245 = vmatpush1.msra.mxu0 0.0
    %246 = vmatprep.subr.mxu0 0.0
    %247 = vmatpush1.msra.mxu0 0.0
    %248 = vmatprep.subr.mxu0 0.0
    %249 = vmatpush1.msra.mxu0 0.0
    %250 = vmatprep.subr.mxu0 0.0
    %251 = vmatpush1.msra.mxu0 0.0
    %252 = vmatprep.subr.mxu0 0.0
    %253 = vmatpush1.msra.mxu0 0.0
    %254 = vmatprep.subr.mxu0 0.0
    %255 = vmatpush1.msra.mxu0 0.0
    %256 = vmatprep.subr.mxu0 0.0
    %257 = vmatpush1.msra.mxu0 0.0
    %258 = vmatprep.subr.mxu0 0.0
    %259 = vmatpush1.msra.mxu0 0.0
    %260 = vmatprep.subr.mxu0 0.0
    %261 = vmatpush1.msra.mxu0 0.0
    %262 = vmatprep.subr.mxu0 0.0
    %263 = vmatpush1.msra.mxu0 0.0
    %264 = vmatprep.subr.mxu0 0.0
    %265 = vmatpush1.msra.mxu0 0.0
    %266 = vmatprep.mubr.f32.mxu0 0.0
    %267 = vmatmul.mubr.f32.gmra.mrb[0].mxu0 %v66
    %v268 = vpop.f32.mrb[0].mxu0
    %v269 = vadd.f32 %v60, %v268
    %v270 = vpop.f32.mrb[0].mxu0
    %271 = vmatprep.mubr.f32.mxu0 0.0
    %272 = vmatmul.mubr.f32.gmra.mrb[0].mxu0 %v69
    %v273 = vpop.f32.mrb[0].mxu0
    %v274 = vadd.f32 %v60, %v273
    %v275 = vpop.f32.mrb[0].mxu0
    %276 = vmatprep.mubr.f32.mxu0 0.0
    %277 = vmatmul.mubr.f32.gmra.mrb[0].mxu0 %v72
    %v278 = vpop.f32.mrb[0].mxu0
    %v279 = vadd.f32 %v60, %v278
    %v280 = vpop.f32.mrb[0].mxu0
    %281 = vmatprep.mubr.f32.mxu0 0.0
    %282 = vmatmul.mubr.f32.gmra.mrb[0].mxu0 %v75
    %v283 = vpop.f32.mrb[0].mxu0
    %v284 = vadd.f32 %v60, %v283
    %v285 = vpop.f32.mrb[0].mxu0
    %286 = vmatprep.mubr.f32.mxu0 0.0
    %287 = vmatmul.mubr.f32.gmra.mrb[0].mxu0 %v78
    %v288 = vpop.f32.mrb[0].mxu0
    %v289 = vadd.f32 %v60, %v288
    %v290 = vpop.f32.mrb[0].mxu0
    %291 = vmatprep.mubr.f32.mxu0 0.0
    %292 = vmatmul.mubr.f32.gmra.mrb[0].mxu0 %v81
    %v293 = vpop.f32.mrb[0].mxu0
    %v294 = vadd.f32 %v60, %v293
    %v295 = vpop.f32.mrb[0].mxu0
    %296 = vmatprep.mubr.f32.mxu0 0.0
    %297 = vmatmul.mubr.f32.gmra.mrb[0].mxu0 %v84
    %v298 = vpop.f32.mrb[0].mxu0
    %v299 = vadd.f32 %v60, %v298
    %v300 = vpop.f32.mrb[0].mxu0
    %301 = vmatprep.mubr.f32.mxu0 0.0
    %302 = vmatmul.mubr.f32.gmra.mrb[0].mxu0 %v87
    %v303 = vpop.f32.mrb[0].mxu0
    %v304 = vadd.f32 %v60, %v303
    %v305 = vpop.f32.mrb[0].mxu0
    %306 = vdwg.mxu0
    %307 = vst [vmem:[#allocation2] sm:$0xff] %v156
    %308 = vst [vmem:[#allocation2 + $0x8] sm:$0xff] %v158
    %309 = vst [vmem:[#allocation2 + $0x10] sm:$0xff] %v269
    %310 = vst [vmem:[#allocation2 + $0x18] sm:$0xff] %v162
    %311 = vst [vmem:[#allocation2 + $0x20] sm:$0xff] %v164
    %312 = vst [vmem:[#allocation2 + $0x28] sm:$0xff] %v274
    %313 = vst [vmem:[#allocation2 + $0x30] sm:$0xff] %v168
    %314 = vst [vmem:[#allocation2 + $0x38] sm:$0xff] %v170
    %315 = vst [vmem:[#allocation2 + $0x40] sm:$0xff] %v279
    %316 = vst [vmem:[#allocation2 + $0x48] sm:$0xff] %v174
    %317 = vst [vmem:[#allocation2 + $0x50] sm:$0xff] %v176
    %318 = vst [vmem:[#allocation2 + $0x58] sm:$0xff] %v284
    %319 = vst [vmem:[#allocation2 + $0x60] sm:$0xff] %v180
    %320 = vst [vmem:[#allocation2 + $0x68] sm:$0xff] %v182
    %321 = vst [vmem:[#allocation2 + $0x70] sm:$0xff] %v289
    %322 = vst [vmem:[#allocation2 + $0x78] sm:$0xff] %v186
    %323 = vst [vmem:[#allocation2 + $0x80] sm:$0xff] %v188
    %324 = vst [vmem:[#allocation2 + $0x88] sm:$0xff] %v294
    %325 = vst [vmem:[#allocation2 + $0x90] sm:$0xff] %v192
    %326 = vst [vmem:[#allocation2 + $0x98] sm:$0xff] %v194
    %327 = vst [vmem:[#allocation2 + $0xa0] sm:$0xff] %v299
    %328 = vst [vmem:[#allocation2 + $0xa8] sm:$0xff] %v198
    %329 = vst [vmem:[#allocation2 + $0xb0] sm:$0xff] %v200
    %330 = vst [vmem:[#allocation2 + $0xb8] sm:$0xff] %v304
    %v331 = vld [vmem:[%s2] sm:$0xff]
    %v332 = vld [vmem:[%s2 + $0x8] sm:$0xff]
    %v333 = vld [vmem:[%s2 + $0x10] sm:$0xff]
    %v334 = vld [vmem:[%s2 + $0x18] sm:$0xff]
    %v335 = vld [vmem:[%s2 + $0x20] sm:$0xff]
    %v336 = vld [vmem:[%s2 + $0x28] sm:$0xff]
    %v337 = vld [vmem:[%s2 + $0x30] sm:$0xff]
    %v338 = vld [vmem:[%s2 + $0x38] sm:$0xff]
    %v339 = vld [vmem:[%s2 + $0x40] sm:$0xff]
    %v340 = vld [vmem:[%s2 + $0x48] sm:$0xff]
    %v341 = vld [vmem:[%s2 + $0x50] sm:$0xff]
    %v342 = vld [vmem:[%s2 + $0x58] sm:$0xff]
    %v343 = vld [vmem:[%s2 + $0x60] sm:$0xff]
    %v344 = vld [vmem:[%s2 + $0x68] sm:$0xff]
    %v345 = vld [vmem:[%s2 + $0x70] sm:$0xff]
    %v346 = vld [vmem:[%s2 + $0x78] sm:$0xff]
    %v347 = vld [vmem:[%s2 + $0x80] sm:$0xff]
    %v348 = vld [vmem:[%s2 + $0x88] sm:$0xff]
    %v349 = vld [vmem:[%s2 + $0x90] sm:$0xff]
    %v350 = vld [vmem:[%s2 + $0x98] sm:$0xff]
    %v351 = vld [vmem:[%s2 + $0xa0] sm:$0xff]
    %v352 = vld [vmem:[%s2 + $0xa8] sm:$0xff]
    %v353 = vld [vmem:[%s2 + $0xb0] sm:$0xff]
    %v354 = vld [vmem:[%s2 + $0xb8] sm:$0xff]
    %v355 = vld [vmem:[%s2 + $0xc0] sm:$0xff]
    %v356 = vld [vmem:[%s2 + $0xc8] sm:$0xff]
    %v357 = vld [vmem:[%s2 + $0xd0] sm:$0xff]
    %v358 = vld [vmem:[%s2 + $0xd8] sm:$0xff]
    %v359 = vld [vmem:[%s2 + $0xe0] sm:$0xff]
    %v360 = vld [vmem:[%s2 + $0xe8] sm:$0xff]
    %v361 = vld [vmem:[%s2 + $0xf0] sm:$0xff]
    %v362 = vld [vmem:[%s2 + $0xf8] sm:$0xff]
    %v363 = vld [vmem:[%s2 + $0x100] sm:$0xff]
    %v364 = vld [vmem:[%s2 + $0x108] sm:$0xff]
    %v365 = vld [vmem:[%s2 + $0x110] sm:$0xff]
    %v366 = vld [vmem:[%s2 + $0x118] sm:$0xff]
    %v367 = vld [vmem:[%s2 + $0x120] sm:$0xff]
    %v368 = vld [vmem:[%s2 + $0x128] sm:$0xff]
    %v369 = vld [vmem:[%s2 + $0x130] sm:$0xff]
    %v370 = vld [vmem:[%s2 + $0x138] sm:$0xff]
    %v371 = vld [vmem:[%s2 + $0x140] sm:$0xff]
    %v372 = vld [vmem:[%s2 + $0x148] sm:$0xff]
    %v373 = vld [vmem:[%s2 + $0x150] sm:$0xff]
    %v374 = vld [vmem:[%s2 + $0x158] sm:$0xff]
    %v375 = vld [vmem:[%s2 + $0x160] sm:$0xff]
    %v376 = vld [vmem:[%s2 + $0x168] sm:$0xff]
    %v377 = vld [vmem:[%s2 + $0x170] sm:$0xff]
    %v378 = vld [vmem:[%s2 + $0x178] sm:$0xff]
    %v379 = vld [vmem:[%s4] sm:$0x1]
    %s380 = smul.u32 0, 3
    %s381 = smul.addr %s380, 8
    %s382 = scalar_lea.vmem [#allocation2], %s381
    %v383 = vld [vmem:[%s382] sm:$0xff]
    %v384 = vld [vmem:[%s382 + $0x8] sm:$0xff]
    %v385 = vld [vmem:[%s382 + $0x10] sm:$0xff]
    %386 = vmatprep.subr.mxu0 %v332
    %387 = vmatpush1.msra.mxu0 %v331
    %388 = vmatprep.subr.mxu0 %v335
    %389 = vmatpush1.msra.mxu0 %v334
    %390 = vmatprep.subr.mxu0 %v338
    %391 = vmatpush1.msra.mxu0 %v337
    %392 = vmatprep.subr.mxu0 %v341
    %393 = vmatpush1.msra.mxu0 %v340
    %394 = vmatprep.subr.mxu0 %v344
    %395 = vmatpush1.msra.mxu0 %v343
    %396 = vmatprep.subr.mxu0 %v347
    %397 = vmatpush1.msra.mxu0 %v346
    %398 = vmatprep.subr.mxu0 %v350
    %399 = vmatpush1.msra.mxu0 %v349
    %400 = vmatprep.subr.mxu0 %v353
    %401 = vmatpush1.msra.mxu0 %v352
    %402 = vmatprep.subr.mxu0 %v356
    %403 = vmatpush1.msra.mxu0 %v355
    %404 = vmatprep.subr.mxu0 %v359
    %405 = vmatpush1.msra.mxu0 %v358
    %406 = vmatprep.subr.mxu0 %v362
    %407 = vmatpush1.msra.mxu0 %v361
    %408 = vmatprep.subr.mxu0 %v365
    %409 = vmatpush1.msra.mxu0 %v364
    %410 = vmatprep.subr.mxu0 %v368
    %411 = vmatpush1.msra.mxu0 %v367
    %412 = vmatprep.subr.mxu0 %v371
    %413 = vmatpush1.msra.mxu0 %v370
    %414 = vmatprep.subr.mxu0 %v374
    %415 = vmatpush1.msra.mxu0 %v373
    %416 = vmatprep.subr.mxu0 %v377
    %417 = vmatpush1.msra.mxu0 %v376
    %418 = vmatprep.subr.mxu0 0.0
    %419 = vmatpush1.msra.mxu0 0.0
    %420 = vmatprep.subr.mxu0 0.0
    %421 = vmatpush1.msra.mxu0 0.0
    %422 = vmatprep.subr.mxu0 0.0
    %423 = vmatpush1.msra.mxu0 0.0
    %424 = vmatprep.subr.mxu0 0.0
    %425 = vmatpush1.msra.mxu0 0.0
    %426 = vmatprep.subr.mxu0 0.0
    %427 = vmatpush1.msra.mxu0 0.0
    %428 = vmatprep.subr.mxu0 0.0
    %429 = vmatpush1.msra.mxu0 0.0
    %430 = vmatprep.subr.mxu0 0.0
    %431 = vmatpush1.msra.mxu0 0.0
    %432 = vmatprep.subr.mxu0 0.0
    %433 = vmatpush1.msra.mxu0 0.0
    %434 = vmatprep.subr.mxu0 0.0
    %435 = vmatpush1.msra.mxu0 0.0
    %436 = vmatprep.subr.mxu0 0.0
    %437 = vmatpush1.msra.mxu0 0.0
    %438 = vmatprep.subr.mxu0 0.0
    %439 = vmatpush1.msra.mxu0 0.0
    %440 = vmatprep.subr.mxu0 0.0
    %441 = vmatpush1.msra.mxu0 0.0
    %442 = vmatprep.subr.mxu0 0.0
    %443 = vmatpush1.msra.mxu0 0.0
    %444 = vmatprep.subr.mxu0 0.0
    %445 = vmatpush1.msra.mxu0 0.0
    %446 = vmatprep.subr.mxu0 0.0
    %447 = vmatpush1.msra.mxu0 0.0
    %448 = vmatprep.subr.mxu0 0.0
    %449 = vmatpush1.msra.mxu0 0.0
    %450 = vmatprep.mubr.f32.mxu0 0.0
    %451 = vmatmul.mubr.f32.gmra.mrb[0].mxu0 0.0
    %v452 = vpop.f32.mrb[0].mxu0
    %v453 = vadd.f32 0.0, %v452
    %v454 = vpop.f32.mrb[0].mxu0
    %v455 = vadd.f32 0.0, %v454
    %456 = vdwg.mxu0
    %457 = vmatprep.subr.mxu0 0.0
    %458 = vmatpush1.msra.mxu0 %v333
    %459 = vmatprep.subr.mxu0 0.0
    %460 = vmatpush1.msra.mxu0 %v336
    %461 = vmatprep.subr.mxu0 0.0
    %462 = vmatpush1.msra.mxu0 %v339
    %463 = vmatprep.subr.mxu0 0.0
    %464 = vmatpush1.msra.mxu0 %v342
    %465 = vmatprep.subr.mxu0 0.0
    %466 = vmatpush1.msra.mxu0 %v345
    %467 = vmatprep.subr.mxu0 0.0
    %468 = vmatpush1.msra.mxu0 %v348
    %469 = vmatprep.subr.mxu0 0.0
    %470 = vmatpush1.msra.mxu0 %v351
    %471 = vmatprep.subr.mxu0 0.0
    %472 = vmatpush1.msra.mxu0 %v354
    %473 = vmatprep.subr.mxu0 0.0
    %474 = vmatpush1.msra.mxu0 %v357
    %475 = vmatprep.subr.mxu0 0.0
    %476 = vmatpush1.msra.mxu0 %v360
    %477 = vmatprep.subr.mxu0 0.0
    %478 = vmatpush1.msra.mxu0 %v363
    %479 = vmatprep.subr.mxu0 0.0
    %480 = vmatpush1.msra.mxu0 %v366
    %481 = vmatprep.subr.mxu0 0.0
    %482 = vmatpush1.msra.mxu0 %v369
    %483 = vmatprep.subr.mxu0 0.0
    %484 = vmatpush1.msra.mxu0 %v372
    %485 = vmatprep.subr.mxu0 0.0
    %486 = vmatpush1.msra.mxu0 %v375
    %487 = vmatprep.subr.mxu0 0.0
    %488 = vmatpush1.msra.mxu0 %v378
    %489 = vmatprep.subr.mxu0 0.0
    %490 = vmatpush1.msra.mxu0 0.0
    %491 = vmatprep.subr.mxu0 0.0
    %492 = vmatpush1.msra.mxu0 0.0
    %493 = vmatprep.subr.mxu0 0.0
    %494 = vmatpush1.msra.mxu0 0.0
    %495 = vmatprep.subr.mxu0 0.0
    %496 = vmatpush1.msra.mxu0 0.0
    %497 = vmatprep.subr.mxu0 0.0
    %498 = vmatpush1.msra.mxu0 0.0
    %499 = vmatprep.subr.mxu0 0.0
    %500 = vmatpush1.msra.mxu0 0.0
    %501 = vmatprep.subr.mxu0 0.0
    %502 = vmatpush1.msra.mxu0 0.0
    %503 = vmatprep.subr.mxu0 0.0
    %504 = vmatpush1.msra.mxu0 0.0
    %505 = vmatprep.subr.mxu0 0.0
    %506 = vmatpush1.msra.mxu0 0.0
    %507 = vmatprep.subr.mxu0 0.0
    %508 = vmatpush1.msra.mxu0 0.0
    %509 = vmatprep.subr.mxu0 0.0
    %510 = vmatpush1.msra.mxu0 0.0
    %511 = vmatprep.subr.mxu0 0.0
    %512 = vmatpush1.msra.mxu0 0.0
    %513 = vmatprep.subr.mxu0 0.0
    %514 = vmatpush1.msra.mxu0 0.0
    %515 = vmatprep.subr.mxu0 0.0
    %516 = vmatpush1.msra.mxu0 0.0
    %517 = vmatprep.subr.mxu0 0.0
    %518 = vmatpush1.msra.mxu0 0.0
    %519 = vmatprep.subr.mxu0 0.0
    %520 = vmatpush1.msra.mxu0 0.0
    %521 = vmatprep.mubr.f32.mxu0 0.0
    %522 = vmatmul.mubr.f32.gmra.mrb[0].mxu0 0.0
    %v523 = vpop.f32.mrb[0].mxu0
    %v524 = vadd.f32 0.0, %v523
    %v525 = vpop.f32.mrb[0].mxu0
    %526 = vdwg.mxu0
    %v527 = vadd.f32 %v383, %v453
    %v528 = vxor.u32 %v527, 2147483648
    %v529 = vmul.f32 %v528, 1.442695
    %v530 = vpow.pop %v529
    %v531 = vadd.f32 %v530, 1.0
    %v532 = vrcp.pop %v531
    %v533 = vmul.f32 1.0, %v532
    %v534 = vadd.f32 %v384, %v455
    %v535 = vxor.u32 %v534, 2147483648
    %v536 = vmul.f32 %v535, 1.442695
    %v537 = vpow.pop %v536
    %v538 = vadd.f32 %v537, 1.0
    %v539 = vrcp.pop %v538
    %v540 = vmul.f32 1.0, %v539
    %v542 = vlaneseq
    %v543 = vshrl.u32 %v542, 7
    %v544 = vsub.s32 0, %v543
    %v545 = vrot.slane %v379, %v544
    %v547 = vadd.f32 %v524, %v545
    %v548 = vmul.f32 %v533, %v547
    %v549 = vadd.f32 %v385, %v548
    %v550 = vtanh.pop %v549
    %v551 = vsub.f32 1.0, %v540
    %v552 = vmul.f32 %v551, %v550
    %v553 = vmul.f32 %v540, 0.0
    %v554 = vadd.f32 %v552, %v553
    %555 = vst [vmem:[#allocation3] sm:$0xff] %v554
    %s556 = smul.u32 1, 3
    %s557 = smul.addr %s556, 8
    %s558 = scalar_lea.vmem [#allocation2], %s557
    %v559 = vld [vmem:[%s558] sm:$0xff]
    %v560 = vld [vmem:[%s558 + $0x8] sm:$0xff]
    %v561 = vld [vmem:[%s558 + $0x10] sm:$0xff]
    %562 = vmatprep.subr.mxu0 %v332
    %563 = vmatpush1.msra.mxu0 %v331
    %564 = vmatprep.subr.mxu0 %v335
    %565 = vmatpush1.msra.mxu0 %v334
    %566 = vmatprep.subr.mxu0 %v338
    %567 = vmatpush1.msra.mxu0 %v337
    %568 = vmatprep.subr.mxu0 %v341
    %569 = vmatpush1.msra.mxu0 %v340
    %570 = vmatprep.subr.mxu0 %v344
    %571 = vmatpush1.msra.mxu0 %v343
    %572 = vmatprep.subr.mxu0 %v347
    %573 = vmatpush1.msra.mxu0 %v346
    %574 = vmatprep.subr.mxu0 %v350
    %575 = vmatpush1.msra.mxu0 %v349
    %576 = vmatprep.subr.mxu0 %v353
    %577 = vmatpush1.msra.mxu0 %v352
    %578 = vmatprep.subr.mxu0 %v356
    %579 = vmatpush1.msra.mxu0 %v355
    %580 = vmatprep.subr.mxu0 %v359
    %581 = vmatpush1.msra.mxu0 %v358
    %582 = vmatprep.subr.mxu0 %v362
    %583 = vmatpush1.msra.mxu0 %v361
    %584 = vmatprep.subr.mxu0 %v365
    %585 = vmatpush1.msra.mxu0 %v364
    %586 = vmatprep.subr.mxu0 %v368
    %587 = vmatpush1.msra.mxu0 %v367
    %588 = vmatprep.subr.mxu0 %v371
    %589 = vmatpush1.msra.mxu0 %v370
    %590 = vmatprep.subr.mxu0 %v374
    %591 = vmatpush1.msra.mxu0 %v373
    %592 = vmatprep.subr.mxu0 %v377
    %593 = vmatpush1.msra.mxu0 %v376
    %594 = vmatprep.subr.mxu0 0.0
    %595 = vmatpush1.msra.mxu0 0.0
    %596 = vmatprep.subr.mxu0 0.0
    %597 = vmatpush1.msra.mxu0 0.0
    %598 = vmatprep.subr.mxu0 0.0
    %599 = vmatpush1.msra.mxu0 0.0
    %600 = vmatprep.subr.mxu0 0.0
    %601 = vmatpush1.msra.mxu0 0.0
    %602 = vmatprep.subr.mxu0 0.0
    %603 = vmatpush1.msra.mxu0 0.0
    %604 = vmatprep.subr.mxu0 0.0
    %605 = vmatpush1.msra.mxu0 0.0
    %606 = vmatprep.subr.mxu0 0.0
    %607 = vmatpush1.msra.mxu0 0.0
    %608 = vmatprep.subr.mxu0 0.0
    %609 = vmatpush1.msra.mxu0 0.0
    %610 = vmatprep.subr.mxu0 0.0
    %611 = vmatpush1.msra.mxu0 0.0
    %612 = vmatprep.subr.mxu0 0.0
    %613 = vmatpush1.msra.mxu0 0.0
    %614 = vmatprep.subr.mxu0 0.0
    %615 = vmatpush1.msra.mxu0 0.0
    %616 = vmatprep.subr.mxu0 0.0
    %617 = vmatpush1.msra.mxu0 0.0
    %618 = vmatprep.subr.mxu0 0.0
    %619 = vmatpush1.msra.mxu0 0.0
    %620 = vmatprep.subr.mxu0 0.0
    %621 = vmatpush1.msra.mxu0 0.0
    %622 = vmatprep.subr.mxu0 0.0
    %623 = vmatpush1.msra.mxu0 0.0
    %624 = vmatprep.subr.mxu0 0.0
    %625 = vmatpush1.msra.mxu0 0.0
    %626 = vmatprep.mubr.f32.mxu0 0.0
    %627 = vmatmul.mubr.f32.gmra.mrb[0].mxu0 %v554
    %v628 = vpop.f32.mrb[0].mxu0
    %v629 = vadd.f32 0.0, %v628
    %v630 = vpop.f32.mrb[0].mxu0
    %v631 = vadd.f32 0.0, %v630
    %632 = vdwg.mxu0
    %633 = vmatprep.subr.mxu0 0.0
    %634 = vmatpush1.msra.mxu0 %v333
    %635 = vmatprep.subr.mxu0 0.0
    %636 = vmatpush1.msra.mxu0 %v336
    %637 = vmatprep.subr.mxu0 0.0
    %638 = vmatpush1.msra.mxu0 %v339
    %639 = vmatprep.subr.mxu0 0.0
    %640 = vmatpush1.msra.mxu0 %v342
    %641 = vmatprep.subr.mxu0 0.0
    %642 = vmatpush1.msra.mxu0 %v345
    %643 = vmatprep.subr.mxu0 0.0
    %644 = vmatpush1.msra.mxu0 %v348
    %645 = vmatprep.subr.mxu0 0.0
    %646 = vmatpush1.msra.mxu0 %v351
    %647 = vmatprep.subr.mxu0 0.0
    %648 = vmatpush1.msra.mxu0 %v354
    %649 = vmatprep.subr.mxu0 0.0
    %650 = vmatpush1.msra.mxu0 %v357
    %651 = vmatprep.subr.mxu0 0.0
    %652 = vmatpush1.msra.mxu0 %v360
    %653 = vmatprep.subr.mxu0 0.0
    %654 = vmatpush1.msra.mxu0 %v363
    %655 = vmatprep.subr.mxu0 0.0
    %656 = vmatpush1.msra.mxu0 %v366
    %657 = vmatprep.subr.mxu0 0.0
    %658 = vmatpush1.msra.mxu0 %v369
    %659 = vmatprep.subr.mxu0 0.0
    %660 = vmatpush1.msra.mxu0 %v372
    %661 = vmatprep.subr.mxu0 0.0
    %662 = vmatpush1.msra.mxu0 %v375
    %663 = vmatprep.subr.mxu0 0.0
    %664 = vmatpush1.msra.mxu0 %v378
    %665 = vmatprep.subr.mxu0 0.0
    %666 = vmatpush1.msra.mxu0 0.0
    %667 = vmatprep.subr.mxu0 0.0
    %668 = vmatpush1.msra.mxu0 0.0
    %669 = vmatprep.subr.mxu0 0.0
    %670 = vmatpush1.msra.mxu0 0.0
    %671 = vmatprep.subr.mxu0 0.0
    %672 = vmatpush1.msra.mxu0 0.0
    %673 = vmatprep.subr.mxu0 0.0
    %674 = vmatpush1.msra.mxu0 0.0
    %675 = vmatprep.subr.mxu0 0.0
    %676 = vmatpush1.msra.mxu0 0.0
    %677 = vmatprep.subr.mxu0 0.0
    %678 = vmatpush1.msra.mxu0 0.0
    %679 = vmatprep.subr.mxu0 0.0
    %680 = vmatpush1.msra.mxu0 0.0
    %681 = vmatprep.subr.mxu0 0.0
    %682 = vmatpush1.msra.mxu0 0.0
    %683 = vmatprep.subr.mxu0 0.0
    %684 = vmatpush1.msra.mxu0 0.0
    %685 = vmatprep.subr.mxu0 0.0
    %686 = vmatpush1.msra.mxu0 0.0
    %687 = vmatprep.subr.mxu0 0.0
    %688 = vmatpush1.msra.mxu0 0.0
    %689 = vmatprep.subr.mxu0 0.0
    %690 = vmatpush1.msra.mxu0 0.0
    %691 = vmatprep.subr.mxu0 0.0
    %692 = vmatpush1.msra.mxu0 0.0
    %693 = vmatprep.subr.mxu0 0.0
    %694 = vmatpush1.msra.mxu0 0.0
    %695 = vmatprep.subr.mxu0 0.0
    %696 = vmatpush1.msra.mxu0 0.0
    %697 = vmatprep.mubr.f32.mxu0 0.0
    %698 = vmatmul.mubr.f32.gmra.mrb[0].mxu0 %v554
    %v699 = vpop.f32.mrb[0].mxu0
    %v700 = vadd.f32 0.0, %v699
    %v701 = vpop.f32.mrb[0].mxu0
    %702 = vdwg.mxu0
    %v703 = vadd.f32 %v559, %v629
    %v704 = vxor.u32 %v703, 2147483648
    %v705 = vmul.f32 %v704, 1.442695
    %v706 = vpow.pop %v705
    %v707 = vadd.f32 %v706, 1.0
    %v708 = vrcp.pop %v707
    %v709 = vmul.f32 1.0, %v708
    %v710 = vadd.f32 %v560, %v631
    %v711 = vxor.u32 %v710, 2147483648
    %v712 = vmul.f32 %v711, 1.442695
    %v713 = vpow.pop %v712
    %v714 = vadd.f32 %v713, 1.0
    %v715 = vrcp.pop %v714
    %v716 = vmul.f32 1.0, %v715
    %v717 = vadd.f32 %v700, %v545
    %v718 = vmul.f32 %v709, %v717
    %v719 = vadd.f32 %v561, %v718
    %v720 = vtanh.pop %v719
    %v721 = vsub.f32 1.0, %v716
    %v722 = vmul.f32 %v721, %v720
    %v723 = vmul.f32 %v716, %v554
    %v724 = vadd.f32 %v722, %v723
    %s725 = scalar_lea.vmem [#allocation3], 8
    %726 = vst [vmem:[%s725] sm:$0xff] %v724
    %s727 = smul.u32 2, 3
    %s728 = smul.addr %s727, 8
    %s729 = scalar_lea.vmem [#allocation2], %s728
    %v730 = vld [vmem:[%s729] sm:$0xff]
    %v731 = vld [vmem:[%s729 + $0x8] sm:$0xff]
    %v732 = vld [vmem:[%s729 + $0x10] sm:$0xff]
    %733 = vmatprep.subr.mxu0 %v332
    %734 = vmatpush1.msra.mxu0 %v331
    %735 = vmatprep.subr.mxu0 %v335
    %736 = vmatpush1.msra.mxu0 %v334
    %737 = vmatprep.subr.mxu0 %v338
    %738 = vmatpush1.msra.mxu0 %v337
    %739 = vmatprep.subr.mxu0 %v341
    %740 = vmatpush1.msra.mxu0 %v340
    %741 = vmatprep.subr.mxu0 %v344
    %742 = vmatpush1.msra.mxu0 %v343
    %743 = vmatprep.subr.mxu0 %v347
    %744 = vmatpush1.msra.mxu0 %v346
    %745 = vmatprep.subr.mxu0 %v350
    %746 = vmatpush1.msra.mxu0 %v349
    %747 = vmatprep.subr.mxu0 %v353
    %748 = vmatpush1.msra.mxu0 %v352
    %749 = vmatprep.subr.mxu0 %v356
    %750 = vmatpush1.msra.mxu0 %v355
    %751 = vmatprep.subr.mxu0 %v359
    %752 = vmatpush1.msra.mxu0 %v358
    %753 = vmatprep.subr.mxu0 %v362
    %754 = vmatpush1.msra.mxu0 %v361
    %755 = vmatprep.subr.mxu0 %v365
    %756 = vmatpush1.msra.mxu0 %v364
    %757 = vmatprep.subr.mxu0 %v368
    %758 = vmatpush1.msra.mxu0 %v367
    %759 = vmatprep.subr.mxu0 %v371
    %760 = vmatpush1.msra.mxu0 %v370
    %761 = vmatprep.subr.mxu0 %v374
    %762 = vmatpush1.msra.mxu0 %v373
    %763 = vmatprep.subr.mxu0 %v377
    %764 = vmatpush1.msra.mxu0 %v376
    %765 = vmatprep.subr.mxu0 0.0
    %766 = vmatpush1.msra.mxu0 0.0
    %767 = vmatprep.subr.mxu0 0.0
    %768 = vmatpush1.msra.mxu0 0.0
    %769 = vmatprep.subr.mxu0 0.0
    %770 = vmatpush1.msra.mxu0 0.0
    %771 = vmatprep.subr.mxu0 0.0
    %772 = vmatpush1.msra.mxu0 0.0
    %773 = vmatprep.subr.mxu0 0.0
    %774 = vmatpush1.msra.mxu0 0.0
    %775 = vmatprep.subr.mxu0 0.0
    %776 = vmatpush1.msra.mxu0 0.0
    %777 = vmatprep.subr.mxu0 0.0
    %778 = vmatpush1.msra.mxu0 0.0
    %779 = vmatprep.subr.mxu0 0.0
    %780 = vmatpush1.msra.mxu0 0.0
    %781 = vmatprep.subr.mxu0 0.0
    %782 = vmatpush1.msra.mxu0 0.0
    %783 = vmatprep.subr.mxu0 0.0
    %784 = vmatpush1.msra.mxu0 0.0
    %785 = vmatprep.subr.mxu0 0.0
    %786 = vmatpush1.msra.mxu0 0.0
    %787 = vmatprep.subr.mxu0 0.0
    %788 = vmatpush1.msra.mxu0 0.0
    %789 = vmatprep.subr.mxu0 0.0
    %790 = vmatpush1.msra.mxu0 0.0
    %791 = vmatprep.subr.mxu0 0.0
    %792 = vmatpush1.msra.mxu0 0.0
    %793 = vmatprep.subr.mxu0 0.0
    %794 = vmatpush1.msra.mxu0 0.0
    %795 = vmatprep.subr.mxu0 0.0
    %796 = vmatpush1.msra.mxu0 0.0
    %797 = vmatprep.mubr.f32.mxu0 0.0
    %798 = vmatmul.mubr.f32.gmra.mrb[0].mxu0 %v724
    %v799 = vpop.f32.mrb[0].mxu0
    %v800 = vadd.f32 0.0, %v799
    %v801 = vpop.f32.mrb[0].mxu0
    %v802 = vadd.f32 0.0, %v801
    %803 = vdwg.mxu0
    %804 = vmatprep.subr.mxu0 0.0
    %805 = vmatpush1.msra.mxu0 %v333
    %806 = vmatprep.subr.mxu0 0.0
    %807 = vmatpush1.msra.mxu0 %v336
    %808 = vmatprep.subr.mxu0 0.0
    %809 = vmatpush1.msra.mxu0 %v339
    %810 = vmatprep.subr.mxu0 0.0
    %811 = vmatpush1.msra.mxu0 %v342
    %812 = vmatprep.subr.mxu0 0.0
    %813 = vmatpush1.msra.mxu0 %v345
    %814 = vmatprep.subr.mxu0 0.0
    %815 = vmatpush1.msra.mxu0 %v348
    %816 = vmatprep.subr.mxu0 0.0
    %817 = vmatpush1.msra.mxu0 %v351
    %818 = vmatprep.subr.mxu0 0.0
    %819 = vmatpush1.msra.mxu0 %v354
    %820 = vmatprep.subr.mxu0 0.0
    %821 = vmatpush1.msra.mxu0 %v357
    %822 = vmatprep.subr.mxu0 0.0
    %823 = vmatpush1.msra.mxu0 %v360
    %824 = vmatprep.subr.mxu0 0.0
    %825 = vmatpush1.msra.mxu0 %v363
    %826 = vmatprep.subr.mxu0 0.0
    %827 = vmatpush1.msra.mxu0 %v366
    %828 = vmatprep.subr.mxu0 0.0
    %829 = vmatpush1.msra.mxu0 %v369
    %830 = vmatprep.subr.mxu0 0.0
    %831 = vmatpush1.msra.mxu0 %v372
    %832 = vmatprep.subr.mxu0 0.0
    %833 = vmatpush1.msra.mxu0 %v375
    %834 = vmatprep.subr.mxu0 0.0
    %835 = vmatpush1.msra.mxu0 %v378
    %836 = vmatprep.subr.mxu0 0.0
    %837 = vmatpush1.msra.mxu0 0.0
    %838 = vmatprep.subr.mxu0 0.0
    %839 = vmatpush1.msra.mxu0 0.0
    %840 = vmatprep.subr.mxu0 0.0
    %841 = vmatpush1.msra.mxu0 0.0
    %842 = vmatprep.subr.mxu0 0.0
    %843 = vmatpush1.msra.mxu0 0.0
    %844 = vmatprep.subr.mxu0 0.0
    %845 = vmatpush1.msra.mxu0 0.0
    %846 = vmatprep.subr.mxu0 0.0
    %847 = vmatpush1.msra.mxu0 0.0
    %848 = vmatprep.subr.mxu0 0.0
    %849 = vmatpush1.msra.mxu0 0.0
    %850 = vmatprep.subr.mxu0 0.0
    %851 = vmatpush1.msra.mxu0 0.0
    %852 = vmatprep.subr.mxu0 0.0
    %853 = vmatpush1.msra.mxu0 0.0
    %854 = vmatprep.subr.mxu0 0.0
    %855 = vmatpush1.msra.mxu0 0.0
    %856 = vmatprep.subr.mxu0 0.0
    %857 = vmatpush1.msra.mxu0 0.0
    %858 = vmatprep.subr.mxu0 0.0
    %859 = vmatpush1.msra.mxu0 0.0
    %860 = vmatprep.subr.mxu0 0.0
    %861 = vmatpush1.msra.mxu0 0.0
    %862 = vmatprep.subr.mxu0 0.0
    %863 = vmatpush1.msra.mxu0 0.0
    %864 = vmatprep.subr.mxu0 0.0
    %865 = vmatpush1.msra.mxu0 0.0
    %866 = vmatprep.subr.mxu0 0.0
    %867 = vmatpush1.msra.mxu0 0.0
    %868 = vmatprep.mubr.f32.mxu0 0.0
    %869 = vmatmul.mubr.f32.gmra.mrb[0].mxu0 %v724
    %v870 = vpop.f32.mrb[0].mxu0
    %v871 = vadd.f32 0.0, %v870
    %v872 = vpop.f32.mrb[0].mxu0
    %873 = vdwg.mxu0
    %v874 = vadd.f32 %v730, %v800
    %v875 = vxor.u32 %v874, 2147483648
    %v876 = vmul.f32 %v875, 1.442695
    %v877 = vpow.pop %v876
    %v878 = vadd.f32 %v877, 1.0
    %v879 = vrcp.pop %v878
    %v880 = vmul.f32 1.0, %v879
    %v881 = vadd.f32 %v731, %v802
    %v882 = vxor.u32 %v881, 2147483648
    %v883 = vmul.f32 %v882, 1.442695
    %v884 = vpow.pop %v883
    %v885 = vadd.f32 %v884, 1.0
    %v886 = vrcp.pop %v885
    %v887 = vmul.f32 1.0, %v886
    %v888 = vadd.f32 %v871, %v545
    %v889 = vmul.f32 %v880, %v888
    %v890 = vadd.f32 %v732, %v889
    %v891 = vtanh.pop %v890
    %v892 = vsub.f32 1.0, %v887
    %v893 = vmul.f32 %v892, %v891
    %v894 = vmul.f32 %v887, %v724
    %v895 = vadd.f32 %v893, %v894
    %s896 = scalar_lea.vmem [#allocation3], 16
    %897 = vst [vmem:[%s896] sm:$0xff] %v895
    %s898 = smul.u32 3, 3
    %s899 = smul.addr %s898, 8
    %s900 = scalar_lea.vmem [#allocation2], %s899
    %v901 = vld [vmem:[%s900] sm:$0xff]
    %v902 = vld [vmem:[%s900 + $0x8] sm:$0xff]
    %v903 = vld [vmem:[%s900 + $0x10] sm:$0xff]
    %904 = vmatprep.subr.mxu0 %v332
    %905 = vmatpush1.msra.mxu0 %v331
    %906 = vmatprep.subr.mxu0 %v335
    %907 = vmatpush1.msra.mxu0 %v334
    %908 = vmatprep.subr.mxu0 %v338
    %909 = vmatpush1.msra.mxu0 %v337
    %910 = vmatprep.subr.mxu0 %v341
    %911 = vmatpush1.msra.mxu0 %v340
    %912 = vmatprep.subr.mxu0 %v344
    %913 = vmatpush1.msra.mxu0 %v343
    %914 = vmatprep.subr.mxu0 %v347
    %915 = vmatpush1.msra.mxu0 %v346
    %916 = vmatprep.subr.mxu0 %v350
    %917 = vmatpush1.msra.mxu0 %v349
    %918 = vmatprep.subr.mxu0 %v353
    %919 = vmatpush1.msra.mxu0 %v352
    %920 = vmatprep.subr.mxu0 %v356
    %921 = vmatpush1.msra.mxu0 %v355
    %922 = vmatprep.subr.mxu0 %v359
    %923 = vmatpush1.msra.mxu0 %v358
    %924 = vmatprep.subr.mxu0 %v362
    %925 = vmatpush1.msra.mxu0 %v361
    %926 = vmatprep.subr.mxu0 %v365
    %927 = vmatpush1.msra.mxu0 %v364
    %928 = vmatprep.subr.mxu0 %v368
    %929 = vmatpush1.msra.mxu0 %v367
    %930 = vmatprep.subr.mxu0 %v371
    %931 = vmatpush1.msra.mxu0 %v370
    %932 = vmatprep.subr.mxu0 %v374
    %933 = vmatpush1.msra.mxu0 %v373
    %934 = vmatprep.subr.mxu0 %v377
    %935 = vmatpush1.msra.mxu0 %v376
    %936 = vmatprep.subr.mxu0 0.0
    %937 = vmatpush1.msra.mxu0 0.0
    %938 = vmatprep.subr.mxu0 0.0
    %939 = vmatpush1.msra.mxu0 0.0
    %940 = vmatprep.subr.mxu0 0.0
    %941 = vmatpush1.msra.mxu0 0.0
    %942 = vmatprep.subr.mxu0 0.0
    %943 = vmatpush1.msra.mxu0 0.0
    %944 = vmatprep.subr.mxu0 0.0
    %945 = vmatpush1.msra.mxu0 0.0
    %946 = vmatprep.subr.mxu0 0.0
    %947 = vmatpush1.msra.mxu0 0.0
    %948 = vmatprep.subr.mxu0 0.0
    %949 = vmatpush1.msra.mxu0 0.0
    %950 = vmatprep.subr.mxu0 0.0
    %951 = vmatpush1.msra.mxu0 0.0
    %952 = vmatprep.subr.mxu0 0.0
    %953 = vmatpush1.msra.mxu0 0.0
    %954 = vmatprep.subr.mxu0 0.0
    %955 = vmatpush1.msra.mxu0 0.0
    %956 = vmatprep.subr.mxu0 0.0
    %957 = vmatpush1.msra.mxu0 0.0
    %958 = vmatprep.subr.mxu0 0.0
    %959 = vmatpush1.msra.mxu0 0.0
    %960 = vmatprep.subr.mxu0 0.0
    %961 = vmatpush1.msra.mxu0 0.0
    %962 = vmatprep.subr.mxu0 0.0
    %963 = vmatpush1.msra.mxu0 0.0
    %964 = vmatprep.subr.mxu0 0.0
    %965 = vmatpush1.msra.mxu0 0.0
    %966 = vmatprep.subr.mxu0 0.0
    %967 = vmatpush1.msra.mxu0 0.0
    %968 = vmatprep.mubr.f32.mxu0 0.0
    %969 = vmatmul.mubr.f32.gmra.mrb[0].mxu0 %v895
    %v970 = vpop.f32.mrb[0].mxu0
    %v971 = vadd.f32 0.0, %v970
    %v972 = vpop.f32.mrb[0].mxu0
    %v973 = vadd.f32 0.0, %v972
    %974 = vdwg.mxu0
    %975 = vmatprep.subr.mxu0 0.0
    %976 = vmatpush1.msra.mxu0 %v333
    %977 = vmatprep.subr.mxu0 0.0
    %978 = vmatpush1.msra.mxu0 %v336
    %979 = vmatprep.subr.mxu0 0.0
    %980 = vmatpush1.msra.mxu0 %v339
    %981 = vmatprep.subr.mxu0 0.0
    %982 = vmatpush1.msra.mxu0 %v342
    %983 = vmatprep.subr.mxu0 0.0
    %984 = vmatpush1.msra.mxu0 %v345
    %985 = vmatprep.subr.mxu0 0.0
    %986 = vmatpush1.msra.mxu0 %v348
    %987 = vmatprep.subr.mxu0 0.0
    %988 = vmatpush1.msra.mxu0 %v351
    %989 = vmatprep.subr.mxu0 0.0
    %990 = vmatpush1.msra.mxu0 %v354
    %991 = vmatprep.subr.mxu0 0.0
    %992 = vmatpush1.msra.mxu0 %v357
    %993 = vmatprep.subr.mxu0 0.0
    %994 = vmatpush1.msra.mxu0 %v360
    %995 = vmatprep.subr.mxu0 0.0
    %996 = vmatpush1.msra.mxu0 %v363
    %997 = vmatprep.subr.mxu0 0.0
    %998 = vmatpush1.msra.mxu0 %v366
    %999 = vmatprep.subr.mxu0 0.0
    %1000 = vmatpush1.msra.mxu0 %v369
    %1001 = vmatprep.subr.mxu0 0.0
    %1002 = vmatpush1.msra.mxu0 %v372
    %1003 = vmatprep.subr.mxu0 0.0
    %1004 = vmatpush1.msra.mxu0 %v375
    %1005 = vmatprep.subr.mxu0 0.0
    %1006 = vmatpush1.msra.mxu0 %v378
    %1007 = vmatprep.subr.mxu0 0.0
    %1008 = vmatpush1.msra.mxu0 0.0
    %1009 = vmatprep.subr.mxu0 0.0
    %1010 = vmatpush1.msra.mxu0 0.0
    %1011 = vmatprep.subr.mxu0 0.0
    %1012 = vmatpush1.msra.mxu0 0.0
    %1013 = vmatprep.subr.mxu0 0.0
    %1014 = vmatpush1.msra.mxu0 0.0
    %1015 = vmatprep.subr.mxu0 0.0
    %1016 = vmatpush1.msra.mxu0 0.0
    %1017 = vmatprep.subr.mxu0 0.0
    %1018 = vmatpush1.msra.mxu0 0.0
    %1019 = vmatprep.subr.mxu0 0.0
    %1020 = vmatpush1.msra.mxu0 0.0
    %1021 = vmatprep.subr.mxu0 0.0
    %1022 = vmatpush1.msra.mxu0 0.0
    %1023 = vmatprep.subr.mxu0 0.0
    %1024 = vmatpush1.msra.mxu0 0.0
    %1025 = vmatprep.subr.mxu0 0.0
    %1026 = vmatpush1.msra.mxu0 0.0
    %1027 = vmatprep.subr.mxu0 0.0
    %1028 = vmatpush1.msra.mxu0 0.0
    %1029 = vmatprep.subr.mxu0 0.0
    %1030 = vmatpush1.msra.mxu0 0.0
    %1031 = vmatprep.subr.mxu0 0.0
    %1032 = vmatpush1.msra.mxu0 0.0
    %1033 = vmatprep.subr.mxu0 0.0
    %1034 = vmatpush1.msra.mxu0 0.0
    %1035 = vmatprep.subr.mxu0 0.0
    %1036 = vmatpush1.msra.mxu0 0.0
    %1037 = vmatprep.subr.mxu0 0.0
    %1038 = vmatpush1.msra.mxu0 0.0
    %1039 = vmatprep.mubr.f32.mxu0 0.0
    %1040 = vmatmul.mubr.f32.gmra.mrb[0].mxu0 %v895
    %v1041 = vpop.f32.mrb[0].mxu0
    %v1042 = vadd.f32 0.0, %v1041
    %v1043 = vpop.f32.mrb[0].mxu0
    %1044 = vdwg.mxu0
    %v1045 = vadd.f32 %v901, %v971
    %v1046 = vxor.u32 %v1045, 2147483648
    %v1047 = vmul.f32 %v1046, 1.442695
    %v1048 = vpow.pop %v1047
    %v1049 = vadd.f32 %v1048, 1.0
    %v1050 = vrcp.pop %v1049
    %v1051 = vmul.f32 1.0, %v1050
    %v1052 = vadd.f32 %v902, %v973
    %v1053 = vxor.u32 %v1052, 2147483648
    %v1054 = vmul.f32 %v1053, 1.442695
    %v1055 = vpow.pop %v1054
    %v1056 = vadd.f32 %v1055, 1.0
    %v1057 = vrcp.pop %v1056
    %v1058 = vmul.f32 1.0, %v1057
    %v1059 = vadd.f32 %v1042, %v545
    %v1060 = vmul.f32 %v1051, %v1059
    %v1061 = vadd.f32 %v903, %v1060
    %v1062 = vtanh.pop %v1061
    %v1063 = vsub.f32 1.0, %v1058
    %v1064 = vmul.f32 %v1063, %v1062
    %v1065 = vmul.f32 %v1058, %v895
    %v1066 = vadd.f32 %v1064, %v1065
    %s1067 = scalar_lea.vmem [#allocation3], 24
    %1068 = vst [vmem:[%s1067] sm:$0xff] %v1066
    %s1069 = smul.u32 4, 3
    %s1070 = smul.addr %s1069, 8
    %s1071 = scalar_lea.vmem [#allocation2], %s1070
    %v1072 = vld [vmem:[%s1071] sm:$0xff]
    %v1073 = vld [vmem:[%s1071 + $0x8] sm:$0xff]
    %v1074 = vld [vmem:[%s1071 + $0x10] sm:$0xff]
    %1075 = vmatprep.subr.mxu0 %v332
    %1076 = vmatpush1.msra.mxu0 %v331
    %1077 = vmatprep.subr.mxu0 %v335
    %1078 = vmatpush1.msra.mxu0 %v334
    %1079 = vmatprep.subr.mxu0 %v338
    %1080 = vmatpush1.msra.mxu0 %v337
    %1081 = vmatprep.subr.mxu0 %v341
    %1082 = vmatpush1.msra.mxu0 %v340
    %1083 = vmatprep.subr.mxu0 %v344
    %1084 = vmatpush1.msra.mxu0 %v343
    %1085 = vmatprep.subr.mxu0 %v347
    %1086 = vmatpush1.msra.mxu0 %v346
    %1087 = vmatprep.subr.mxu0 %v350
    %1088 = vmatpush1.msra.mxu0 %v349
    %1089 = vmatprep.subr.mxu0 %v353
    %1090 = vmatpush1.msra.mxu0 %v352
    %1091 = vmatprep.subr.mxu0 %v356
    %1092 = vmatpush1.msra.mxu0 %v355
    %1093 = vmatprep.subr.mxu0 %v359
    %1094 = vmatpush1.msra.mxu0 %v358
    %1095 = vmatprep.subr.mxu0 %v362
    %1096 = vmatpush1.msra.mxu0 %v361
    %1097 = vmatprep.subr.mxu0 %v365
    %1098 = vmatpush1.msra.mxu0 %v364
    %1099 = vmatprep.subr.mxu0 %v368
    %1100 = vmatpush1.msra.mxu0 %v367
    %1101 = vmatprep.subr.mxu0 %v371
    %1102 = vmatpush1.msra.mxu0 %v370
    %1103 = vmatprep.subr.mxu0 %v374
    %1104 = vmatpush1.msra.mxu0 %v373
    %1105 = vmatprep.subr.mxu0 %v377
    %1106 = vmatpush1.msra.mxu0 %v376
    %1107 = vmatprep.subr.mxu0 0.0
    %1108 = vmatpush1.msra.mxu0 0.0
    %1109 = vmatprep.subr.mxu0 0.0
    %1110 = vmatpush1.msra.mxu0 0.0
    %1111 = vmatprep.subr.mxu0 0.0
    %1112 = vmatpush1.msra.mxu0 0.0
    %1113 = vmatprep.subr.mxu0 0.0
    %1114 = vmatpush1.msra.mxu0 0.0
    %1115 = vmatprep.subr.mxu0 0.0
    %1116 = vmatpush1.msra.mxu0 0.0
    %1117 = vmatprep.subr.mxu0 0.0
    %1118 = vmatpush1.msra.mxu0 0.0
    %1119 = vmatprep.subr.mxu0 0.0
    %1120 = vmatpush1.msra.mxu0 0.0
    %1121 = vmatprep.subr.mxu0 0.0
    %1122 = vmatpush1.msra.mxu0 0.0
    %1123 = vmatprep.subr.mxu0 0.0
    %1124 = vmatpush1.msra.mxu0 0.0
    %1125 = vmatprep.subr.mxu0 0.0
    %1126 = vmatpush1.msra.mxu0 0.0
    %1127 = vmatprep.subr.mxu0 0.0
    %1128 = vmatpush1.msra.mxu0 0.0
    %1129 = vmatprep.subr.mxu0 0.0
    %1130 = vmatpush1.msra.mxu0 0.0
    %1131 = vmatprep.subr.mxu0 0.0
    %1132 = vmatpush1.msra.mxu0 0.0
    %1133 = vmatprep.subr.mxu0 0.0
    %1134 = vmatpush1.msra.mxu0 0.0
    %1135 = vmatprep.subr.mxu0 0.0
    %1136 = vmatpush1.msra.mxu0 0.0
    %1137 = vmatprep.subr.mxu0 0.0
    %1138 = vmatpush1.msra.mxu0 0.0
    %1139 = vmatprep.mubr.f32.mxu0 0.0
    %1140 = vmatmul.mubr.f32.gmra.mrb[0].mxu0 %v1066
    %v1141 = vpop.f32.mrb[0].mxu0
    %v1142 = vadd.f32 0.0, %v1141
    %v1143 = vpop.f32.mrb[0].mxu0
    %v1144 = vadd.f32 0.0, %v1143
    %1145 = vdwg.mxu0
    %1146 = vmatprep.subr.mxu0 0.0
    %1147 = vmatpush1.msra.mxu0 %v333
    %1148 = vmatprep.subr.mxu0 0.0
    %1149 = vmatpush1.msra.mxu0 %v336
    %1150 = vmatprep.subr.mxu0 0.0
    %1151 = vmatpush1.msra.mxu0 %v339
    %1152 = vmatprep.subr.mxu0 0.0
    %1153 = vmatpush1.msra.mxu0 %v342
    %1154 = vmatprep.subr.mxu0 0.0
    %1155 = vmatpush1.msra.mxu0 %v345
    %1156 = vmatprep.subr.mxu0 0.0
    %1157 = vmatpush1.msra.mxu0 %v348
    %1158 = vmatprep.subr.mxu0 0.0
    %1159 = vmatpush1.msra.mxu0 %v351
    %1160 = vmatprep.subr.mxu0 0.0
    %1161 = vmatpush1.msra.mxu0 %v354
    %1162 = vmatprep.subr.mxu0 0.0
    %1163 = vmatpush1.msra.mxu0 %v357
    %1164 = vmatprep.subr.mxu0 0.0
    %1165 = vmatpush1.msra.mxu0 %v360
    %1166 = vmatprep.subr.mxu0 0.0
    %1167 = vmatpush1.msra.mxu0 %v363
    %1168 = vmatprep.subr.mxu0 0.0
    %1169 = vmatpush1.msra.mxu0 %v366
    %1170 = vmatprep.subr.mxu0 0.0
    %1171 = vmatpush1.msra.mxu0 %v369
    %1172 = vmatprep.subr.mxu0 0.0
    %1173 = vmatpush1.msra.mxu0 %v372
    %1174 = vmatprep.subr.mxu0 0.0
    %1175 = vmatpush1.msra.mxu0 %v375
    %1176 = vmatprep.subr.mxu0 0.0
    %1177 = vmatpush1.msra.mxu0 %v378
    %1178 = vmatprep.subr.mxu0 0.0
    %1179 = vmatpush1.msra.mxu0 0.0
    %1180 = vmatprep.subr.mxu0 0.0
    %1181 = vmatpush1.msra.mxu0 0.0
    %1182 = vmatprep.subr.mxu0 0.0
    %1183 = vmatpush1.msra.mxu0 0.0
    %1184 = vmatprep.subr.mxu0 0.0
    %1185 = vmatpush1.msra.mxu0 0.0
    %1186 = vmatprep.subr.mxu0 0.0
    %1187 = vmatpush1.msra.mxu0 0.0
    %1188 = vmatprep.subr.mxu0 0.0
    %1189 = vmatpush1.msra.mxu0 0.0
    %1190 = vmatprep.subr.mxu0 0.0
    %1191 = vmatpush1.msra.mxu0 0.0
    %1192 = vmatprep.subr.mxu0 0.0
    %1193 = vmatpush1.msra.mxu0 0.0
    %1194 = vmatprep.subr.mxu0 0.0
    %1195 = vmatpush1.msra.mxu0 0.0
    %1196 = vmatprep.subr.mxu0 0.0
    %1197 = vmatpush1.msra.mxu0 0.0
    %1198 = vmatprep.subr.mxu0 0.0
    %1199 = vmatpush1.msra.mxu0 0.0
    %1200 = vmatprep.subr.mxu0 0.0
    %1201 = vmatpush1.msra.mxu0 0.0
    %1202 = vmatprep.subr.mxu0 0.0
    %1203 = vmatpush1.msra.mxu0 0.0
    %1204 = vmatprep.subr.mxu0 0.0
    %1205 = vmatpush1.msra.mxu0 0.0
    %1206 = vmatprep.subr.mxu0 0.0
    %1207 = vmatpush1.msra.mxu0 0.0
    %1208 = vmatprep.subr.mxu0 0.0
    %1209 = vmatpush1.msra.mxu0 0.0
    %1210 = vmatprep.mubr.f32.mxu0 0.0
    %1211 = vmatmul.mubr.f32.gmra.mrb[0].mxu0 %v1066
    %v1212 = vpop.f32.mrb[0].mxu0
    %v1213 = vadd.f32 0.0, %v1212
    %v1214 = vpop.f32.mrb[0].mxu0
    %1215 = vdwg.mxu0
    %v1216 = vadd.f32 %v1072, %v1142
    %v1217 = vxor.u32 %v1216, 2147483648
    %v1218 = vmul.f32 %v1217, 1.442695
    %v1219 = vpow.pop %v1218
    %v1220 = vadd.f32 %v1219, 1.0
    %v1221 = vrcp.pop %v1220
    %v1222 = vmul.f32 1.0, %v1221
    %v1223 = vadd.f32 %v1073, %v1144
    %v1224 = vxor.u32 %v1223, 2147483648
    %v1225 = vmul.f32 %v1224, 1.442695
    %v1226 = vpow.pop %v1225
    %v1227 = vadd.f32 %v1226, 1.0
    %v1228 = vrcp.pop %v1227
    %v1229 = vmul.f32 1.0, %v1228
    %v1230 = vadd.f32 %v1213, %v545
    %v1231 = vmul.f32 %v1222, %v1230
    %v1232 = vadd.f32 %v1074, %v1231
    %v1233 = vtanh.pop %v1232
    %v1234 = vsub.f32 1.0, %v1229
    %v1235 = vmul.f32 %v1234, %v1233
    %v1236 = vmul.f32 %v1229, %v1066
    %v1237 = vadd.f32 %v1235, %v1236
    %s1238 = scalar_lea.vmem [#allocation3], 32
    %1239 = vst [vmem:[%s1238] sm:$0xff] %v1237
    %s1240 = smul.u32 5, 3
    %s1241 = smul.addr %s1240, 8
    %s1242 = scalar_lea.vmem [#allocation2], %s1241
    %v1243 = vld [vmem:[%s1242] sm:$0xff]
    %v1244 = vld [vmem:[%s1242 + $0x8] sm:$0xff]
    %v1245 = vld [vmem:[%s1242 + $0x10] sm:$0xff]
    %1246 = vmatprep.subr.mxu0 %v332
    %1247 = vmatpush1.msra.mxu0 %v331
    %1248 = vmatprep.subr.mxu0 %v335
    %1249 = vmatpush1.msra.mxu0 %v334
    %1250 = vmatprep.subr.mxu0 %v338
    %1251 = vmatpush1.msra.mxu0 %v337
    %1252 = vmatprep.subr.mxu0 %v341
    %1253 = vmatpush1.msra.mxu0 %v340
    %1254 = vmatprep.subr.mxu0 %v344
    %1255 = vmatpush1.msra.mxu0 %v343
    %1256 = vmatprep.subr.mxu0 %v347
    %1257 = vmatpush1.msra.mxu0 %v346
    %1258 = vmatprep.subr.mxu0 %v350
    %1259 = vmatpush1.msra.mxu0 %v349
    %1260 = vmatprep.subr.mxu0 %v353
    %1261 = vmatpush1.msra.mxu0 %v352
    %1262 = vmatprep.subr.mxu0 %v356
    %1263 = vmatpush1.msra.mxu0 %v355
    %1264 = vmatprep.subr.mxu0 %v359
    %1265 = vmatpush1.msra.mxu0 %v358
    %1266 = vmatprep.subr.mxu0 %v362
    %1267 = vmatpush1.msra.mxu0 %v361
    %1268 = vmatprep.subr.mxu0 %v365
    %1269 = vmatpush1.msra.mxu0 %v364
    %1270 = vmatprep.subr.mxu0 %v368
    %1271 = vmatpush1.msra.mxu0 %v367
    %1272 = vmatprep.subr.mxu0 %v371
    %1273 = vmatpush1.msra.mxu0 %v370
    %1274 = vmatprep.subr.mxu0 %v374
    %1275 = vmatpush1.msra.mxu0 %v373
    %1276 = vmatprep.subr.mxu0 %v377
    %1277 = vmatpush1.msra.mxu0 %v376
    %1278 = vmatprep.subr.mxu0 0.0
    %1279 = vmatpush1.msra.mxu0 0.0
    %1280 = vmatprep.subr.mxu0 0.0
    %1281 = vmatpush1.msra.mxu0 0.0
    %1282 = vmatprep.subr.mxu0 0.0
    %1283 = vmatpush1.msra.mxu0 0.0
    %1284 = vmatprep.subr.mxu0 0.0
    %1285 = vmatpush1.msra.mxu0 0.0
    %1286 = vmatprep.subr.mxu0 0.0
    %1287 = vmatpush1.msra.mxu0 0.0
    %1288 = vmatprep.subr.mxu0 0.0
    %1289 = vmatpush1.msra.mxu0 0.0
    %1290 = vmatprep.subr.mxu0 0.0
    %1291 = vmatpush1.msra.mxu0 0.0
    %1292 = vmatprep.subr.mxu0 0.0
    %1293 = vmatpush1.msra.mxu0 0.0
    %1294 = vmatprep.subr.mxu0 0.0
    %1295 = vmatpush1.msra.mxu0 0.0
    %1296 = vmatprep.subr.mxu0 0.0
    %1297 = vmatpush1.msra.mxu0 0.0
    %1298 = vmatprep.subr.mxu0 0.0
    %1299 = vmatpush1.msra.mxu0 0.0
    %1300 = vmatprep.subr.mxu0 0.0
    %1301 = vmatpush1.msra.mxu0 0.0
    %1302 = vmatprep.subr.mxu0 0.0
    %1303 = vmatpush1.msra.mxu0 0.0
    %1304 = vmatprep.subr.mxu0 0.0
    %1305 = vmatpush1.msra.mxu0 0.0
    %1306 = vmatprep.subr.mxu0 0.0
    %1307 = vmatpush1.msra.mxu0 0.0
    %1308 = vmatprep.subr.mxu0 0.0
    %1309 = vmatpush1.msra.mxu0 0.0
    %1310 = vmatprep.mubr.f32.mxu0 0.0
    %1311 = vmatmul.mubr.f32.gmra.mrb[0].mxu0 %v1237
    %v1312 = vpop.f32.mrb[0].mxu0
    %v1313 = vadd.f32 0.0, %v1312
    %v1314 = vpop.f32.mrb[0].mxu0
    %v1315 = vadd.f32 0.0, %v1314
    %1316 = vdwg.mxu0
    %1317 = vmatprep.subr.mxu0 0.0
    %1318 = vmatpush1.msra.mxu0 %v333
    %1319 = vmatprep.subr.mxu0 0.0
    %1320 = vmatpush1.msra.mxu0 %v336
    %1321 = vmatprep.subr.mxu0 0.0
    %1322 = vmatpush1.msra.mxu0 %v339
    %1323 = vmatprep.subr.mxu0 0.0
    %1324 = vmatpush1.msra.mxu0 %v342
    %1325 = vmatprep.subr.mxu0 0.0
    %1326 = vmatpush1.msra.mxu0 %v345
    %1327 = vmatprep.subr.mxu0 0.0
    %1328 = vmatpush1.msra.mxu0 %v348
    %1329 = vmatprep.subr.mxu0 0.0
    %1330 = vmatpush1.msra.mxu0 %v351
    %1331 = vmatprep.subr.mxu0 0.0
    %1332 = vmatpush1.msra.mxu0 %v354
    %1333 = vmatprep.subr.mxu0 0.0
    %1334 = vmatpush1.msra.mxu0 %v357
    %1335 = vmatprep.subr.mxu0 0.0
    %1336 = vmatpush1.msra.mxu0 %v360
    %1337 = vmatprep.subr.mxu0 0.0
    %1338 = vmatpush1.msra.mxu0 %v363
    %1339 = vmatprep.subr.mxu0 0.0
    %1340 = vmatpush1.msra.mxu0 %v366
    %1341 = vmatprep.subr.mxu0 0.0
    %1342 = vmatpush1.msra.mxu0 %v369
    %1343 = vmatprep.subr.mxu0 0.0
    %1344 = vmatpush1.msra.mxu0 %v372
    %1345 = vmatprep.subr.mxu0 0.0
    %1346 = vmatpush1.msra.mxu0 %v375
    %1347 = vmatprep.subr.mxu0 0.0
    %1348 = vmatpush1.msra.mxu0 %v378
    %1349 = vmatprep.subr.mxu0 0.0
    %1350 = vmatpush1.msra.mxu0 0.0
    %1351 = vmatprep.subr.mxu0 0.0
    %1352 = vmatpush1.msra.mxu0 0.0
    %1353 = vmatprep.subr.mxu0 0.0
    %1354 = vmatpush1.msra.mxu0 0.0
    %1355 = vmatprep.subr.mxu0 0.0
    %1356 = vmatpush1.msra.mxu0 0.0
    %1357 = vmatprep.subr.mxu0 0.0
    %1358 = vmatpush1.msra.mxu0 0.0
    %1359 = vmatprep.subr.mxu0 0.0
    %1360 = vmatpush1.msra.mxu0 0.0
    %1361 = vmatprep.subr.mxu0 0.0
    %1362 = vmatpush1.msra.mxu0 0.0
    %1363 = vmatprep.subr.mxu0 0.0
    %1364 = vmatpush1.msra.mxu0 0.0
    %1365 = vmatprep.subr.mxu0 0.0
    %1366 = vmatpush1.msra.mxu0 0.0
    %1367 = vmatprep.subr.mxu0 0.0
    %1368 = vmatpush1.msra.mxu0 0.0
    %1369 = vmatprep.subr.mxu0 0.0
    %1370 = vmatpush1.msra.mxu0 0.0
    %1371 = vmatprep.subr.mxu0 0.0
    %1372 = vmatpush1.msra.mxu0 0.0
    %1373 = vmatprep.subr.mxu0 0.0
    %1374 = vmatpush1.msra.mxu0 0.0
    %1375 = vmatprep.subr.mxu0 0.0
    %1376 = vmatpush1.msra.mxu0 0.0
    %1377 = vmatprep.subr.mxu0 0.0
    %1378 = vmatpush1.msra.mxu0 0.0
    %1379 = vmatprep.subr.mxu0 0.0
    %1380 = vmatpush1.msra.mxu0 0.0
    %1381 = vmatprep.mubr.f32.mxu0 0.0
    %1382 = vmatmul.mubr.f32.gmra.mrb[0].mxu0 %v1237
    %v1383 = vpop.f32.mrb[0].mxu0
    %v1384 = vadd.f32 0.0, %v1383
    %v1385 = vpop.f32.mrb[0].mxu0
    %1386 = vdwg.mxu0
    %v1387 = vadd.f32 %v1243, %v1313
    %v1388 = vxor.u32 %v1387, 2147483648
    %v1389 = vmul.f32 %v1388, 1.442695
    %v1390 = vpow.pop %v1389
    %v1391 = vadd.f32 %v1390, 1.0
    %v1392 = vrcp.pop %v1391
    %v1393 = vmul.f32 1.0, %v1392
    %v1394 = vadd.f32 %v1244, %v1315
    %v1395 = vxor.u32 %v1394, 2147483648
    %v1396 = vmul.f32 %v1395, 1.442695
    %v1397 = vpow.pop %v1396
    %v1398 = vadd.f32 %v1397, 1.0
    %v1399 = vrcp.pop %v1398
    %v1400 = vmul.f32 1.0, %v1399
    %v1401 = vadd.f32 %v1384, %v545
    %v1402 = vmul.f32 %v1393, %v1401
    %v1403 = vadd.f32 %v1245, %v1402
    %v1404 = vtanh.pop %v1403
    %v1405 = vsub.f32 1.0, %v1400
    %v1406 = vmul.f32 %v1405, %v1404
    %v1407 = vmul.f32 %v1400, %v1237
    %v1408 = vadd.f32 %v1406, %v1407
    %s1409 = scalar_lea.vmem [#allocation3], 40
    %1410 = vst [vmem:[%s1409] sm:$0xff] %v1408
    %s1411 = smul.u32 6, 3
    %s1412 = smul.addr %s1411, 8
    %s1413 = scalar_lea.vmem [#allocation2], %s1412
    %v1414 = vld [vmem:[%s1413] sm:$0xff]
    %v1415 = vld [vmem:[%s1413 + $0x8] sm:$0xff]
    %v1416 = vld [vmem:[%s1413 + $0x10] sm:$0xff]
    %1417 = vmatprep.subr.mxu0 %v332
    %1418 = vmatpush1.msra.mxu0 %v331
    %1419 = vmatprep.subr.mxu0 %v335
    %1420 = vmatpush1.msra.mxu0 %v334
    %1421 = vmatprep.subr.mxu0 %v338
    %1422 = vmatpush1.msra.mxu0 %v337
    %1423 = vmatprep.subr.mxu0 %v341
    %1424 = vmatpush1.msra.mxu0 %v340
    %1425 = vmatprep.subr.mxu0 %v344
    %1426 = vmatpush1.msra.mxu0 %v343
    %1427 = vmatprep.subr.mxu0 %v347
    %1428 = vmatpush1.msra.mxu0 %v346
    %1429 = vmatprep.subr.mxu0 %v350
    %1430 = vmatpush1.msra.mxu0 %v349
    %1431 = vmatprep.subr.mxu0 %v353
    %1432 = vmatpush1.msra.mxu0 %v352
    %1433 = vmatprep.subr.mxu0 %v356
    %1434 = vmatpush1.msra.mxu0 %v355
    %1435 = vmatprep.subr.mxu0 %v359
    %1436 = vmatpush1.msra.mxu0 %v358
    %1437 = vmatprep.subr.mxu0 %v362
    %1438 = vmatpush1.msra.mxu0 %v361
    %1439 = vmatprep.subr.mxu0 %v365
    %1440 = vmatpush1.msra.mxu0 %v364
    %1441 = vmatprep.subr.mxu0 %v368
    %1442 = vmatpush1.msra.mxu0 %v367
    %1443 = vmatprep.subr.mxu0 %v371
    %1444 = vmatpush1.msra.mxu0 %v370
    %1445 = vmatprep.subr.mxu0 %v374
    %1446 = vmatpush1.msra.mxu0 %v373
    %1447 = vmatprep.subr.mxu0 %v377
    %1448 = vmatpush1.msra.mxu0 %v376
    %1449 = vmatprep.subr.mxu0 0.0
    %1450 = vmatpush1.msra.mxu0 0.0
    %1451 = vmatprep.subr.mxu0 0.0
    %1452 = vmatpush1.msra.mxu0 0.0
    %1453 = vmatprep.subr.mxu0 0.0
    %1454 = vmatpush1.msra.mxu0 0.0
    %1455 = vmatprep.subr.mxu0 0.0
    %1456 = vmatpush1.msra.mxu0 0.0
    %1457 = vmatprep.subr.mxu0 0.0
    %1458 = vmatpush1.msra.mxu0 0.0
    %1459 = vmatprep.subr.mxu0 0.0
    %1460 = vmatpush1.msra.mxu0 0.0
    %1461 = vmatprep.subr.mxu0 0.0
    %1462 = vmatpush1.msra.mxu0 0.0
    %1463 = vmatprep.subr.mxu0 0.0
    %1464 = vmatpush1.msra.mxu0 0.0
    %1465 = vmatprep.subr.mxu0 0.0
    %1466 = vmatpush1.msra.mxu0 0.0
    %1467 = vmatprep.subr.mxu0 0.0
    %1468 = vmatpush1.msra.mxu0 0.0
    %1469 = vmatprep.subr.mxu0 0.0
    %1470 = vmatpush1.msra.mxu0 0.0
    %1471 = vmatprep.subr.mxu0 0.0
    %1472 = vmatpush1.msra.mxu0 0.0
    %1473 = vmatprep.subr.mxu0 0.0
    %1474 = vmatpush1.msra.mxu0 0.0
    %1475 = vmatprep.subr.mxu0 0.0
    %1476 = vmatpush1.msra.mxu0 0.0
    %1477 = vmatprep.subr.mxu0 0.0
    %1478 = vmatpush1.msra.mxu0 0.0
    %1479 = vmatprep.subr.mxu0 0.0
    %1480 = vmatpush1.msra.mxu0 0.0
    %1481 = vmatprep.mubr.f32.mxu0 0.0
    %1482 = vmatmul.mubr.f32.gmra.mrb[0].mxu0 %v1408
    %v1483 = vpop.f32.mrb[0].mxu0
    %v1484 = vadd.f32 0.0, %v1483
    %v1485 = vpop.f32.mrb[0].mxu0
    %v1486 = vadd.f32 0.0, %v1485
    %1487 = vdwg.mxu0
    %1488 = vmatprep.subr.mxu0 0.0
    %1489 = vmatpush1.msra.mxu0 %v333
    %1490 = vmatprep.subr.mxu0 0.0
    %1491 = vmatpush1.msra.mxu0 %v336
    %1492 = vmatprep.subr.mxu0 0.0
    %1493 = vmatpush1.msra.mxu0 %v339
    %1494 = vmatprep.subr.mxu0 0.0
    %1495 = vmatpush1.msra.mxu0 %v342
    %1496 = vmatprep.subr.mxu0 0.0
    %1497 = vmatpush1.msra.mxu0 %v345
    %1498 = vmatprep.subr.mxu0 0.0
    %1499 = vmatpush1.msra.mxu0 %v348
    %1500 = vmatprep.subr.mxu0 0.0
    %1501 = vmatpush1.msra.mxu0 %v351
    %1502 = vmatprep.subr.mxu0 0.0
    %1503 = vmatpush1.msra.mxu0 %v354
    %1504 = vmatprep.subr.mxu0 0.0
    %1505 = vmatpush1.msra.mxu0 %v357
    %1506 = vmatprep.subr.mxu0 0.0
    %1507 = vmatpush1.msra.mxu0 %v360
    %1508 = vmatprep.subr.mxu0 0.0
    %1509 = vmatpush1.msra.mxu0 %v363
    %1510 = vmatprep.subr.mxu0 0.0
    %1511 = vmatpush1.msra.mxu0 %v366
    %1512 = vmatprep.subr.mxu0 0.0
    %1513 = vmatpush1.msra.mxu0 %v369
    %1514 = vmatprep.subr.mxu0 0.0
    %1515 = vmatpush1.msra.mxu0 %v372
    %1516 = vmatprep.subr.mxu0 0.0
    %1517 = vmatpush1.msra.mxu0 %v375
    %1518 = vmatprep.subr.mxu0 0.0
    %1519 = vmatpush1.msra.mxu0 %v378
    %1520 = vmatprep.subr.mxu0 0.0
    %1521 = vmatpush1.msra.mxu0 0.0
    %1522 = vmatprep.subr.mxu0 0.0
    %1523 = vmatpush1.msra.mxu0 0.0
    %1524 = vmatprep.subr.mxu0 0.0
    %1525 = vmatpush1.msra.mxu0 0.0
    %1526 = vmatprep.subr.mxu0 0.0
    %1527 = vmatpush1.msra.mxu0 0.0
    %1528 = vmatprep.subr.mxu0 0.0
    %1529 = vmatpush1.msra.mxu0 0.0
    %1530 = vmatprep.subr.mxu0 0.0
    %1531 = vmatpush1.msra.mxu0 0.0
    %1532 = vmatprep.subr.mxu0 0.0
    %1533 = vmatpush1.msra.mxu0 0.0
    %1534 = vmatprep.subr.mxu0 0.0
    %1535 = vmatpush1.msra.mxu0 0.0
    %1536 = vmatprep.subr.mxu0 0.0
    %1537 = vmatpush1.msra.mxu0 0.0
    %1538 = vmatprep.subr.mxu0 0.0
    %1539 = vmatpush1.msra.mxu0 0.0
    %1540 = vmatprep.subr.mxu0 0.0
    %1541 = vmatpush1.msra.mxu0 0.0
    %1542 = vmatprep.subr.mxu0 0.0
    %1543 = vmatpush1.msra.mxu0 0.0
    %1544 = vmatprep.subr.mxu0 0.0
    %1545 = vmatpush1.msra.mxu0 0.0
    %1546 = vmatprep.subr.mxu0 0.0
    %1547 = vmatpush1.msra.mxu0 0.0
    %1548 = vmatprep.subr.mxu0 0.0
    %1549 = vmatpush1.msra.mxu0 0.0
    %1550 = vmatprep.subr.mxu0 0.0
    %1551 = vmatpush1.msra.mxu0 0.0
    %1552 = vmatprep.mubr.f32.mxu0 0.0
    %1553 = vmatmul.mubr.f32.gmra.mrb[0].mxu0 %v1408
    %v1554 = vpop.f32.mrb[0].mxu0
    %v1555 = vadd.f32 0.0, %v1554
    %v1556 = vpop.f32.mrb[0].mxu0
    %1557 = vdwg.mxu0
    %v1558 = vadd.f32 %v1414, %v1484
    %v1559 = vxor.u32 %v1558, 2147483648
    %v1560 = vmul.f32 %v1559, 1.442695
    %v1561 = vpow.pop %v1560
    %v1562 = vadd.f32 %v1561, 1.0
    %v1563 = vrcp.pop %v1562
    %v1564 = vmul.f32 1.0, %v1563
    %v1565 = vadd.f32 %v1415, %v1486
    %v1566 = vxor.u32 %v1565, 2147483648
    %v1567 = vmul.f32 %v1566, 1.442695
    %v1568 = vpow.pop %v1567
    %v1569 = vadd.f32 %v1568, 1.0
    %v1570 = vrcp.pop %v1569
    %v1571 = vmul.f32 1.0, %v1570
    %v1572 = vadd.f32 %v1555, %v545
    %v1573 = vmul.f32 %v1564, %v1572
    %v1574 = vadd.f32 %v1416, %v1573
    %v1575 = vtanh.pop %v1574
    %v1576 = vsub.f32 1.0, %v1571
    %v1577 = vmul.f32 %v1576, %v1575
    %v1578 = vmul.f32 %v1571, %v1408
    %v1579 = vadd.f32 %v1577, %v1578
    %s1580 = scalar_lea.vmem [#allocation3], 48
    %1581 = vst [vmem:[%s1580] sm:$0xff] %v1579
    %s1582 = smul.u32 7, 3
    %s1583 = smul.addr %s1582, 8
    %s1584 = scalar_lea.vmem [#allocation2], %s1583
    %v1585 = vld [vmem:[%s1584] sm:$0xff]
    %v1586 = vld [vmem:[%s1584 + $0x8] sm:$0xff]
    %v1587 = vld [vmem:[%s1584 + $0x10] sm:$0xff]
    %1588 = vmatprep.subr.mxu0 %v332
    %1589 = vmatpush1.msra.mxu0 %v331
    %1590 = vmatprep.subr.mxu0 %v335
    %1591 = vmatpush1.msra.mxu0 %v334
    %1592 = vmatprep.subr.mxu0 %v338
    %1593 = vmatpush1.msra.mxu0 %v337
    %1594 = vmatprep.subr.mxu0 %v341
    %1595 = vmatpush1.msra.mxu0 %v340
    %1596 = vmatprep.subr.mxu0 %v344
    %1597 = vmatpush1.msra.mxu0 %v343
    %1598 = vmatprep.subr.mxu0 %v347
    %1599 = vmatpush1.msra.mxu0 %v346
    %1600 = vmatprep.subr.mxu0 %v350
    %1601 = vmatpush1.msra.mxu0 %v349
    %1602 = vmatprep.subr.mxu0 %v353
    %1603 = vmatpush1.msra.mxu0 %v352
    %1604 = vmatprep.subr.mxu0 %v356
    %1605 = vmatpush1.msra.mxu0 %v355
    %1606 = vmatprep.subr.mxu0 %v359
    %1607 = vmatpush1.msra.mxu0 %v358
    %1608 = vmatprep.subr.mxu0 %v362
    %1609 = vmatpush1.msra.mxu0 %v361
    %1610 = vmatprep.subr.mxu0 %v365
    %1611 = vmatpush1.msra.mxu0 %v364
    %1612 = vmatprep.subr.mxu0 %v368
    %1613 = vmatpush1.msra.mxu0 %v367
    %1614 = vmatprep.subr.mxu0 %v371
    %1615 = vmatpush1.msra.mxu0 %v370
    %1616 = vmatprep.subr.mxu0 %v374
    %1617 = vmatpush1.msra.mxu0 %v373
    %1618 = vmatprep.subr.mxu0 %v377
    %1619 = vmatpush1.msra.mxu0 %v376
    %1620 = vmatprep.subr.mxu0 0.0
    %1621 = vmatpush1.msra.mxu0 0.0
    %1622 = vmatprep.subr.mxu0 0.0
    %1623 = vmatpush1.msra.mxu0 0.0
    %1624 = vmatprep.subr.mxu0 0.0
    %1625 = vmatpush1.msra.mxu0 0.0
    %1626 = vmatprep.subr.mxu0 0.0
    %1627 = vmatpush1.msra.mxu0 0.0
    %1628 = vmatprep.subr.mxu0 0.0
    %1629 = vmatpush1.msra.mxu0 0.0
    %1630 = vmatprep.subr.mxu0 0.0
    %1631 = vmatpush1.msra.mxu0 0.0
    %1632 = vmatprep.subr.mxu0 0.0
    %1633 = vmatpush1.msra.mxu0 0.0
    %1634 = vmatprep.subr.mxu0 0.0
    %1635 = vmatpush1.msra.mxu0 0.0
    %1636 = vmatprep.subr.mxu0 0.0
    %1637 = vmatpush1.msra.mxu0 0.0
    %1638 = vmatprep.subr.mxu0 0.0
    %1639 = vmatpush1.msra.mxu0 0.0
    %1640 = vmatprep.subr.mxu0 0.0
    %1641 = vmatpush1.msra.mxu0 0.0
    %1642 = vmatprep.subr.mxu0 0.0
    %1643 = vmatpush1.msra.mxu0 0.0
    %1644 = vmatprep.subr.mxu0 0.0
    %1645 = vmatpush1.msra.mxu0 0.0
    %1646 = vmatprep.subr.mxu0 0.0
    %1647 = vmatpush1.msra.mxu0 0.0
    %1648 = vmatprep.subr.mxu0 0.0
    %1649 = vmatpush1.msra.mxu0 0.0
    %1650 = vmatprep.subr.mxu0 0.0
    %1651 = vmatpush1.msra.mxu0 0.0
    %1652 = vmatprep.mubr.f32.mxu0 0.0
    %1653 = vmatmul.mubr.f32.gmra.mrb[0].mxu0 %v1579
    %v1654 = vpop.f32.mrb[0].mxu0
    %v1655 = vadd.f32 0.0, %v1654
    %v1656 = vpop.f32.mrb[0].mxu0
    %v1657 = vadd.f32 0.0, %v1656
    %1658 = vdwg.mxu0
    %1659 = vmatprep.subr.mxu0 0.0
    %1660 = vmatpush1.msra.mxu0 %v333
    %1661 = vmatprep.subr.mxu0 0.0
    %1662 = vmatpush1.msra.mxu0 %v336
    %1663 = vmatprep.subr.mxu0 0.0
    %1664 = vmatpush1.msra.mxu0 %v339
    %1665 = vmatprep.subr.mxu0 0.0
    %1666 = vmatpush1.msra.mxu0 %v342
    %1667 = vmatprep.subr.mxu0 0.0
    %1668 = vmatpush1.msra.mxu0 %v345
    %1669 = vmatprep.subr.mxu0 0.0
    %1670 = vmatpush1.msra.mxu0 %v348
    %1671 = vmatprep.subr.mxu0 0.0
    %1672 = vmatpush1.msra.mxu0 %v351
    %1673 = vmatprep.subr.mxu0 0.0
    %1674 = vmatpush1.msra.mxu0 %v354
    %1675 = vmatprep.subr.mxu0 0.0
    %1676 = vmatpush1.msra.mxu0 %v357
    %1677 = vmatprep.subr.mxu0 0.0
    %1678 = vmatpush1.msra.mxu0 %v360
    %1679 = vmatprep.subr.mxu0 0.0
    %1680 = vmatpush1.msra.mxu0 %v363
    %1681 = vmatprep.subr.mxu0 0.0
    %1682 = vmatpush1.msra.mxu0 %v366
    %1683 = vmatprep.subr.mxu0 0.0
    %1684 = vmatpush1.msra.mxu0 %v369
    %1685 = vmatprep.subr.mxu0 0.0
    %1686 = vmatpush1.msra.mxu0 %v372
    %1687 = vmatprep.subr.mxu0 0.0
    %1688 = vmatpush1.msra.mxu0 %v375
    %1689 = vmatprep.subr.mxu0 0.0
    %1690 = vmatpush1.msra.mxu0 %v378
    %1691 = vmatprep.subr.mxu0 0.0
    %1692 = vmatpush1.msra.mxu0 0.0
    %1693 = vmatprep.subr.mxu0 0.0
    %1694 = vmatpush1.msra.mxu0 0.0
    %1695 = vmatprep.subr.mxu0 0.0
    %1696 = vmatpush1.msra.mxu0 0.0
    %1697 = vmatprep.subr.mxu0 0.0
    %1698 = vmatpush1.msra.mxu0 0.0
    %1699 = vmatprep.subr.mxu0 0.0
    %1700 = vmatpush1.msra.mxu0 0.0
    %1701 = vmatprep.subr.mxu0 0.0
    %1702 = vmatpush1.msra.mxu0 0.0
    %1703 = vmatprep.subr.mxu0 0.0
    %1704 = vmatpush1.msra.mxu0 0.0
    %1705 = vmatprep.subr.mxu0 0.0
    %1706 = vmatpush1.msra.mxu0 0.0
    %1707 = vmatprep.subr.mxu0 0.0
    %1708 = vmatpush1.msra.mxu0 0.0
    %1709 = vmatprep.subr.mxu0 0.0
    %1710 = vmatpush1.msra.mxu0 0.0
    %1711 = vmatprep.subr.mxu0 0.0
    %1712 = vmatpush1.msra.mxu0 0.0
    %1713 = vmatprep.subr.mxu0 0.0
    %1714 = vmatpush1.msra.mxu0 0.0
    %1715 = vmatprep.subr.mxu0 0.0
    %1716 = vmatpush1.msra.mxu0 0.0
    %1717 = vmatprep.subr.mxu0 0.0
    %1718 = vmatpush1.msra.mxu0 0.0
    %1719 = vmatprep.subr.mxu0 0.0
    %1720 = vmatpush1.msra.mxu0 0.0
    %1721 = vmatprep.subr.mxu0 0.0
    %1722 = vmatpush1.msra.mxu0 0.0
    %1723 = vmatprep.mubr.f32.mxu0 0.0
    %1724 = vmatmul.mubr.f32.gmra.mrb[0].mxu0 %v1579
    %v1725 = vpop.f32.mrb[0].mxu0
    %v1726 = vadd.f32 0.0, %v1725
    %v1727 = vpop.f32.mrb[0].mxu0
    %1728 = vdwg.mxu0
    %v1729 = vadd.f32 %v1585, %v1655
    %v1730 = vxor.u32 %v1729, 2147483648
    %v1731 = vmul.f32 %v1730, 1.442695
    %v1732 = vpow.pop %v1731
    %v1733 = vadd.f32 %v1732, 1.0
    %v1734 = vrcp.pop %v1733
    %v1735 = vmul.f32 1.0, %v1734
    %v1736 = vadd.f32 %v1586, %v1657
    %v1737 = vxor.u32 %v1736, 2147483648
    %v1738 = vmul.f32 %v1737, 1.442695
    %v1739 = vpow.pop %v1738
    %v1740 = vadd.f32 %v1739, 1.0
    %v1741 = vrcp.pop %v1740
    %v1742 = vmul.f32 1.0, %v1741
    %v1743 = vadd.f32 %v1726, %v545
    %v1744 = vmul.f32 %v1735, %v1743
    %v1745 = vadd.f32 %v1587, %v1744
    %v1746 = vtanh.pop %v1745
    %v1747 = vsub.f32 1.0, %v1742
    %v1748 = vmul.f32 %v1747, %v1746
    %v1749 = vmul.f32 %v1742, %v1579
    %v1750 = vadd.f32 %v1748, %v1749
    %s1751 = scalar_lea.vmem [#allocation3], 56
    %1752 = vst [vmem:[%s1751] sm:$0xff] %v1750
    %v1753 = vld [vmem:[#allocation3] sm:$0xff]
    %v1754 = vld [vmem:[#allocation3 + $0x8] sm:$0xff]
    %v1755 = vld [vmem:[#allocation3 + $0x10] sm:$0xff]
    %v1756 = vld [vmem:[#allocation3 + $0x18] sm:$0xff]
    %v1757 = vld [vmem:[#allocation3 + $0x20] sm:$0xff]
    %v1758 = vld [vmem:[#allocation3 + $0x28] sm:$0xff]
    %v1759 = vld [vmem:[#allocation3 + $0x30] sm:$0xff]
    %v1760 = vld [vmem:[#allocation3 + $0x38] sm:$0xff]
    %v1761 = vld [vmem:[%s5] sm:$0xff]
    %v1762 = vld [vmem:[%s5 + $0x8] sm:$0xff]
    %v1763 = vld [vmem:[%s5 + $0x10] sm:$0xff]
    %v1764 = vld [vmem:[%s5 + $0x18] sm:$0xff]
    %v1765 = vld [vmem:[%s5 + $0x20] sm:$0xff]
    %v1766 = vld [vmem:[%s5 + $0x28] sm:$0xff]
    %v1767 = vld [vmem:[%s5 + $0x30] sm:$0xff]
    %v1768 = vld [vmem:[%s5 + $0x38] sm:$0xff]
    %v1769 = vld [vmem:[%s5 + $0x40] sm:$0xff]
    %v1770 = vld [vmem:[%s5 + $0x48] sm:$0xff]
    %v1771 = vld [vmem:[%s5 + $0x50] sm:$0xff]
    %v1772 = vld [vmem:[%s5 + $0x58] sm:$0xff]
    %v1773 = vld [vmem:[%s5 + $0x60] sm:$0xff]
    %v1774 = vld [vmem:[%s5 + $0x68] sm:$0xff]
    %v1775 = vld [vmem:[%s5 + $0x70] sm:$0xff]
    %v1776 = vld [vmem:[%s5 + $0x78] sm:$0xff]
    %v1777 = vld [vmem:[%s5 + $0x80] sm:$0xff]
    %v1778 = vld [vmem:[%s5 + $0x88] sm:$0xff]
    %v1779 = vld [vmem:[%s5 + $0x90] sm:$0xff]
    %v1780 = vld [vmem:[%s5 + $0x98] sm:$0xff]
    %v1781 = vld [vmem:[%s5 + $0xa0] sm:$0xff]
    %v1782 = vld [vmem:[%s5 + $0xa8] sm:$0xff]
    %v1783 = vld [vmem:[%s5 + $0xb0] sm:$0xff]
    %v1784 = vld [vmem:[%s5 + $0xb8] sm:$0xff]
    %v1785 = vld [vmem:[%s5 + $0xc0] sm:$0xff]
    %v1786 = vld [vmem:[%s5 + $0xc8] sm:$0xff]
    %v1787 = vld [vmem:[%s5 + $0xd0] sm:$0xff]
    %v1788 = vld [vmem:[%s5 + $0xd8] sm:$0xff]
    %v1789 = vld [vmem:[%s5 + $0xe0] sm:$0xff]
    %v1790 = vld [vmem:[%s5 + $0xe8] sm:$0xff]
    %v1791 = vld [vmem:[%s5 + $0xf0] sm:$0xff]
    %v1792 = vld [vmem:[%s5 + $0xf8] sm:$0xff]
    %v1793 = vld [vmem:[%s5 + $0x100] sm:$0xff]
    %v1794 = vld [vmem:[%s5 + $0x108] sm:$0xff]
    %v1795 = vld [vmem:[%s5 + $0x110] sm:$0xff]
    %v1796 = vld [vmem:[%s5 + $0x118] sm:$0xff]
    %v1797 = vld [vmem:[%s5 + $0x120] sm:$0xff]
    %v1798 = vld [vmem:[%s5 + $0x128] sm:$0xff]
    %v1799 = vld [vmem:[%s5 + $0x130] sm:$0xff]
    %v1800 = vld [vmem:[%s5 + $0x138] sm:$0xff]
    %v1801 = vld [vmem:[%s5 + $0x140] sm:$0xff]
    %v1802 = vld [vmem:[%s5 + $0x148] sm:$0xff]
    %v1803 = vld [vmem:[%s5 + $0x150] sm:$0xff]
    %v1804 = vld [vmem:[%s5 + $0x158] sm:$0xff]
    %v1805 = vld [vmem:[%s5 + $0x160] sm:$0xff]
    %v1806 = vld [vmem:[%s5 + $0x168] sm:$0xff]
    %v1807 = vld [vmem:[%s5 + $0x170] sm:$0xff]
    %v1808 = vld [vmem:[%s5 + $0x178] sm:$0xff]
    %v1809 = vld [vmem:[%s7] sm:$0x7]
    %v1811 = vlaneseq
    %v1812 = vshrl.u32 %v1811, 7
    %v1813 = vsub.s32 0, %v1812
    %v1814 = vrot.slane %v1809, %v1813
    %v1815 = vlaneseq
    %v1816 = vshrl.u32 %v1815, 7
    %v1817 = vsub.s32 1, %v1816
    %v1818 = vrot.slane %v1809, %v1817
    %v1819 = vlaneseq
    %v1820 = vshrl.u32 %v1819, 7
    %v1821 = vsub.s32 2, %v1820
    %v1822 = vrot.slane %v1809, %v1821
    %1826 = vmatprep.subr.mxu0 %v1762
    %1827 = vmatpush1.msra.mxu0 %v1761
    %1828 = vmatprep.subr.mxu0 %v1765
    %1829 = vmatpush1.msra.mxu0 %v1764
    %1830 = vmatprep.subr.mxu0 %v1768
    %1831 = vmatpush1.msra.mxu0 %v1767
    %1832 = vmatprep.subr.mxu0 %v1771
    %1833 = vmatpush1.msra.mxu0 %v1770
    %1834 = vmatprep.subr.mxu0 %v1774
    %1835 = vmatpush1.msra.mxu0 %v1773
    %1836 = vmatprep.subr.mxu0 %v1777
    %1837 = vmatpush1.msra.mxu0 %v1776
    %1838 = vmatprep.subr.mxu0 %v1780
    %1839 = vmatpush1.msra.mxu0 %v1779
    %1840 = vmatprep.subr.mxu0 %v1783
    %1841 = vmatpush1.msra.mxu0 %v1782
    %1842 = vmatprep.subr.mxu0 %v1786
    %1843 = vmatpush1.msra.mxu0 %v1785
    %1844 = vmatprep.subr.mxu0 %v1789
    %1845 = vmatpush1.msra.mxu0 %v1788
    %1846 = vmatprep.subr.mxu0 %v1792
    %1847 = vmatpush1.msra.mxu0 %v1791
    %1848 = vmatprep.subr.mxu0 %v1795
    %1849 = vmatpush1.msra.mxu0 %v1794
    %1850 = vmatprep.subr.mxu0 %v1798
    %1851 = vmatpush1.msra.mxu0 %v1797
    %1852 = vmatprep.subr.mxu0 %v1801
    %1853 = vmatpush1.msra.mxu0 %v1800
    %1854 = vmatprep.subr.mxu0 %v1804
    %1855 = vmatpush1.msra.mxu0 %v1803
    %1856 = vmatprep.subr.mxu0 %v1807
    %1857 = vmatpush1.msra.mxu0 %v1806
    %1858 = vmatprep.subr.mxu0 0.0
    %1859 = vmatpush1.msra.mxu0 0.0
    %1860 = vmatprep.subr.mxu0 0.0
    %1861 = vmatpush1.msra.mxu0 0.0
    %1862 = vmatprep.subr.mxu0 0.0
    %1863 = vmatpush1.msra.mxu0 0.0
    %1864 = vmatprep.subr.mxu0 0.0
    %1865 = vmatpush1.msra.mxu0 0.0
    %1866 = vmatprep.subr.mxu0 0.0
    %1867 = vmatpush1.msra.mxu0 0.0
    %1868 = vmatprep.subr.mxu0 0.0
    %1869 = vmatpush1.msra.mxu0 0.0
    %1870 = vmatprep.subr.mxu0 0.0
    %1871 = vmatpush1.msra.mxu0 0.0
    %1872 = vmatprep.subr.mxu0 0.0
    %1873 = vmatpush1.msra.mxu0 0.0
    %1874 = vmatprep.subr.mxu0 0.0
    %1875 = vmatpush1.msra.mxu0 0.0
    %1876 = vmatprep.subr.mxu0 0.0
    %1877 = vmatpush1.msra.mxu0 0.0
    %1878 = vmatprep.subr.mxu0 0.0
    %1879 = vmatpush1.msra.mxu0 0.0
    %1880 = vmatprep.subr.mxu0 0.0
    %1881 = vmatpush1.msra.mxu0 0.0
    %1882 = vmatprep.subr.mxu0 0.0
    %1883 = vmatpush1.msra.mxu0 0.0
    %1884 = vmatprep.subr.mxu0 0.0
    %1885 = vmatpush1.msra.mxu0 0.0
    %1886 = vmatprep.subr.mxu0 0.0
    %1887 = vmatpush1.msra.mxu0 0.0
    %1888 = vmatprep.subr.mxu0 0.0
    %1889 = vmatpush1.msra.mxu0 0.0
    %1890 = vmatprep.mubr.f32.mxu0 0.0
    %1891 = vmatmul.mubr.f32.gmra.mrb[0].mxu0 %v1753
    %v1892 = vpop.f32.mrb[0].mxu0
    %v1893 = vadd.f32 %v1814, %v1892
    %v1894 = vpop.f32.mrb[0].mxu0
    %v1895 = vadd.f32 %v1818, %v1894
    %1896 = vmatprep.mubr.f32.mxu0 0.0
    %1897 = vmatmul.mubr.f32.gmra.mrb[0].mxu0 %v1754
    %v1898 = vpop.f32.mrb[0].mxu0
    %v1899 = vadd.f32 %v1814, %v1898
    %v1900 = vpop.f32.mrb[0].mxu0
    %v1901 = vadd.f32 %v1818, %v1900
    %1902 = vmatprep.mubr.f32.mxu0 0.0
    %1903 = vmatmul.mubr.f32.gmra.mrb[0].mxu0 %v1755
    %v1904 = vpop.f32.mrb[0].mxu0
    %v1905 = vadd.f32 %v1814, %v1904
    %v1906 = vpop.f32.mrb[0].mxu0
    %v1907 = vadd.f32 %v1818, %v1906
    %1908 = vmatprep.mubr.f32.mxu0 0.0
    %1909 = vmatmul.mubr.f32.gmra.mrb[0].mxu0 %v1756
    %v1910 = vpop.f32.mrb[0].mxu0
    %v1911 = vadd.f32 %v1814, %v1910
    %v1912 = vpop.f32.mrb[0].mxu0
    %v1913 = vadd.f32 %v1818, %v1912
    %1914 = vmatprep.mubr.f32.mxu0 0.0
    %1915 = vmatmul.mubr.f32.gmra.mrb[0].mxu0 %v1757
    %v1916 = vpop.f32.mrb[0].mxu0
    %v1917 = vadd.f32 %v1814, %v1916
    %v1918 = vpop.f32.mrb[0].mxu0
    %v1919 = vadd.f32 %v1818, %v1918
    %1920 = vmatprep.mubr.f32.mxu0 0.0
    %1921 = vmatmul.mubr.f32.gmra.mrb[0].mxu0 %v1758
    %v1922 = vpop.f32.mrb[0].mxu0
    %v1923 = vadd.f32 %v1814, %v1922
    %v1924 = vpop.f32.mrb[0].mxu0
    %v1925 = vadd.f32 %v1818, %v1924
    %1926 = vmatprep.mubr.f32.mxu0 0.0
    %1927 = vmatmul.mubr.f32.gmra.mrb[0].mxu0 %v1759
    %v1928 = vpop.f32.mrb[0].mxu0
    %v1929 = vadd.f32 %v1814, %v1928
    %v1930 = vpop.f32.mrb[0].mxu0
    %v1931 = vadd.f32 %v1818, %v1930
    %1932 = vmatprep.mubr.f32.mxu0 0.0
    %1933 = vmatmul.mubr.f32.gmra.mrb[0].mxu0 %v1760
    %v1934 = vpop.f32.mrb[0].mxu0
    %v1935 = vadd.f32 %v1814, %v1934
    %v1936 = vpop.f32.mrb[0].mxu0
    %v1937 = vadd.f32 %v1818, %v1936
    %1938 = vdwg.mxu0
    %1939 = vmatprep.subr.mxu0 0.0
    %1940 = vmatpush1.msra.mxu0 %v1763
    %1941 = vmatprep.subr.mxu0 0.0
    %1942 = vmatpush1.msra.mxu0 %v1766
    %1943 = vmatprep.subr.mxu0 0.0
    %1944 = vmatpush1.msra.mxu0 %v1769
    %1945 = vmatprep.subr.mxu0 0.0
    %1946 = vmatpush1.msra.mxu0 %v1772
    %1947 = vmatprep.subr.mxu0 0.0
    %1948 = vmatpush1.msra.mxu0 %v1775
    %1949 = vmatprep.subr.mxu0 0.0
    %1950 = vmatpush1.msra.mxu0 %v1778
    %1951 = vmatprep.subr.mxu0 0.0
    %1952 = vmatpush1.msra.mxu0 %v1781
    %1953 = vmatprep.subr.mxu0 0.0
    %1954 = vmatpush1.msra.mxu0 %v1784
    %1955 = vmatprep.subr.mxu0 0.0
    %1956 = vmatpush1.msra.mxu0 %v1787
    %1957 = vmatprep.subr.mxu0 0.0
    %1958 = vmatpush1.msra.mxu0 %v1790
    %1959 = vmatprep.subr.mxu0 0.0
    %1960 = vmatpush1.msra.mxu0 %v1793
    %1961 = vmatprep.subr.mxu0 0.0
    %1962 = vmatpush1.msra.mxu0 %v1796
    %1963 = vmatprep.subr.mxu0 0.0
    %1964 = vmatpush1.msra.mxu0 %v1799
    %1965 = vmatprep.subr.mxu0 0.0
    %1966 = vmatpush1.msra.mxu0 %v1802
    %1967 = vmatprep.subr.mxu0 0.0
    %1968 = vmatpush1.msra.mxu0 %v1805
    %1969 = vmatprep.subr.mxu0 0.0
    %1970 = vmatpush1.msra.mxu0 %v1808
    %1971 = vmatprep.subr.mxu0 0.0
    %1972 = vmatpush1.msra.mxu0 0.0
    %1973 = vmatprep.subr.mxu0 0.0
    %1974 = vmatpush1.msra.mxu0 0.0
    %1975 = vmatprep.subr.mxu0 0.0
    %1976 = vmatpush1.msra.mxu0 0.0
    %1977 = vmatprep.subr.mxu0 0.0
    %1978 = vmatpush1.msra.mxu0 0.0
    %1979 = vmatprep.subr.mxu0 0.0
    %1980 = vmatpush1.msra.mxu0 0.0
    %1981 = vmatprep.subr.mxu0 0.0
    %1982 = vmatpush1.msra.mxu0 0.0
    %1983 = vmatprep.subr.mxu0 0.0
    %1984 = vmatpush1.msra.mxu0 0.0
    %1985 = vmatprep.subr.mxu0 0.0
    %1986 = vmatpush1.msra.mxu0 0.0
    %1987 = vmatprep.subr.mxu0 0.0
    %1988 = vmatpush1.msra.mxu0 0.0
    %1989 = vmatprep.subr.mxu0 0.0
    %1990 = vmatpush1.msra.mxu0 0.0
    %1991 = vmatprep.subr.mxu0 0.0
    %1992 = vmatpush1.msra.mxu0 0.0
    %1993 = vmatprep.subr.mxu0 0.0
    %1994 = vmatpush1.msra.mxu0 0.0
    %1995 = vmatprep.subr.mxu0 0.0
    %1996 = vmatpush1.msra.mxu0 0.0
    %1997 = vmatprep.subr.mxu0 0.0
    %1998 = vmatpush1.msra.mxu0 0.0
    %1999 = vmatprep.subr.mxu0 0.0
    %2000 = vmatpush1.msra.mxu0 0.0
    %2001 = vmatprep.subr.mxu0 0.0
    %2002 = vmatpush1.msra.mxu0 0.0
    %2003 = vmatprep.mubr.f32.mxu0 0.0
    %2004 = vmatmul.mubr.f32.gmra.mrb[0].mxu0 %v1753
    %v2005 = vpop.f32.mrb[0].mxu0
    %v2006 = vadd.f32 %v1822, %v2005
    %v2007 = vpop.f32.mrb[0].mxu0
    %2008 = vmatprep.mubr.f32.mxu0 0.0
    %2009 = vmatmul.mubr.f32.gmra.mrb[0].mxu0 %v1754
    %v2010 = vpop.f32.mrb[0].mxu0
    %v2011 = vadd.f32 %v1822, %v2010
    %v2012 = vpop.f32.mrb[0].mxu0
    %2013 = vmatprep.mubr.f32.mxu0 0.0
    %2014 = vmatmul.mubr.f32.gmra.mrb[0].mxu0 %v1755
    %v2015 = vpop.f32.mrb[0].mxu0
    %v2016 = vadd.f32 %v1822, %v2015
    %v2017 = vpop.f32.mrb[0].mxu0
    %2018 = vmatprep.mubr.f32.mxu0 0.0
    %2019 = vmatmul.mubr.f32.gmra.mrb[0].mxu0 %v1756
    %v2020 = vpop.f32.mrb[0].mxu0
    %v2021 = vadd.f32 %v1822, %v2020
    %v2022 = vpop.f32.mrb[0].mxu0
    %2023 = vmatprep.mubr.f32.mxu0 0.0
    %2024 = vmatmul.mubr.f32.gmra.mrb[0].mxu0 %v1757
    %v2025 = vpop.f32.mrb[0].mxu0
    %v2026 = vadd.f32 %v1822, %v2025
    %v2027 = vpop.f32.mrb[0].mxu0
    %2028 = vmatprep.mubr.f32.mxu0 0.0
    %2029 = vmatmul.mubr.f32.gmra.mrb[0].mxu0 %v1758
    %v2030 = vpop.f32.mrb[0].mxu0
    %v2031 = vadd.f32 %v1822, %v2030
    %v2032 = vpop.f32.mrb[0].mxu0
    %2033 = vmatprep.mubr.f32.mxu0 0.0
    %2034 = vmatmul.mubr.f32.gmra.mrb[0].mxu0 %v1759
    %v2035 = vpop.f32.mrb[0].mxu0
    %v2036 = vadd.f32 %v1822, %v2035
    %v2037 = vpop.f32.mrb[0].mxu0
    %2038 = vmatprep.mubr.f32.mxu0 0.0
    %2039 = vmatmul.mubr.f32.gmra.mrb[0].mxu0 %v1760
    %v2040 = vpop.f32.mrb[0].mxu0
    %v2041 = vadd.f32 %v1822, %v2040
    %v2042 = vpop.f32.mrb[0].mxu0
    %2043 = vdwg.mxu0
    %2044 = vst [vmem:[#allocation4] sm:$0xff] %v1893
    %2045 = vst [vmem:[#allocation4 + $0x8] sm:$0xff] %v1895
    %2046 = vst [vmem:[#allocation4 + $0x10] sm:$0xff] %v2006
    %2047 = vst [vmem:[#allocation4 + $0x18] sm:$0xff] %v1899
    %2048 = vst [vmem:[#allocation4 + $0x20] sm:$0xff] %v1901
    %2049 = vst [vmem:[#allocation4 + $0x28] sm:$0xff] %v2011
    %2050 = vst [vmem:[#allocation4 + $0x30] sm:$0xff] %v1905
    %2051 = vst [vmem:[#allocation4 + $0x38] sm:$0xff] %v1907
    %2052 = vst [vmem:[#allocation4 + $0x40] sm:$0xff] %v2016
    %2053 = vst [vmem:[#allocation4 + $0x48] sm:$0xff] %v1911
    %2054 = vst [vmem:[#allocation4 + $0x50] sm:$0xff] %v1913
    %2055 = vst [vmem:[#allocation4 + $0x58] sm:$0xff] %v2021
    %2056 = vst [vmem:[#allocation4 + $0x60] sm:$0xff] %v1917
    %2057 = vst [vmem:[#allocation4 + $0x68] sm:$0xff] %v1919
    %2058 = vst [vmem:[#allocation4 + $0x70] sm:$0xff] %v2026
    %2059 = vst [vmem:[#allocation4 + $0x78] sm:$0xff] %v1923
    %2060 = vst [vmem:[#allocation4 + $0x80] sm:$0xff] %v1925
    %2061 = vst [vmem:[#allocation4 + $0x88] sm:$0xff] %v2031
    %2062 = vst [vmem:[#allocation4 + $0x90] sm:$0xff] %v1929
    %2063 = vst [vmem:[#allocation4 + $0x98] sm:$0xff] %v1931
    %2064 = vst [vmem:[#allocation4 + $0xa0] sm:$0xff] %v2036
    %2065 = vst [vmem:[#allocation4 + $0xa8] sm:$0xff] %v1935
    %2066 = vst [vmem:[#allocation4 + $0xb0] sm:$0xff] %v1937
    %2067 = vst [vmem:[#allocation4 + $0xb8] sm:$0xff] %v2041
    %v2068 = vld [vmem:[%s6] sm:$0xff]
    %v2069 = vld [vmem:[%s6 + $0x8] sm:$0xff]
    %v2070 = vld [vmem:[%s6 + $0x10] sm:$0xff]
    %v2071 = vld [vmem:[%s6 + $0x18] sm:$0xff]
    %v2072 = vld [vmem:[%s6 + $0x20] sm:$0xff]
    %v2073 = vld [vmem:[%s6 + $0x28] sm:$0xff]
    %v2074 = vld [vmem:[%s6 + $0x30] sm:$0xff]
    %v2075 = vld [vmem:[%s6 + $0x38] sm:$0xff]
    %v2076 = vld [vmem:[%s6 + $0x40] sm:$0xff]
    %v2077 = vld [vmem:[%s6 + $0x48] sm:$0xff]
    %v2078 = vld [vmem:[%s6 + $0x50] sm:$0xff]
    %v2079 = vld [vmem:[%s6 + $0x58] sm:$0xff]
    %v2080 = vld [vmem:[%s6 + $0x60] sm:$0xff]
    %v2081 = vld [vmem:[%s6 + $0x68] sm:$0xff]
    %v2082 = vld [vmem:[%s6 + $0x70] sm:$0xff]
    %v2083 = vld [vmem:[%s6 + $0x78] sm:$0xff]
    %v2084 = vld [vmem:[%s6 + $0x80] sm:$0xff]
    %v2085 = vld [vmem:[%s6 + $0x88] sm:$0xff]
    %v2086 = vld [vmem:[%s6 + $0x90] sm:$0xff]
    %v2087 = vld [vmem:[%s6 + $0x98] sm:$0xff]
    %v2088 = vld [vmem:[%s6 + $0xa0] sm:$0xff]
    %v2089 = vld [vmem:[%s6 + $0xa8] sm:$0xff]
    %v2090 = vld [vmem:[%s6 + $0xb0] sm:$0xff]
    %v2091 = vld [vmem:[%s6 + $0xb8] sm:$0xff]
    %v2092 = vld [vmem:[%s6 + $0xc0] sm:$0xff]
    %v2093 = vld [vmem:[%s6 + $0xc8] sm:$0xff]
    %v2094 = vld [vmem:[%s6 + $0xd0] sm:$0xff]
    %v2095 = vld [vmem:[%s6 + $0xd8] sm:$0xff]
    %v2096 = vld [vmem:[%s6 + $0xe0] sm:$0xff]
    %v2097 = vld [vmem:[%s6 + $0xe8] sm:$0xff]
    %v2098 = vld [vmem:[%s6 + $0xf0] sm:$0xff]
    %v2099 = vld [vmem:[%s6 + $0xf8] sm:$0xff]
    %v2100 = vld [vmem:[%s6 + $0x100] sm:$0xff]
    %v2101 = vld [vmem:[%s6 + $0x108] sm:$0xff]
    %v2102 = vld [vmem:[%s6 + $0x110] sm:$0xff]
    %v2103 = vld [vmem:[%s6 + $0x118] sm:$0xff]
    %v2104 = vld [vmem:[%s6 + $0x120] sm:$0xff]
    %v2105 = vld [vmem:[%s6 + $0x128] sm:$0xff]
    %v2106 = vld [vmem:[%s6 + $0x130] sm:$0xff]
    %v2107 = vld [vmem:[%s6 + $0x138] sm:$0xff]
    %v2108 = vld [vmem:[%s6 + $0x140] sm:$0xff]
    %v2109 = vld [vmem:[%s6 + $0x148] sm:$0xff]
    %v2110 = vld [vmem:[%s6 + $0x150] sm:$0xff]
    %v2111 = vld [vmem:[%s6 + $0x158] sm:$0xff]
    %v2112 = vld [vmem:[%s6 + $0x160] sm:$0xff]
    %v2113 = vld [vmem:[%s6 + $0x168] sm:$0xff]
    %v2114 = vld [vmem:[%s6 + $0x170] sm:$0xff]
    %v2115 = vld [vmem:[%s6 + $0x178] sm:$0xff]
    %v2116 = vld [vmem:[%s8] sm:$0x1]
    %s2117 = smul.addr %s380, 8
    %s2118 = scalar_lea.vmem [#allocation4], %s2117
    %v2119 = vld [vmem:[%s2118] sm:$0xff]
    %v2120 = vld [vmem:[%s2118 + $0x8] sm:$0xff]
    %v2121 = vld [vmem:[%s2118 + $0x10] sm:$0xff]
    %2122 = vmatprep.subr.mxu0 %v2069
    %2123 = vmatpush1.msra.mxu0 %v2068
    %2124 = vmatprep.subr.mxu0 %v2072
    %2125 = vmatpush1.msra.mxu0 %v2071
    %2126 = vmatprep.subr.mxu0 %v2075
    %2127 = vmatpush1.msra.mxu0 %v2074
    %2128 = vmatprep.subr.mxu0 %v2078
    %2129 = vmatpush1.msra.mxu0 %v2077
    %2130 = vmatprep.subr.mxu0 %v2081
    %2131 = vmatpush1.msra.mxu0 %v2080
    %2132 = vmatprep.subr.mxu0 %v2084
    %2133 = vmatpush1.msra.mxu0 %v2083
    %2134 = vmatprep.subr.mxu0 %v2087
    %2135 = vmatpush1.msra.mxu0 %v2086
    %2136 = vmatprep.subr.mxu0 %v2090
    %2137 = vmatpush1.msra.mxu0 %v2089
    %2138 = vmatprep.subr.mxu0 %v2093
    %2139 = vmatpush1.msra.mxu0 %v2092
    %2140 = vmatprep.subr.mxu0 %v2096
    %2141 = vmatpush1.msra.mxu0 %v2095
    %2142 = vmatprep.subr.mxu0 %v2099
    %2143 = vmatpush1.msra.mxu0 %v2098
    %2144 = vmatprep.subr.mxu0 %v2102
    %2145 = vmatpush1.msra.mxu0 %v2101
    %2146 = vmatprep.subr.mxu0 %v2105
    %2147 = vmatpush1.msra.mxu0 %v2104
    %2148 = vmatprep.subr.mxu0 %v2108
    %2149 = vmatpush1.msra.mxu0 %v2107
    %2150 = vmatprep.subr.mxu0 %v2111
    %2151 = vmatpush1.msra.mxu0 %v2110
    %2152 = vmatprep.subr.mxu0 %v2114
    %2153 = vmatpush1.msra.mxu0 %v2113
    %2154 = vmatprep.subr.mxu0 0.0
    %2155 = vmatpush1.msra.mxu0 0.0
    %2156 = vmatprep.subr.mxu0 0.0
    %2157 = vmatpush1.msra.mxu0 0.0
    %2158 = vmatprep.subr.mxu0 0.0
    %2159 = vmatpush1.msra.mxu0 0.0
    %2160 = vmatprep.subr.mxu0 0.0
    %2161 = vmatpush1.msra.mxu0 0.0
    %2162 = vmatprep.subr.mxu0 0.0
    %2163 = vmatpush1.msra.mxu0 0.0
    %2164 = vmatprep.subr.mxu0 0.0
    %2165 = vmatpush1.msra.mxu0 0.0
    %2166 = vmatprep.subr.mxu0 0.0
    %2167 = vmatpush1.msra.mxu0 0.0
    %2168 = vmatprep.subr.mxu0 0.0
    %2169 = vmatpush1.msra.mxu0 0.0
    %2170 = vmatprep.subr.mxu0 0.0
    %2171 = vmatpush1.msra.mxu0 0.0
    %2172 = vmatprep.subr.mxu0 0.0
    %2173 = vmatpush1.msra.mxu0 0.0
    %2174 = vmatprep.subr.mxu0 0.0
    %2175 = vmatpush1.msra.mxu0 0.0
    %2176 = vmatprep.subr.mxu0 0.0
    %2177 = vmatpush1.msra.mxu0 0.0
    %2178 = vmatprep.subr.mxu0 0.0
    %2179 = vmatpush1.msra.mxu0 0.0
    %2180 = vmatprep.subr.mxu0 0.0
    %2181 = vmatpush1.msra.mxu0 0.0
    %2182 = vmatprep.subr.mxu0 0.0
    %2183 = vmatpush1.msra.mxu0 0.0
    %2184 = vmatprep.subr.mxu0 0.0
    %2185 = vmatpush1.msra.mxu0 0.0
    %2186 = vmatprep.mubr.f32.mxu0 0.0
    %2187 = vmatmul.mubr.f32.gmra.mrb[0].mxu0 0.0
    %v2188 = vpop.f32.mrb[0].mxu0
    %v2189 = vadd.f32 0.0, %v2188
    %v2190 = vpop.f32.mrb[0].mxu0
    %v2191 = vadd.f32 0.0, %v2190
    %2192 = vdwg.mxu0
    %2193 = vmatprep.subr.mxu0 0.0
    %2194 = vmatpush1.msra.mxu0 %v2070
    %2195 = vmatprep.subr.mxu0 0.0
    %2196 = vmatpush1.msra.mxu0 %v2073
    %2197 = vmatprep.subr.mxu0 0.0
    %2198 = vmatpush1.msra.mxu0 %v2076
    %2199 = vmatprep.subr.mxu0 0.0
    %2200 = vmatpush1.msra.mxu0 %v2079
    %2201 = vmatprep.subr.mxu0 0.0
    %2202 = vmatpush1.msra.mxu0 %v2082
    %2203 = vmatprep.subr.mxu0 0.0
    %2204 = vmatpush1.msra.mxu0 %v2085
    %2205 = vmatprep.subr.mxu0 0.0
    %2206 = vmatpush1.msra.mxu0 %v2088
    %2207 = vmatprep.subr.mxu0 0.0
    %2208 = vmatpush1.msra.mxu0 %v2091
    %2209 = vmatprep.subr.mxu0 0.0
    %2210 = vmatpush1.msra.mxu0 %v2094
    %2211 = vmatprep.subr.mxu0 0.0
    %2212 = vmatpush1.msra.mxu0 %v2097
    %2213 = vmatprep.subr.mxu0 0.0
    %2214 = vmatpush1.msra.mxu0 %v2100
    %2215 = vmatprep.subr.mxu0 0.0
    %2216 = vmatpush1.msra.mxu0 %v2103
    %2217 = vmatprep.subr.mxu0 0.0
    %2218 = vmatpush1.msra.mxu0 %v2106
    %2219 = vmatprep.subr.mxu0 0.0
    %2220 = vmatpush1.msra.mxu0 %v2109
    %2221 = vmatprep.subr.mxu0 0.0
    %2222 = vmatpush1.msra.mxu0 %v2112
    %2223 = vmatprep.subr.mxu0 0.0
    %2224 = vmatpush1.msra.mxu0 %v2115
    %2225 = vmatprep.subr.mxu0 0.0
    %2226 = vmatpush1.msra.mxu0 0.0
    %2227 = vmatprep.subr.mxu0 0.0
    %2228 = vmatpush1.msra.mxu0 0.0
    %2229 = vmatprep.subr.mxu0 0.0
    %2230 = vmatpush1.msra.mxu0 0.0
    %2231 = vmatprep.subr.mxu0 0.0
    %2232 = vmatpush1.msra.mxu0 0.0
    %2233 = vmatprep.subr.mxu0 0.0
    %2234 = vmatpush1.msra.mxu0 0.0
    %2235 = vmatprep.subr.mxu0 0.0
    %2236 = vmatpush1.msra.mxu0 0.0
    %2237 = vmatprep.subr.mxu0 0.0
    %2238 = vmatpush1.msra.mxu0 0.0
    %2239 = vmatprep.subr.mxu0 0.0
    %2240 = vmatpush1.msra.mxu0 0.0
    %2241 = vmatprep.subr.mxu0 0.0
    %2242 = vmatpush1.msra.mxu0 0.0
    %2243 = vmatprep.subr.mxu0 0.0
    %2244 = vmatpush1.msra.mxu0 0.0
    %2245 = vmatprep.subr.mxu0 0.0
    %2246 = vmatpush1.msra.mxu0 0.0
    %2247 = vmatprep.subr.mxu0 0.0
    %2248 = vmatpush1.msra.mxu0 0.0
    %2249 = vmatprep.subr.mxu0 0.0
    %2250 = vmatpush1.msra.mxu0 0.0
    %2251 = vmatprep.subr.mxu0 0.0
    %2252 = vmatpush1.msra.mxu0 0.0
    %2253 = vmatprep.subr.mxu0 0.0
    %2254 = vmatpush1.msra.mxu0 0.0
    %2255 = vmatprep.subr.mxu0 0.0
    %2256 = vmatpush1.msra.mxu0 0.0
    %2257 = vmatprep.mubr.f32.mxu0 0.0
    %2258 = vmatmul.mubr.f32.gmra.mrb[0].mxu0 0.0
    %v2259 = vpop.f32.mrb[0].mxu0
    %v2260 = vadd.f32 0.0, %v2259
    %v2261 = vpop.f32.mrb[0].mxu0
    %2262 = vdwg.mxu0
    %v2263 = vadd.f32 %v2119, %v2189
    %v2264 = vxor.u32 %v2263, 2147483648
    %v2265 = vmul.f32 %v2264, 1.442695
    %v2266 = vpow.pop %v2265
    %v2267 = vadd.f32 %v2266, 1.0
    %v2268 = vrcp.pop %v2267
    %v2269 = vmul.f32 1.0, %v2268
    %v2270 = vadd.f32 %v2120, %v2191
    %v2271 = vxor.u32 %v2270, 2147483648
    %v2272 = vmul.f32 %v2271, 1.442695
    %v2273 = vpow.pop %v2272
    %v2274 = vadd.f32 %v2273, 1.0
    %v2275 = vrcp.pop %v2274
    %v2276 = vmul.f32 1.0, %v2275
    %v2278 = vlaneseq
    %v2279 = vshrl.u32 %v2278, 7
    %v2280 = vsub.s32 0, %v2279
    %v2281 = vrot.slane %v2116, %v2280
    %v2283 = vadd.f32 %v2260, %v2281
    %v2284 = vmul.f32 %v2269, %v2283
    %v2285 = vadd.f32 %v2121, %v2284
    %v2286 = vtanh.pop %v2285
    %v2287 = vsub.f32 1.0, %v2276
    %v2288 = vmul.f32 %v2287, %v2286
    %v2289 = vmul.f32 %v2276, 0.0
    %v2290 = vadd.f32 %v2288, %v2289
    %s2291 = smul.addr %s556, 8
    %s2292 = scalar_lea.vmem [#allocation4], %s2291
    %v2293 = vld [vmem:[%s2292] sm:$0xff]
    %v2294 = vld [vmem:[%s2292 + $0x8] sm:$0xff]
    %v2295 = vld [vmem:[%s2292 + $0x10] sm:$0xff]
    %2296 = vmatprep.subr.mxu0 %v2069
    %2297 = vmatpush1.msra.mxu0 %v2068
    %2298 = vmatprep.subr.mxu0 %v2072
    %2299 = vmatpush1.msra.mxu0 %v2071
    %2300 = vmatprep.subr.mxu0 %v2075
    %2301 = vmatpush1.msra.mxu0 %v2074
    %2302 = vmatprep.subr.mxu0 %v2078
    %2303 = vmatpush1.msra.mxu0 %v2077
    %2304 = vmatprep.subr.mxu0 %v2081
    %2305 = vmatpush1.msra.mxu0 %v2080
    %2306 = vmatprep.subr.mxu0 %v2084
    %2307 = vmatpush1.msra.mxu0 %v2083
    %2308 = vmatprep.subr.mxu0 %v2087
    %2309 = vmatpush1.msra.mxu0 %v2086
    %2310 = vmatprep.subr.mxu0 %v2090
    %2311 = vmatpush1.msra.mxu0 %v2089
    %2312 = vmatprep.subr.mxu0 %v2093
    %2313 = vmatpush1.msra.mxu0 %v2092
    %2314 = vmatprep.subr.mxu0 %v2096
    %2315 = vmatpush1.msra.mxu0 %v2095
    %2316 = vmatprep.subr.mxu0 %v2099
    %2317 = vmatpush1.msra.mxu0 %v2098
    %2318 = vmatprep.subr.mxu0 %v2102
    %2319 = vmatpush1.msra.mxu0 %v2101
    %2320 = vmatprep.subr.mxu0 %v2105
    %2321 = vmatpush1.msra.mxu0 %v2104
    %2322 = vmatprep.subr.mxu0 %v2108
    %2323 = vmatpush1.msra.mxu0 %v2107
    %2324 = vmatprep.subr.mxu0 %v2111
    %2325 = vmatpush1.msra.mxu0 %v2110
    %2326 = vmatprep.subr.mxu0 %v2114
    %2327 = vmatpush1.msra.mxu0 %v2113
    %2328 = vmatprep.subr.mxu0 0.0
    %2329 = vmatpush1.msra.mxu0 0.0
    %2330 = vmatprep.subr.mxu0 0.0
    %2331 = vmatpush1.msra.mxu0 0.0
    %2332 = vmatprep.subr.mxu0 0.0
    %2333 = vmatpush1.msra.mxu0 0.0
    %2334 = vmatprep.subr.mxu0 0.0
    %2335 = vmatpush1.msra.mxu0 0.0
    %2336 = vmatprep.subr.mxu0 0.0
    %2337 = vmatpush1.msra.mxu0 0.0
    %2338 = vmatprep.subr.mxu0 0.0
    %2339 = vmatpush1.msra.mxu0 0.0
    %2340 = vmatprep.subr.mxu0 0.0
    %2341 = vmatpush1.msra.mxu0 0.0
    %2342 = vmatprep.subr.mxu0 0.0
    %2343 = vmatpush1.msra.mxu0 0.0
    %2344 = vmatprep.subr.mxu0 0.0
    %2345 = vmatpush1.msra.mxu0 0.0
    %2346 = vmatprep.subr.mxu0 0.0
    %2347 = vmatpush1.msra.mxu0 0.0
    %2348 = vmatprep.subr.mxu0 0.0
    %2349 = vmatpush1.msra.mxu0 0.0
    %2350 = vmatprep.subr.mxu0 0.0
    %2351 = vmatpush1.msra.mxu0 0.0
    %2352 = vmatprep.subr.mxu0 0.0
    %2353 = vmatpush1.msra.mxu0 0.0
    %2354 = vmatprep.subr.mxu0 0.0
    %2355 = vmatpush1.msra.mxu0 0.0
    %2356 = vmatprep.subr.mxu0 0.0
    %2357 = vmatpush1.msra.mxu0 0.0
    %2358 = vmatprep.subr.mxu0 0.0
    %2359 = vmatpush1.msra.mxu0 0.0
    %2360 = vmatprep.mubr.f32.mxu0 0.0
    %2361 = vmatmul.mubr.f32.gmra.mrb[0].mxu0 %v2290
    %v2362 = vpop.f32.mrb[0].mxu0
    %v2363 = vadd.f32 0.0, %v2362
    %v2364 = vpop.f32.mrb[0].mxu0
    %v2365 = vadd.f32 0.0, %v2364
    %2366 = vdwg.mxu0
    %2367 = vmatprep.subr.mxu0 0.0
    %2368 = vmatpush1.msra.mxu0 %v2070
    %2369 = vmatprep.subr.mxu0 0.0
    %2370 = vmatpush1.msra.mxu0 %v2073
    %2371 = vmatprep.subr.mxu0 0.0
    %2372 = vmatpush1.msra.mxu0 %v2076
    %2373 = vmatprep.subr.mxu0 0.0
    %2374 = vmatpush1.msra.mxu0 %v2079
    %2375 = vmatprep.subr.mxu0 0.0
    %2376 = vmatpush1.msra.mxu0 %v2082
    %2377 = vmatprep.subr.mxu0 0.0
    %2378 = vmatpush1.msra.mxu0 %v2085
    %2379 = vmatprep.subr.mxu0 0.0
    %2380 = vmatpush1.msra.mxu0 %v2088
    %2381 = vmatprep.subr.mxu0 0.0
    %2382 = vmatpush1.msra.mxu0 %v2091
    %2383 = vmatprep.subr.mxu0 0.0
    %2384 = vmatpush1.msra.mxu0 %v2094
    %2385 = vmatprep.subr.mxu0 0.0
    %2386 = vmatpush1.msra.mxu0 %v2097
    %2387 = vmatprep.subr.mxu0 0.0
    %2388 = vmatpush1.msra.mxu0 %v2100
    %2389 = vmatprep.subr.mxu0 0.0
    %2390 = vmatpush1.msra.mxu0 %v2103
    %2391 = vmatprep.subr.mxu0 0.0
    %2392 = vmatpush1.msra.mxu0 %v2106
    %2393 = vmatprep.subr.mxu0 0.0
    %2394 = vmatpush1.msra.mxu0 %v2109
    %2395 = vmatprep.subr.mxu0 0.0
    %2396 = vmatpush1.msra.mxu0 %v2112
    %2397 = vmatprep.subr.mxu0 0.0
    %2398 = vmatpush1.msra.mxu0 %v2115
    %2399 = vmatprep.subr.mxu0 0.0
    %2400 = vmatpush1.msra.mxu0 0.0
    %2401 = vmatprep.subr.mxu0 0.0
    %2402 = vmatpush1.msra.mxu0 0.0
    %2403 = vmatprep.subr.mxu0 0.0
    %2404 = vmatpush1.msra.mxu0 0.0
    %2405 = vmatprep.subr.mxu0 0.0
    %2406 = vmatpush1.msra.mxu0 0.0
    %2407 = vmatprep.subr.mxu0 0.0
    %2408 = vmatpush1.msra.mxu0 0.0
    %2409 = vmatprep.subr.mxu0 0.0
    %2410 = vmatpush1.msra.mxu0 0.0
    %2411 = vmatprep.subr.mxu0 0.0
    %2412 = vmatpush1.msra.mxu0 0.0
    %2413 = vmatprep.subr.mxu0 0.0
    %2414 = vmatpush1.msra.mxu0 0.0
    %2415 = vmatprep.subr.mxu0 0.0
    %2416 = vmatpush1.msra.mxu0 0.0
    %2417 = vmatprep.subr.mxu0 0.0
    %2418 = vmatpush1.msra.mxu0 0.0
    %2419 = vmatprep.subr.mxu0 0.0
    %2420 = vmatpush1.msra.mxu0 0.0
    %2421 = vmatprep.subr.mxu0 0.0
    %2422 = vmatpush1.msra.mxu0 0.0
    %2423 = vmatprep.subr.mxu0 0.0
    %2424 = vmatpush1.msra.mxu0 0.0
    %2425 = vmatprep.subr.mxu0 0.0
    %2426 = vmatpush1.msra.mxu0 0.0
    %2427 = vmatprep.subr.mxu0 0.0
    %2428 = vmatpush1.msra.mxu0 0.0
    %2429 = vmatprep.subr.mxu0 0.0
    %2430 = vmatpush1.msra.mxu0 0.0
    %2431 = vmatprep.mubr.f32.mxu0 0.0
    %2432 = vmatmul.mubr.f32.gmra.mrb[0].mxu0 %v2290
    %v2433 = vpop.f32.mrb[0].mxu0
    %v2434 = vadd.f32 0.0, %v2433
    %v2435 = vpop.f32.mrb[0].mxu0
    %2436 = vdwg.mxu0
    %v2437 = vadd.f32 %v2293, %v2363
    %v2438 = vxor.u32 %v2437, 2147483648
    %v2439 = vmul.f32 %v2438, 1.442695
    %v2440 = vpow.pop %v2439
    %v2441 = vadd.f32 %v2440, 1.0
    %v2442 = vrcp.pop %v2441
    %v2443 = vmul.f32 1.0, %v2442
    %v2444 = vadd.f32 %v2294, %v2365
    %v2445 = vxor.u32 %v2444, 2147483648
    %v2446 = vmul.f32 %v2445, 1.442695
    %v2447 = vpow.pop %v2446
    %v2448 = vadd.f32 %v2447, 1.0
    %v2449 = vrcp.pop %v2448
    %v2450 = vmul.f32 1.0, %v2449
    %v2451 = vadd.f32 %v2434, %v2281
    %v2452 = vmul.f32 %v2443, %v2451
    %v2453 = vadd.f32 %v2295, %v2452
    %v2454 = vtanh.pop %v2453
    %v2455 = vsub.f32 1.0, %v2450
    %v2456 = vmul.f32 %v2455, %v2454
    %v2457 = vmul.f32 %v2450, %v2290
    %v2458 = vadd.f32 %v2456, %v2457
    %s2459 = smul.addr %s727, 8
    %s2460 = scalar_lea.vmem [#allocation4], %s2459
    %v2461 = vld [vmem:[%s2460] sm:$0xff]
    %v2462 = vld [vmem:[%s2460 + $0x8] sm:$0xff]
    %v2463 = vld [vmem:[%s2460 + $0x10] sm:$0xff]
    %2464 = vmatprep.subr.mxu0 %v2069
    %2465 = vmatpush1.msra.mxu0 %v2068
    %2466 = vmatprep.subr.mxu0 %v2072
    %2467 = vmatpush1.msra.mxu0 %v2071
    %2468 = vmatprep.subr.mxu0 %v2075
    %2469 = vmatpush1.msra.mxu0 %v2074
    %2470 = vmatprep.subr.mxu0 %v2078
    %2471 = vmatpush1.msra.mxu0 %v2077
    %2472 = vmatprep.subr.mxu0 %v2081
    %2473 = vmatpush1.msra.mxu0 %v2080
    %2474 = vmatprep.subr.mxu0 %v2084
    %2475 = vmatpush1.msra.mxu0 %v2083
    %2476 = vmatprep.subr.mxu0 %v2087
    %2477 = vmatpush1.msra.mxu0 %v2086
    %2478 = vmatprep.subr.mxu0 %v2090
    %2479 = vmatpush1.msra.mxu0 %v2089
    %2480 = vmatprep.subr.mxu0 %v2093
    %2481 = vmatpush1.msra.mxu0 %v2092
    %2482 = vmatprep.subr.mxu0 %v2096
    %2483 = vmatpush1.msra.mxu0 %v2095
    %2484 = vmatprep.subr.mxu0 %v2099
    %2485 = vmatpush1.msra.mxu0 %v2098
    %2486 = vmatprep.subr.mxu0 %v2102
    %2487 = vmatpush1.msra.mxu0 %v2101
    %2488 = vmatprep.subr.mxu0 %v2105
    %2489 = vmatpush1.msra.mxu0 %v2104
    %2490 = vmatprep.subr.mxu0 %v2108
    %2491 = vmatpush1.msra.mxu0 %v2107
    %2492 = vmatprep.subr.mxu0 %v2111
    %2493 = vmatpush1.msra.mxu0 %v2110
    %2494 = vmatprep.subr.mxu0 %v2114
    %2495 = vmatpush1.msra.mxu0 %v2113
    %2496 = vmatprep.subr.mxu0 0.0
    %2497 = vmatpush1.msra.mxu0 0.0
    %2498 = vmatprep.subr.mxu0 0.0
    %2499 = vmatpush1.msra.mxu0 0.0
    %2500 = vmatprep.subr.mxu0 0.0
    %2501 = vmatpush1.msra.mxu0 0.0
    %2502 = vmatprep.subr.mxu0 0.0
    %2503 = vmatpush1.msra.mxu0 0.0
    %2504 = vmatprep.subr.mxu0 0.0
    %2505 = vmatpush1.msra.mxu0 0.0
    %2506 = vmatprep.subr.mxu0 0.0
    %2507 = vmatpush1.msra.mxu0 0.0
    %2508 = vmatprep.subr.mxu0 0.0
    %2509 = vmatpush1.msra.mxu0 0.0
    %2510 = vmatprep.subr.mxu0 0.0
    %2511 = vmatpush1.msra.mxu0 0.0
    %2512 = vmatprep.subr.mxu0 0.0
    %2513 = vmatpush1.msra.mxu0 0.0
    %2514 = vmatprep.subr.mxu0 0.0
    %2515 = vmatpush1.msra.mxu0 0.0
    %2516 = vmatprep.subr.mxu0 0.0
    %2517 = vmatpush1.msra.mxu0 0.0
    %2518 = vmatprep.subr.mxu0 0.0
    %2519 = vmatpush1.msra.mxu0 0.0
    %2520 = vmatprep.subr.mxu0 0.0
    %2521 = vmatpush1.msra.mxu0 0.0
    %2522 = vmatprep.subr.mxu0 0.0
    %2523 = vmatpush1.msra.mxu0 0.0
    %2524 = vmatprep.subr.mxu0 0.0
    %2525 = vmatpush1.msra.mxu0 0.0
    %2526 = vmatprep.subr.mxu0 0.0
    %2527 = vmatpush1.msra.mxu0 0.0
    %2528 = vmatprep.mubr.f32.mxu0 0.0
    %2529 = vmatmul.mubr.f32.gmra.mrb[0].mxu0 %v2458
    %v2530 = vpop.f32.mrb[0].mxu0
    %v2531 = vadd.f32 0.0, %v2530
    %v2532 = vpop.f32.mrb[0].mxu0
    %v2533 = vadd.f32 0.0, %v2532
    %2534 = vdwg.mxu0
    %2535 = vmatprep.subr.mxu0 0.0
    %2536 = vmatpush1.msra.mxu0 %v2070
    %2537 = vmatprep.subr.mxu0 0.0
    %2538 = vmatpush1.msra.mxu0 %v2073
    %2539 = vmatprep.subr.mxu0 0.0
    %2540 = vmatpush1.msra.mxu0 %v2076
    %2541 = vmatprep.subr.mxu0 0.0
    %2542 = vmatpush1.msra.mxu0 %v2079
    %2543 = vmatprep.subr.mxu0 0.0
    %2544 = vmatpush1.msra.mxu0 %v2082
    %2545 = vmatprep.subr.mxu0 0.0
    %2546 = vmatpush1.msra.mxu0 %v2085
    %2547 = vmatprep.subr.mxu0 0.0
    %2548 = vmatpush1.msra.mxu0 %v2088
    %2549 = vmatprep.subr.mxu0 0.0
    %2550 = vmatpush1.msra.mxu0 %v2091
    %2551 = vmatprep.subr.mxu0 0.0
    %2552 = vmatpush1.msra.mxu0 %v2094
    %2553 = vmatprep.subr.mxu0 0.0
    %2554 = vmatpush1.msra.mxu0 %v2097
    %2555 = vmatprep.subr.mxu0 0.0
    %2556 = vmatpush1.msra.mxu0 %v2100
    %2557 = vmatprep.subr.mxu0 0.0
    %2558 = vmatpush1.msra.mxu0 %v2103
    %2559 = vmatprep.subr.mxu0 0.0
    %2560 = vmatpush1.msra.mxu0 %v2106
    %2561 = vmatprep.subr.mxu0 0.0
    %2562 = vmatpush1.msra.mxu0 %v2109
    %2563 = vmatprep.subr.mxu0 0.0
    %2564 = vmatpush1.msra.mxu0 %v2112
    %2565 = vmatprep.subr.mxu0 0.0
    %2566 = vmatpush1.msra.mxu0 %v2115
    %2567 = vmatprep.subr.mxu0 0.0
    %2568 = vmatpush1.msra.mxu0 0.0
    %2569 = vmatprep.subr.mxu0 0.0
    %2570 = vmatpush1.msra.mxu0 0.0
    %2571 = vmatprep.subr.mxu0 0.0
    %2572 = vmatpush1.msra.mxu0 0.0
    %2573 = vmatprep.subr.mxu0 0.0
    %2574 = vmatpush1.msra.mxu0 0.0
    %2575 = vmatprep.subr.mxu0 0.0
    %2576 = vmatpush1.msra.mxu0 0.0
    %2577 = vmatprep.subr.mxu0 0.0
    %2578 = vmatpush1.msra.mxu0 0.0
    %2579 = vmatprep.subr.mxu0 0.0
    %2580 = vmatpush1.msra.mxu0 0.0
    %2581 = vmatprep.subr.mxu0 0.0
    %2582 = vmatpush1.msra.mxu0 0.0
    %2583 = vmatprep.subr.mxu0 0.0
    %2584 = vmatpush1.msra.mxu0 0.0
    %2585 = vmatprep.subr.mxu0 0.0
    %2586 = vmatpush1.msra.mxu0 0.0
    %2587 = vmatprep.subr.mxu0 0.0
    %2588 = vmatpush1.msra.mxu0 0.0
    %2589 = vmatprep.subr.mxu0 0.0
    %2590 = vmatpush1.msra.mxu0 0.0
    %2591 = vmatprep.subr.mxu0 0.0
    %2592 = vmatpush1.msra.mxu0 0.0
    %2593 = vmatprep.subr.mxu0 0.0
    %2594 = vmatpush1.msra.mxu0 0.0
    %2595 = vmatprep.subr.mxu0 0.0
    %2596 = vmatpush1.msra.mxu0 0.0
    %2597 = vmatprep.subr.mxu0 0.0
    %2598 = vmatpush1.msra.mxu0 0.0
    %2599 = vmatprep.mubr.f32.mxu0 0.0
    %2600 = vmatmul.mubr.f32.gmra.mrb[0].mxu0 %v2458
    %v2601 = vpop.f32.mrb[0].mxu0
    %v2602 = vadd.f32 0.0, %v2601
    %v2603 = vpop.f32.mrb[0].mxu0
    %2604 = vdwg.mxu0
    %v2605 = vadd.f32 %v2461, %v2531
    %v2606 = vxor.u32 %v2605, 2147483648
    %v2607 = vmul.f32 %v2606, 1.442695
    %v2608 = vpow.pop %v2607
    %v2609 = vadd.f32 %v2608, 1.0
    %v2610 = vrcp.pop %v2609
    %v2611 = vmul.f32 1.0, %v2610
    %v2612 = vadd.f32 %v2462, %v2533
    %v2613 = vxor.u32 %v2612, 2147483648
    %v2614 = vmul.f32 %v2613, 1.442695
    %v2615 = vpow.pop %v2614
    %v2616 = vadd.f32 %v2615, 1.0
    %v2617 = vrcp.pop %v2616
    %v2618 = vmul.f32 1.0, %v2617
    %v2619 = vadd.f32 %v2602, %v2281
    %v2620 = vmul.f32 %v2611, %v2619
    %v2621 = vadd.f32 %v2463, %v2620
    %v2622 = vtanh.pop %v2621
    %v2623 = vsub.f32 1.0, %v2618
    %v2624 = vmul.f32 %v2623, %v2622
    %v2625 = vmul.f32 %v2618, %v2458
    %v2626 = vadd.f32 %v2624, %v2625
    %s2627 = smul.addr %s898, 8
    %s2628 = scalar_lea.vmem [#allocation4], %s2627
    %v2629 = vld [vmem:[%s2628] sm:$0xff]
    %v2630 = vld [vmem:[%s2628 + $0x8] sm:$0xff]
    %v2631 = vld [vmem:[%s2628 + $0x10] sm:$0xff]
    %2632 = vmatprep.subr.mxu0 %v2069
    %2633 = vmatpush1.msra.mxu0 %v2068
    %2634 = vmatprep.subr.mxu0 %v2072
    %2635 = vmatpush1.msra.mxu0 %v2071
    %2636 = vmatprep.subr.mxu0 %v2075
    %2637 = vmatpush1.msra.mxu0 %v2074
    %2638 = vmatprep.subr.mxu0 %v2078
    %2639 = vmatpush1.msra.mxu0 %v2077
    %2640 = vmatprep.subr.mxu0 %v2081
    %2641 = vmatpush1.msra.mxu0 %v2080
    %2642 = vmatprep.subr.mxu0 %v2084
    %2643 = vmatpush1.msra.mxu0 %v2083
    %2644 = vmatprep.subr.mxu0 %v2087
    %2645 = vmatpush1.msra.mxu0 %v2086
    %2646 = vmatprep.subr.mxu0 %v2090
    %2647 = vmatpush1.msra.mxu0 %v2089
    %2648 = vmatprep.subr.mxu0 %v2093
    %2649 = vmatpush1.msra.mxu0 %v2092
    %2650 = vmatprep.subr.mxu0 %v2096
    %2651 = vmatpush1.msra.mxu0 %v2095
    %2652 = vmatprep.subr.mxu0 %v2099
    %2653 = vmatpush1.msra.mxu0 %v2098
    %2654 = vmatprep.subr.mxu0 %v2102
    %2655 = vmatpush1.msra.mxu0 %v2101
    %2656 = vmatprep.subr.mxu0 %v2105
    %2657 = vmatpush1.msra.mxu0 %v2104
    %2658 = vmatprep.subr.mxu0 %v2108
    %2659 = vmatpush1.msra.mxu0 %v2107
    %2660 = vmatprep.subr.mxu0 %v2111
    %2661 = vmatpush1.msra.mxu0 %v2110
    %2662 = vmatprep.subr.mxu0 %v2114
    %2663 = vmatpush1.msra.mxu0 %v2113
    %2664 = vmatprep.subr.mxu0 0.0
    %2665 = vmatpush1.msra.mxu0 0.0
    %2666 = vmatprep.subr.mxu0 0.0
    %2667 = vmatpush1.msra.mxu0 0.0
    %2668 = vmatprep.subr.mxu0 0.0
    %2669 = vmatpush1.msra.mxu0 0.0
    %2670 = vmatprep.subr.mxu0 0.0
    %2671 = vmatpush1.msra.mxu0 0.0
    %2672 = vmatprep.subr.mxu0 0.0
    %2673 = vmatpush1.msra.mxu0 0.0
    %2674 = vmatprep.subr.mxu0 0.0
    %2675 = vmatpush1.msra.mxu0 0.0
    %2676 = vmatprep.subr.mxu0 0.0
    %2677 = vmatpush1.msra.mxu0 0.0
    %2678 = vmatprep.subr.mxu0 0.0
    %2679 = vmatpush1.msra.mxu0 0.0
    %2680 = vmatprep.subr.mxu0 0.0
    %2681 = vmatpush1.msra.mxu0 0.0
    %2682 = vmatprep.subr.mxu0 0.0
    %2683 = vmatpush1.msra.mxu0 0.0
    %2684 = vmatprep.subr.mxu0 0.0
    %2685 = vmatpush1.msra.mxu0 0.0
    %2686 = vmatprep.subr.mxu0 0.0
    %2687 = vmatpush1.msra.mxu0 0.0
    %2688 = vmatprep.subr.mxu0 0.0
    %2689 = vmatpush1.msra.mxu0 0.0
    %2690 = vmatprep.subr.mxu0 0.0
    %2691 = vmatpush1.msra.mxu0 0.0
    %2692 = vmatprep.subr.mxu0 0.0
    %2693 = vmatpush1.msra.mxu0 0.0
    %2694 = vmatprep.subr.mxu0 0.0
    %2695 = vmatpush1.msra.mxu0 0.0
    %2696 = vmatprep.mubr.f32.mxu0 0.0
    %2697 = vmatmul.mubr.f32.gmra.mrb[0].mxu0 %v2626
    %v2698 = vpop.f32.mrb[0].mxu0
    %v2699 = vadd.f32 0.0, %v2698
    %v2700 = vpop.f32.mrb[0].mxu0
    %v2701 = vadd.f32 0.0, %v2700
    %2702 = vdwg.mxu0
    %2703 = vmatprep.subr.mxu0 0.0
    %2704 = vmatpush1.msra.mxu0 %v2070
    %2705 = vmatprep.subr.mxu0 0.0
    %2706 = vmatpush1.msra.mxu0 %v2073
    %2707 = vmatprep.subr.mxu0 0.0
    %2708 = vmatpush1.msra.mxu0 %v2076
    %2709 = vmatprep.subr.mxu0 0.0
    %2710 = vmatpush1.msra.mxu0 %v2079
    %2711 = vmatprep.subr.mxu0 0.0
    %2712 = vmatpush1.msra.mxu0 %v2082
    %2713 = vmatprep.subr.mxu0 0.0
    %2714 = vmatpush1.msra.mxu0 %v2085
    %2715 = vmatprep.subr.mxu0 0.0
    %2716 = vmatpush1.msra.mxu0 %v2088
    %2717 = vmatprep.subr.mxu0 0.0
    %2718 = vmatpush1.msra.mxu0 %v2091
    %2719 = vmatprep.subr.mxu0 0.0
    %2720 = vmatpush1.msra.mxu0 %v2094
    %2721 = vmatprep.subr.mxu0 0.0
    %2722 = vmatpush1.msra.mxu0 %v2097
    %2723 = vmatprep.subr.mxu0 0.0
    %2724 = vmatpush1.msra.mxu0 %v2100
    %2725 = vmatprep.subr.mxu0 0.0
    %2726 = vmatpush1.msra.mxu0 %v2103
    %2727 = vmatprep.subr.mxu0 0.0
    %2728 = vmatpush1.msra.mxu0 %v2106
    %2729 = vmatprep.subr.mxu0 0.0
    %2730 = vmatpush1.msra.mxu0 %v2109
    %2731 = vmatprep.subr.mxu0 0.0
    %2732 = vmatpush1.msra.mxu0 %v2112
    %2733 = vmatprep.subr.mxu0 0.0
    %2734 = vmatpush1.msra.mxu0 %v2115
    %2735 = vmatprep.subr.mxu0 0.0
    %2736 = vmatpush1.msra.mxu0 0.0
    %2737 = vmatprep.subr.mxu0 0.0
    %2738 = vmatpush1.msra.mxu0 0.0
    %2739 = vmatprep.subr.mxu0 0.0
    %2740 = vmatpush1.msra.mxu0 0.0
    %2741 = vmatprep.subr.mxu0 0.0
    %2742 = vmatpush1.msra.mxu0 0.0
    %2743 = vmatprep.subr.mxu0 0.0
    %2744 = vmatpush1.msra.mxu0 0.0
    %2745 = vmatprep.subr.mxu0 0.0
    %2746 = vmatpush1.msra.mxu0 0.0
    %2747 = vmatprep.subr.mxu0 0.0
    %2748 = vmatpush1.msra.mxu0 0.0
    %2749 = vmatprep.subr.mxu0 0.0
    %2750 = vmatpush1.msra.mxu0 0.0
    %2751 = vmatprep.subr.mxu0 0.0
    %2752 = vmatpush1.msra.mxu0 0.0
    %2753 = vmatprep.subr.mxu0 0.0
    %2754 = vmatpush1.msra.mxu0 0.0
    %2755 = vmatprep.subr.mxu0 0.0
    %2756 = vmatpush1.msra.mxu0 0.0
    %2757 = vmatprep.subr.mxu0 0.0
    %2758 = vmatpush1.msra.mxu0 0.0
    %2759 = vmatprep.subr.mxu0 0.0
    %2760 = vmatpush1.msra.mxu0 0.0
    %2761 = vmatprep.subr.mxu0 0.0
    %2762 = vmatpush1.msra.mxu0 0.0
    %2763 = vmatprep.subr.mxu0 0.0
    %2764 = vmatpush1.msra.mxu0 0.0
    %2765 = vmatprep.subr.mxu0 0.0
    %2766 = vmatpush1.msra.mxu0 0.0
    %2767 = vmatprep.mubr.f32.mxu0 0.0
    %2768 = vmatmul.mubr.f32.gmra.mrb[0].mxu0 %v2626
    %v2769 = vpop.f32.mrb[0].mxu0
    %v2770 = vadd.f32 0.0, %v2769
    %v2771 = vpop.f32.mrb[0].mxu0
    %2772 = vdwg.mxu0
    %v2773 = vadd.f32 %v2629, %v2699
    %v2774 = vxor.u32 %v2773, 2147483648
    %v2775 = vmul.f32 %v2774, 1.442695
    %v2776 = vpow.pop %v2775
    %v2777 = vadd.f32 %v2776, 1.0
    %v2778 = vrcp.pop %v2777
    %v2779 = vmul.f32 1.0, %v2778
    %v2780 = vadd.f32 %v2630, %v2701
    %v2781 = vxor.u32 %v2780, 2147483648
    %v2782 = vmul.f32 %v2781, 1.442695
    %v2783 = vpow.pop %v2782
    %v2784 = vadd.f32 %v2783, 1.0
    %v2785 = vrcp.pop %v2784
    %v2786 = vmul.f32 1.0, %v2785
    %v2787 = vadd.f32 %v2770, %v2281
    %v2788 = vmul.f32 %v2779, %v2787
    %v2789 = vadd.f32 %v2631, %v2788
    %v2790 = vtanh.pop %v2789
    %v2791 = vsub.f32 1.0, %v2786
    %v2792 = vmul.f32 %v2791, %v2790
    %v2793 = vmul.f32 %v2786, %v2626
    %v2794 = vadd.f32 %v2792, %v2793
    %s2795 = smul.addr %s1069, 8
    %s2796 = scalar_lea.vmem [#allocation4], %s2795
    %v2797 = vld [vmem:[%s2796] sm:$0xff]
    %v2798 = vld [vmem:[%s2796 + $0x8] sm:$0xff]
    %v2799 = vld [vmem:[%s2796 + $0x10] sm:$0xff]
    %2800 = vmatprep.subr.mxu0 %v2069
    %2801 = vmatpush1.msra.mxu0 %v2068
    %2802 = vmatprep.subr.mxu0 %v2072
    %2803 = vmatpush1.msra.mxu0 %v2071
    %2804 = vmatprep.subr.mxu0 %v2075
    %2805 = vmatpush1.msra.mxu0 %v2074
    %2806 = vmatprep.subr.mxu0 %v2078
    %2807 = vmatpush1.msra.mxu0 %v2077
    %2808 = vmatprep.subr.mxu0 %v2081
    %2809 = vmatpush1.msra.mxu0 %v2080
    %2810 = vmatprep.subr.mxu0 %v2084
    %2811 = vmatpush1.msra.mxu0 %v2083
    %2812 = vmatprep.subr.mxu0 %v2087
    %2813 = vmatpush1.msra.mxu0 %v2086
    %2814 = vmatprep.subr.mxu0 %v2090
    %2815 = vmatpush1.msra.mxu0 %v2089
    %2816 = vmatprep.subr.mxu0 %v2093
    %2817 = vmatpush1.msra.mxu0 %v2092
    %2818 = vmatprep.subr.mxu0 %v2096
    %2819 = vmatpush1.msra.mxu0 %v2095
    %2820 = vmatprep.subr.mxu0 %v2099
    %2821 = vmatpush1.msra.mxu0 %v2098
    %2822 = vmatprep.subr.mxu0 %v2102
    %2823 = vmatpush1.msra.mxu0 %v2101
    %2824 = vmatprep.subr.mxu0 %v2105
    %2825 = vmatpush1.msra.mxu0 %v2104
    %2826 = vmatprep.subr.mxu0 %v2108
    %2827 = vmatpush1.msra.mxu0 %v2107
    %2828 = vmatprep.subr.mxu0 %v2111
    %2829 = vmatpush1.msra.mxu0 %v2110
    %2830 = vmatprep.subr.mxu0 %v2114
    %2831 = vmatpush1.msra.mxu0 %v2113
    %2832 = vmatprep.subr.mxu0 0.0
    %2833 = vmatpush1.msra.mxu0 0.0
    %2834 = vmatprep.subr.mxu0 0.0
    %2835 = vmatpush1.msra.mxu0 0.0
    %2836 = vmatprep.subr.mxu0 0.0
    %2837 = vmatpush1.msra.mxu0 0.0
    %2838 = vmatprep.subr.mxu0 0.0
    %2839 = vmatpush1.msra.mxu0 0.0
    %2840 = vmatprep.subr.mxu0 0.0
    %2841 = vmatpush1.msra.mxu0 0.0
    %2842 = vmatprep.subr.mxu0 0.0
    %2843 = vmatpush1.msra.mxu0 0.0
    %2844 = vmatprep.subr.mxu0 0.0
    %2845 = vmatpush1.msra.mxu0 0.0
    %2846 = vmatprep.subr.mxu0 0.0
    %2847 = vmatpush1.msra.mxu0 0.0
    %2848 = vmatprep.subr.mxu0 0.0
    %2849 = vmatpush1.msra.mxu0 0.0
    %2850 = vmatprep.subr.mxu0 0.0
    %2851 = vmatpush1.msra.mxu0 0.0
    %2852 = vmatprep.subr.mxu0 0.0
    %2853 = vmatpush1.msra.mxu0 0.0
    %2854 = vmatprep.subr.mxu0 0.0
    %2855 = vmatpush1.msra.mxu0 0.0
    %2856 = vmatprep.subr.mxu0 0.0
    %2857 = vmatpush1.msra.mxu0 0.0
    %2858 = vmatprep.subr.mxu0 0.0
    %2859 = vmatpush1.msra.mxu0 0.0
    %2860 = vmatprep.subr.mxu0 0.0
    %2861 = vmatpush1.msra.mxu0 0.0
    %2862 = vmatprep.subr.mxu0 0.0
    %2863 = vmatpush1.msra.mxu0 0.0
    %2864 = vmatprep.mubr.f32.mxu0 0.0
    %2865 = vmatmul.mubr.f32.gmra.mrb[0].mxu0 %v2794
    %v2866 = vpop.f32.mrb[0].mxu0
    %v2867 = vadd.f32 0.0, %v2866
    %v2868 = vpop.f32.mrb[0].mxu0
    %v2869 = vadd.f32 0.0, %v2868
    %2870 = vdwg.mxu0
    %2871 = vmatprep.subr.mxu0 0.0
    %2872 = vmatpush1.msra.mxu0 %v2070
    %2873 = vmatprep.subr.mxu0 0.0
    %2874 = vmatpush1.msra.mxu0 %v2073
    %2875 = vmatprep.subr.mxu0 0.0
    %2876 = vmatpush1.msra.mxu0 %v2076
    %2877 = vmatprep.subr.mxu0 0.0
    %2878 = vmatpush1.msra.mxu0 %v2079
    %2879 = vmatprep.subr.mxu0 0.0
    %2880 = vmatpush1.msra.mxu0 %v2082
    %2881 = vmatprep.subr.mxu0 0.0
    %2882 = vmatpush1.msra.mxu0 %v2085
    %2883 = vmatprep.subr.mxu0 0.0
    %2884 = vmatpush1.msra.mxu0 %v2088
    %2885 = vmatprep.subr.mxu0 0.0
    %2886 = vmatpush1.msra.mxu0 %v2091
    %2887 = vmatprep.subr.mxu0 0.0
    %2888 = vmatpush1.msra.mxu0 %v2094
    %2889 = vmatprep.subr.mxu0 0.0
    %2890 = vmatpush1.msra.mxu0 %v2097
    %2891 = vmatprep.subr.mxu0 0.0
    %2892 = vmatpush1.msra.mxu0 %v2100
    %2893 = vmatprep.subr.mxu0 0.0
    %2894 = vmatpush1.msra.mxu0 %v2103
    %2895 = vmatprep.subr.mxu0 0.0
    %2896 = vmatpush1.msra.mxu0 %v2106
    %2897 = vmatprep.subr.mxu0 0.0
    %2898 = vmatpush1.msra.mxu0 %v2109
    %2899 = vmatprep.subr.mxu0 0.0
    %2900 = vmatpush1.msra.mxu0 %v2112
    %2901 = vmatprep.subr.mxu0 0.0
    %2902 = vmatpush1.msra.mxu0 %v2115
    %2903 = vmatprep.subr.mxu0 0.0
    %2904 = vmatpush1.msra.mxu0 0.0
    %2905 = vmatprep.subr.mxu0 0.0
    %2906 = vmatpush1.msra.mxu0 0.0
    %2907 = vmatprep.subr.mxu0 0.0
    %2908 = vmatpush1.msra.mxu0 0.0
    %2909 = vmatprep.subr.mxu0 0.0
    %2910 = vmatpush1.msra.mxu0 0.0
    %2911 = vmatprep.subr.mxu0 0.0
    %2912 = vmatpush1.msra.mxu0 0.0
    %2913 = vmatprep.subr.mxu0 0.0
    %2914 = vmatpush1.msra.mxu0 0.0
    %2915 = vmatprep.subr.mxu0 0.0
    %2916 = vmatpush1.msra.mxu0 0.0
    %2917 = vmatprep.subr.mxu0 0.0
    %2918 = vmatpush1.msra.mxu0 0.0
    %2919 = vmatprep.subr.mxu0 0.0
    %2920 = vmatpush1.msra.mxu0 0.0
    %2921 = vmatprep.subr.mxu0 0.0
    %2922 = vmatpush1.msra.mxu0 0.0
    %2923 = vmatprep.subr.mxu0 0.0
    %2924 = vmatpush1.msra.mxu0 0.0
    %2925 = vmatprep.subr.mxu0 0.0
    %2926 = vmatpush1.msra.mxu0 0.0
    %2927 = vmatprep.subr.mxu0 0.0
    %2928 = vmatpush1.msra.mxu0 0.0
    %2929 = vmatprep.subr.mxu0 0.0
    %2930 = vmatpush1.msra.mxu0 0.0
    %2931 = vmatprep.subr.mxu0 0.0
    %2932 = vmatpush1.msra.mxu0 0.0
    %2933 = vmatprep.subr.mxu0 0.0
    %2934 = vmatpush1.msra.mxu0 0.0
    %2935 = vmatprep.mubr.f32.mxu0 0.0
    %2936 = vmatmul.mubr.f32.gmra.mrb[0].mxu0 %v2794
    %v2937 = vpop.f32.mrb[0].mxu0
    %v2938 = vadd.f32 0.0, %v2937
    %v2939 = vpop.f32.mrb[0].mxu0
    %2940 = vdwg.mxu0
    %v2941 = vadd.f32 %v2797, %v2867
    %v2942 = vxor.u32 %v2941, 2147483648
    %v2943 = vmul.f32 %v2942, 1.442695
    %v2944 = vpow.pop %v2943
    %v2945 = vadd.f32 %v2944, 1.0
    %v2946 = vrcp.pop %v2945
    %v2947 = vmul.f32 1.0, %v2946
    %v2948 = vadd.f32 %v2798, %v2869
    %v2949 = vxor.u32 %v2948, 2147483648
    %v2950 = vmul.f32 %v2949, 1.442695
    %v2951 = vpow.pop %v2950
    %v2952 = vadd.f32 %v2951, 1.0
    %v2953 = vrcp.pop %v2952
    %v2954 = vmul.f32 1.0, %v2953
    %v2955 = vadd.f32 %v2938, %v2281
    %v2956 = vmul.f32 %v2947, %v2955
    %v2957 = vadd.f32 %v2799, %v2956
    %v2958 = vtanh.pop %v2957
    %v2959 = vsub.f32 1.0, %v2954
    %v2960 = vmul.f32 %v2959, %v2958
    %v2961 = vmul.f32 %v2954, %v2794
    %v2962 = vadd.f32 %v2960, %v2961
    %s2963 = smul.addr %s1240, 8
    %s2964 = scalar_lea.vmem [#allocation4], %s2963
    %v2965 = vld [vmem:[%s2964] sm:$0xff]
    %v2966 = vld [vmem:[%s2964 + $0x8] sm:$0xff]
    %v2967 = vld [vmem:[%s2964 + $0x10] sm:$0xff]
    %2968 = vmatprep.subr.mxu0 %v2069
    %2969 = vmatpush1.msra.mxu0 %v2068
    %2970 = vmatprep.subr.mxu0 %v2072
    %2971 = vmatpush1.msra.mxu0 %v2071
    %2972 = vmatprep.subr.mxu0 %v2075
    %2973 = vmatpush1.msra.mxu0 %v2074
    %2974 = vmatprep.subr.mxu0 %v2078
    %2975 = vmatpush1.msra.mxu0 %v2077
    %2976 = vmatprep.subr.mxu0 %v2081
    %2977 = vmatpush1.msra.mxu0 %v2080
    %2978 = vmatprep.subr.mxu0 %v2084
    %2979 = vmatpush1.msra.mxu0 %v2083
    %2980 = vmatprep.subr.mxu0 %v2087
    %2981 = vmatpush1.msra.mxu0 %v2086
    %2982 = vmatprep.subr.mxu0 %v2090
    %2983 = vmatpush1.msra.mxu0 %v2089
    %2984 = vmatprep.subr.mxu0 %v2093
    %2985 = vmatpush1.msra.mxu0 %v2092
    %2986 = vmatprep.subr.mxu0 %v2096
    %2987 = vmatpush1.msra.mxu0 %v2095
    %2988 = vmatprep.subr.mxu0 %v2099
    %2989 = vmatpush1.msra.mxu0 %v2098
    %2990 = vmatprep.subr.mxu0 %v2102
    %2991 = vmatpush1.msra.mxu0 %v2101
    %2992 = vmatprep.subr.mxu0 %v2105
    %2993 = vmatpush1.msra.mxu0 %v2104
    %2994 = vmatprep.subr.mxu0 %v2108
    %2995 = vmatpush1.msra.mxu0 %v2107
    %2996 = vmatprep.subr.mxu0 %v2111
    %2997 = vmatpush1.msra.mxu0 %v2110
    %2998 = vmatprep.subr.mxu0 %v2114
    %2999 = vmatpush1.msra.mxu0 %v2113
    %3000 = vmatprep.subr.mxu0 0.0
    %3001 = vmatpush1.msra.mxu0 0.0
    %3002 = vmatprep.subr.mxu0 0.0
    %3003 = vmatpush1.msra.mxu0 0.0
    %3004 = vmatprep.subr.mxu0 0.0
    %3005 = vmatpush1.msra.mxu0 0.0
    %3006 = vmatprep.subr.mxu0 0.0
    %3007 = vmatpush1.msra.mxu0 0.0
    %3008 = vmatprep.subr.mxu0 0.0
    %3009 = vmatpush1.msra.mxu0 0.0
    %3010 = vmatprep.subr.mxu0 0.0
    %3011 = vmatpush1.msra.mxu0 0.0
    %3012 = vmatprep.subr.mxu0 0.0
    %3013 = vmatpush1.msra.mxu0 0.0
    %3014 = vmatprep.subr.mxu0 0.0
    %3015 = vmatpush1.msra.mxu0 0.0
    %3016 = vmatprep.subr.mxu0 0.0
    %3017 = vmatpush1.msra.mxu0 0.0
    %3018 = vmatprep.subr.mxu0 0.0
    %3019 = vmatpush1.msra.mxu0 0.0
    %3020 = vmatprep.subr.mxu0 0.0
    %3021 = vmatpush1.msra.mxu0 0.0
    %3022 = vmatprep.subr.mxu0 0.0
    %3023 = vmatpush1.msra.mxu0 0.0
    %3024 = vmatprep.subr.mxu0 0.0
    %3025 = vmatpush1.msra.mxu0 0.0
    %3026 = vmatprep.subr.mxu0 0.0
    %3027 = vmatpush1.msra.mxu0 0.0
    %3028 = vmatprep.subr.mxu0 0.0
    %3029 = vmatpush1.msra.mxu0 0.0
    %3030 = vmatprep.subr.mxu0 0.0
    %3031 = vmatpush1.msra.mxu0 0.0
    %3032 = vmatprep.mubr.f32.mxu0 0.0
    %3033 = vmatmul.mubr.f32.gmra.mrb[0].mxu0 %v2962
    %v3034 = vpop.f32.mrb[0].mxu0
    %v3035 = vadd.f32 0.0, %v3034
    %v3036 = vpop.f32.mrb[0].mxu0
    %v3037 = vadd.f32 0.0, %v3036
    %3038 = vdwg.mxu0
    %3039 = vmatprep.subr.mxu0 0.0
    %3040 = vmatpush1.msra.mxu0 %v2070
    %3041 = vmatprep.subr.mxu0 0.0
    %3042 = vmatpush1.msra.mxu0 %v2073
    %3043 = vmatprep.subr.mxu0 0.0
    %3044 = vmatpush1.msra.mxu0 %v2076
    %3045 = vmatprep.subr.mxu0 0.0
    %3046 = vmatpush1.msra.mxu0 %v2079
    %3047 = vmatprep.subr.mxu0 0.0
    %3048 = vmatpush1.msra.mxu0 %v2082
    %3049 = vmatprep.subr.mxu0 0.0
    %3050 = vmatpush1.msra.mxu0 %v2085
    %3051 = vmatprep.subr.mxu0 0.0
    %3052 = vmatpush1.msra.mxu0 %v2088
    %3053 = vmatprep.subr.mxu0 0.0
    %3054 = vmatpush1.msra.mxu0 %v2091
    %3055 = vmatprep.subr.mxu0 0.0
    %3056 = vmatpush1.msra.mxu0 %v2094
    %3057 = vmatprep.subr.mxu0 0.0
    %3058 = vmatpush1.msra.mxu0 %v2097
    %3059 = vmatprep.subr.mxu0 0.0
    %3060 = vmatpush1.msra.mxu0 %v2100
    %3061 = vmatprep.subr.mxu0 0.0
    %3062 = vmatpush1.msra.mxu0 %v2103
    %3063 = vmatprep.subr.mxu0 0.0
    %3064 = vmatpush1.msra.mxu0 %v2106
    %3065 = vmatprep.subr.mxu0 0.0
    %3066 = vmatpush1.msra.mxu0 %v2109
    %3067 = vmatprep.subr.mxu0 0.0
    %3068 = vmatpush1.msra.mxu0 %v2112
    %3069 = vmatprep.subr.mxu0 0.0
    %3070 = vmatpush1.msra.mxu0 %v2115
    %3071 = vmatprep.subr.mxu0 0.0
    %3072 = vmatpush1.msra.mxu0 0.0
    %3073 = vmatprep.subr.mxu0 0.0
    %3074 = vmatpush1.msra.mxu0 0.0
    %3075 = vmatprep.subr.mxu0 0.0
    %3076 = vmatpush1.msra.mxu0 0.0
    %3077 = vmatprep.subr.mxu0 0.0
    %3078 = vmatpush1.msra.mxu0 0.0
    %3079 = vmatprep.subr.mxu0 0.0
    %3080 = vmatpush1.msra.mxu0 0.0
    %3081 = vmatprep.subr.mxu0 0.0
    %3082 = vmatpush1.msra.mxu0 0.0
    %3083 = vmatprep.subr.mxu0 0.0
    %3084 = vmatpush1.msra.mxu0 0.0
    %3085 = vmatprep.subr.mxu0 0.0
    %3086 = vmatpush1.msra.mxu0 0.0
    %3087 = vmatprep.subr.mxu0 0.0
    %3088 = vmatpush1.msra.mxu0 0.0
    %3089 = vmatprep.subr.mxu0 0.0
    %3090 = vmatpush1.msra.mxu0 0.0
    %3091 = vmatprep.subr.mxu0 0.0
    %3092 = vmatpush1.msra.mxu0 0.0
    %3093 = vmatprep.subr.mxu0 0.0
    %3094 = vmatpush1.msra.mxu0 0.0
    %3095 = vmatprep.subr.mxu0 0.0
    %3096 = vmatpush1.msra.mxu0 0.0
    %3097 = vmatprep.subr.mxu0 0.0
    %3098 = vmatpush1.msra.mxu0 0.0
    %3099 = vmatprep.subr.mxu0 0.0
    %3100 = vmatpush1.msra.mxu0 0.0
    %3101 = vmatprep.subr.mxu0 0.0
    %3102 = vmatpush1.msra.mxu0 0.0
    %3103 = vmatprep.mubr.f32.mxu0 0.0
    %3104 = vmatmul.mubr.f32.gmra.mrb[0].mxu0 %v2962
    %v3105 = vpop.f32.mrb[0].mxu0
    %v3106 = vadd.f32 0.0, %v3105
    %v3107 = vpop.f32.mrb[0].mxu0
    %3108 = vdwg.mxu0
    %v3109 = vadd.f32 %v2965, %v3035
    %v3110 = vxor.u32 %v3109, 2147483648
    %v3111 = vmul.f32 %v3110, 1.442695
    %v3112 = vpow.pop %v3111
    %v3113 = vadd.f32 %v3112, 1.0
    %v3114 = vrcp.pop %v3113
    %v3115 = vmul.f32 1.0, %v3114
    %v3116 = vadd.f32 %v2966, %v3037
    %v3117 = vxor.u32 %v3116, 2147483648
    %v3118 = vmul.f32 %v3117, 1.442695
    %v3119 = vpow.pop %v3118
    %v3120 = vadd.f32 %v3119, 1.0
    %v3121 = vrcp.pop %v3120
    %v3122 = vmul.f32 1.0, %v3121
    %v3123 = vadd.f32 %v3106, %v2281
    %v3124 = vmul.f32 %v3115, %v3123
    %v3125 = vadd.f32 %v2967, %v3124
    %v3126 = vtanh.pop %v3125
    %v3127 = vsub.f32 1.0, %v3122
    %v3128 = vmul.f32 %v3127, %v3126
    %v3129 = vmul.f32 %v3122, %v2962
    %v3130 = vadd.f32 %v3128, %v3129
    %s3131 = smul.addr %s1411, 8
    %s3132 = scalar_lea.vmem [#allocation4], %s3131
    %v3133 = vld [vmem:[%s3132] sm:$0xff]
    %v3134 = vld [vmem:[%s3132 + $0x8] sm:$0xff]
    %v3135 = vld [vmem:[%s3132 + $0x10] sm:$0xff]
    %3136 = vmatprep.subr.mxu0 %v2069
    %3137 = vmatpush1.msra.mxu0 %v2068
    %3138 = vmatprep.subr.mxu0 %v2072
    %3139 = vmatpush1.msra.mxu0 %v2071
    %3140 = vmatprep.subr.mxu0 %v2075
    %3141 = vmatpush1.msra.mxu0 %v2074
    %3142 = vmatprep.subr.mxu0 %v2078
    %3143 = vmatpush1.msra.mxu0 %v2077
    %3144 = vmatprep.subr.mxu0 %v2081
    %3145 = vmatpush1.msra.mxu0 %v2080
    %3146 = vmatprep.subr.mxu0 %v2084
    %3147 = vmatpush1.msra.mxu0 %v2083
    %3148 = vmatprep.subr.mxu0 %v2087
    %3149 = vmatpush1.msra.mxu0 %v2086
    %3150 = vmatprep.subr.mxu0 %v2090
    %3151 = vmatpush1.msra.mxu0 %v2089
    %3152 = vmatprep.subr.mxu0 %v2093
    %3153 = vmatpush1.msra.mxu0 %v2092
    %3154 = vmatprep.subr.mxu0 %v2096
    %3155 = vmatpush1.msra.mxu0 %v2095
    %3156 = vmatprep.subr.mxu0 %v2099
    %3157 = vmatpush1.msra.mxu0 %v2098
    %3158 = vmatprep.subr.mxu0 %v2102
    %3159 = vmatpush1.msra.mxu0 %v2101
    %3160 = vmatprep.subr.mxu0 %v2105
    %3161 = vmatpush1.msra.mxu0 %v2104
    %3162 = vmatprep.subr.mxu0 %v2108
    %3163 = vmatpush1.msra.mxu0 %v2107
    %3164 = vmatprep.subr.mxu0 %v2111
    %3165 = vmatpush1.msra.mxu0 %v2110
    %3166 = vmatprep.subr.mxu0 %v2114
    %3167 = vmatpush1.msra.mxu0 %v2113
    %3168 = vmatprep.subr.mxu0 0.0
    %3169 = vmatpush1.msra.mxu0 0.0
    %3170 = vmatprep.subr.mxu0 0.0
    %3171 = vmatpush1.msra.mxu0 0.0
    %3172 = vmatprep.subr.mxu0 0.0
    %3173 = vmatpush1.msra.mxu0 0.0
    %3174 = vmatprep.subr.mxu0 0.0
    %3175 = vmatpush1.msra.mxu0 0.0
    %3176 = vmatprep.subr.mxu0 0.0
    %3177 = vmatpush1.msra.mxu0 0.0
    %3178 = vmatprep.subr.mxu0 0.0
    %3179 = vmatpush1.msra.mxu0 0.0
    %3180 = vmatprep.subr.mxu0 0.0
    %3181 = vmatpush1.msra.mxu0 0.0
    %3182 = vmatprep.subr.mxu0 0.0
    %3183 = vmatpush1.msra.mxu0 0.0
    %3184 = vmatprep.subr.mxu0 0.0
    %3185 = vmatpush1.msra.mxu0 0.0
    %3186 = vmatprep.subr.mxu0 0.0
    %3187 = vmatpush1.msra.mxu0 0.0
    %3188 = vmatprep.subr.mxu0 0.0
    %3189 = vmatpush1.msra.mxu0 0.0
    %3190 = vmatprep.subr.mxu0 0.0
    %3191 = vmatpush1.msra.mxu0 0.0
    %3192 = vmatprep.subr.mxu0 0.0
    %3193 = vmatpush1.msra.mxu0 0.0
    %3194 = vmatprep.subr.mxu0 0.0
    %3195 = vmatpush1.msra.mxu0 0.0
    %3196 = vmatprep.subr.mxu0 0.0
    %3197 = vmatpush1.msra.mxu0 0.0
    %3198 = vmatprep.subr.mxu0 0.0
    %3199 = vmatpush1.msra.mxu0 0.0
    %3200 = vmatprep.mubr.f32.mxu0 0.0
    %3201 = vmatmul.mubr.f32.gmra.mrb[0].mxu0 %v3130
    %v3202 = vpop.f32.mrb[0].mxu0
    %v3203 = vadd.f32 0.0, %v3202
    %v3204 = vpop.f32.mrb[0].mxu0
    %v3205 = vadd.f32 0.0, %v3204
    %3206 = vdwg.mxu0
    %3207 = vmatprep.subr.mxu0 0.0
    %3208 = vmatpush1.msra.mxu0 %v2070
    %3209 = vmatprep.subr.mxu0 0.0
    %3210 = vmatpush1.msra.mxu0 %v2073
    %3211 = vmatprep.subr.mxu0 0.0
    %3212 = vmatpush1.msra.mxu0 %v2076
    %3213 = vmatprep.subr.mxu0 0.0
    %3214 = vmatpush1.msra.mxu0 %v2079
    %3215 = vmatprep.subr.mxu0 0.0
    %3216 = vmatpush1.msra.mxu0 %v2082
    %3217 = vmatprep.subr.mxu0 0.0
    %3218 = vmatpush1.msra.mxu0 %v2085
    %3219 = vmatprep.subr.mxu0 0.0
    %3220 = vmatpush1.msra.mxu0 %v2088
    %3221 = vmatprep.subr.mxu0 0.0
    %3222 = vmatpush1.msra.mxu0 %v2091
    %3223 = vmatprep.subr.mxu0 0.0
    %3224 = vmatpush1.msra.mxu0 %v2094
    %3225 = vmatprep.subr.mxu0 0.0
    %3226 = vmatpush1.msra.mxu0 %v2097
    %3227 = vmatprep.subr.mxu0 0.0
    %3228 = vmatpush1.msra.mxu0 %v2100
    %3229 = vmatprep.subr.mxu0 0.0
    %3230 = vmatpush1.msra.mxu0 %v2103
    %3231 = vmatprep.subr.mxu0 0.0
    %3232 = vmatpush1.msra.mxu0 %v2106
    %3233 = vmatprep.subr.mxu0 0.0
    %3234 = vmatpush1.msra.mxu0 %v2109
    %3235 = vmatprep.subr.mxu0 0.0
    %3236 = vmatpush1.msra.mxu0 %v2112
    %3237 = vmatprep.subr.mxu0 0.0
    %3238 = vmatpush1.msra.mxu0 %v2115
    %3239 = vmatprep.subr.mxu0 0.0
    %3240 = vmatpush1.msra.mxu0 0.0
    %3241 = vmatprep.subr.mxu0 0.0
    %3242 = vmatpush1.msra.mxu0 0.0
    %3243 = vmatprep.subr.mxu0 0.0
    %3244 = vmatpush1.msra.mxu0 0.0
    %3245 = vmatprep.subr.mxu0 0.0
    %3246 = vmatpush1.msra.mxu0 0.0
    %3247 = vmatprep.subr.mxu0 0.0
    %3248 = vmatpush1.msra.mxu0 0.0
    %3249 = vmatprep.subr.mxu0 0.0
    %3250 = vmatpush1.msra.mxu0 0.0
    %3251 = vmatprep.subr.mxu0 0.0
    %3252 = vmatpush1.msra.mxu0 0.0
    %3253 = vmatprep.subr.mxu0 0.0
    %3254 = vmatpush1.msra.mxu0 0.0
    %3255 = vmatprep.subr.mxu0 0.0
    %3256 = vmatpush1.msra.mxu0 0.0
    %3257 = vmatprep.subr.mxu0 0.0
    %3258 = vmatpush1.msra.mxu0 0.0
    %3259 = vmatprep.subr.mxu0 0.0
    %3260 = vmatpush1.msra.mxu0 0.0
    %3261 = vmatprep.subr.mxu0 0.0
    %3262 = vmatpush1.msra.mxu0 0.0
    %3263 = vmatprep.subr.mxu0 0.0
    %3264 = vmatpush1.msra.mxu0 0.0
    %3265 = vmatprep.subr.mxu0 0.0
    %3266 = vmatpush1.msra.mxu0 0.0
    %3267 = vmatprep.subr.mxu0 0.0
    %3268 = vmatpush1.msra.mxu0 0.0
    %3269 = vmatprep.subr.mxu0 0.0
    %3270 = vmatpush1.msra.mxu0 0.0
    %3271 = vmatprep.mubr.f32.mxu0 0.0
    %3272 = vmatmul.mubr.f32.gmra.mrb[0].mxu0 %v3130
    %v3273 = vpop.f32.mrb[0].mxu0
    %v3274 = vadd.f32 0.0, %v3273
    %v3275 = vpop.f32.mrb[0].mxu0
    %3276 = vdwg.mxu0
    %v3277 = vadd.f32 %v3133, %v3203
    %v3278 = vxor.u32 %v3277, 2147483648
    %v3279 = vmul.f32 %v3278, 1.442695
    %v3280 = vpow.pop %v3279
    %v3281 = vadd.f32 %v3280, 1.0
    %v3282 = vrcp.pop %v3281
    %v3283 = vmul.f32 1.0, %v3282
    %v3284 = vadd.f32 %v3134, %v3205
    %v3285 = vxor.u32 %v3284, 2147483648
    %v3286 = vmul.f32 %v3285, 1.442695
    %v3287 = vpow.pop %v3286
    %v3288 = vadd.f32 %v3287, 1.0
    %v3289 = vrcp.pop %v3288
    %v3290 = vmul.f32 1.0, %v3289
    %v3291 = vadd.f32 %v3274, %v2281
    %v3292 = vmul.f32 %v3283, %v3291
    %v3293 = vadd.f32 %v3135, %v3292
    %v3294 = vtanh.pop %v3293
    %v3295 = vsub.f32 1.0, %v3290
    %v3296 = vmul.f32 %v3295, %v3294
    %v3297 = vmul.f32 %v3290, %v3130
    %v3298 = vadd.f32 %v3296, %v3297
    %s3299 = smul.addr %s1582, 8
    %s3300 = scalar_lea.vmem [#allocation4], %s3299
    %v3301 = vld [vmem:[%s3300] sm:$0xff]
    %v3302 = vld [vmem:[%s3300 + $0x8] sm:$0xff]
    %v3303 = vld [vmem:[%s3300 + $0x10] sm:$0xff]
    %3304 = vmatprep.subr.mxu0 %v2069
    %3305 = vmatpush1.msra.mxu0 %v2068
    %3306 = vmatprep.subr.mxu0 %v2072
    %3307 = vmatpush1.msra.mxu0 %v2071
    %3308 = vmatprep.subr.mxu0 %v2075
    %3309 = vmatpush1.msra.mxu0 %v2074
    %3310 = vmatprep.subr.mxu0 %v2078
    %3311 = vmatpush1.msra.mxu0 %v2077
    %3312 = vmatprep.subr.mxu0 %v2081
    %3313 = vmatpush1.msra.mxu0 %v2080
    %3314 = vmatprep.subr.mxu0 %v2084
    %3315 = vmatpush1.msra.mxu0 %v2083
    %3316 = vmatprep.subr.mxu0 %v2087
    %3317 = vmatpush1.msra.mxu0 %v2086
    %3318 = vmatprep.subr.mxu0 %v2090
    %3319 = vmatpush1.msra.mxu0 %v2089
    %3320 = vmatprep.subr.mxu0 %v2093
    %3321 = vmatpush1.msra.mxu0 %v2092
    %3322 = vmatprep.subr.mxu0 %v2096
    %3323 = vmatpush1.msra.mxu0 %v2095
    %3324 = vmatprep.subr.mxu0 %v2099
    %3325 = vmatpush1.msra.mxu0 %v2098
    %3326 = vmatprep.subr.mxu0 %v2102
    %3327 = vmatpush1.msra.mxu0 %v2101
    %3328 = vmatprep.subr.mxu0 %v2105
    %3329 = vmatpush1.msra.mxu0 %v2104
    %3330 = vmatprep.subr.mxu0 %v2108
    %3331 = vmatpush1.msra.mxu0 %v2107
    %3332 = vmatprep.subr.mxu0 %v2111
    %3333 = vmatpush1.msra.mxu0 %v2110
    %3334 = vmatprep.subr.mxu0 %v2114
    %3335 = vmatpush1.msra.mxu0 %v2113
    %3336 = vmatprep.subr.mxu0 0.0
    %3337 = vmatpush1.msra.mxu0 0.0
    %3338 = vmatprep.subr.mxu0 0.0
    %3339 = vmatpush1.msra.mxu0 0.0
    %3340 = vmatprep.subr.mxu0 0.0
    %3341 = vmatpush1.msra.mxu0 0.0
    %3342 = vmatprep.subr.mxu0 0.0
    %3343 = vmatpush1.msra.mxu0 0.0
    %3344 = vmatprep.subr.mxu0 0.0
    %3345 = vmatpush1.msra.mxu0 0.0
    %3346 = vmatprep.subr.mxu0 0.0
    %3347 = vmatpush1.msra.mxu0 0.0
    %3348 = vmatprep.subr.mxu0 0.0
    %3349 = vmatpush1.msra.mxu0 0.0
    %3350 = vmatprep.subr.mxu0 0.0
    %3351 = vmatpush1.msra.mxu0 0.0
    %3352 = vmatprep.subr.mxu0 0.0
    %3353 = vmatpush1.msra.mxu0 0.0
    %3354 = vmatprep.subr.mxu0 0.0
    %3355 = vmatpush1.msra.mxu0 0.0
    %3356 = vmatprep.subr.mxu0 0.0
    %3357 = vmatpush1.msra.mxu0 0.0
    %3358 = vmatprep.subr.mxu0 0.0
    %3359 = vmatpush1.msra.mxu0 0.0
    %3360 = vmatprep.subr.mxu0 0.0
    %3361 = vmatpush1.msra.mxu0 0.0
    %3362 = vmatprep.subr.mxu0 0.0
    %3363 = vmatpush1.msra.mxu0 0.0
    %3364 = vmatprep.subr.mxu0 0.0
    %3365 = vmatpush1.msra.mxu0 0.0
    %3366 = vmatprep.subr.mxu0 0.0
    %3367 = vmatpush1.msra.mxu0 0.0
    %3368 = vmatprep.mubr.f32.mxu0 0.0
    %3369 = vmatmul.mubr.f32.gmra.mrb[0].mxu0 %v3298
    %v3370 = vpop.f32.mrb[0].mxu0
    %v3371 = vadd.f32 0.0, %v3370
    %v3372 = vpop.f32.mrb[0].mxu0
    %v3373 = vadd.f32 0.0, %v3372
    %3374 = vdwg.mxu0
    %3375 = vmatprep.subr.mxu0 0.0
    %3376 = vmatpush1.msra.mxu0 %v2070
    %3377 = vmatprep.subr.mxu0 0.0
    %3378 = vmatpush1.msra.mxu0 %v2073
    %3379 = vmatprep.subr.mxu0 0.0
    %3380 = vmatpush1.msra.mxu0 %v2076
    %3381 = vmatprep.subr.mxu0 0.0
    %3382 = vmatpush1.msra.mxu0 %v2079
    %3383 = vmatprep.subr.mxu0 0.0
    %3384 = vmatpush1.msra.mxu0 %v2082
    %3385 = vmatprep.subr.mxu0 0.0
    %3386 = vmatpush1.msra.mxu0 %v2085
    %3387 = vmatprep.subr.mxu0 0.0
    %3388 = vmatpush1.msra.mxu0 %v2088
    %3389 = vmatprep.subr.mxu0 0.0
    %3390 = vmatpush1.msra.mxu0 %v2091
    %3391 = vmatprep.subr.mxu0 0.0
    %3392 = vmatpush1.msra.mxu0 %v2094
    %3393 = vmatprep.subr.mxu0 0.0
    %3394 = vmatpush1.msra.mxu0 %v2097
    %3395 = vmatprep.subr.mxu0 0.0
    %3396 = vmatpush1.msra.mxu0 %v2100
    %3397 = vmatprep.subr.mxu0 0.0
    %3398 = vmatpush1.msra.mxu0 %v2103
    %3399 = vmatprep.subr.mxu0 0.0
    %3400 = vmatpush1.msra.mxu0 %v2106
    %3401 = vmatprep.subr.mxu0 0.0
    %3402 = vmatpush1.msra.mxu0 %v2109
    %3403 = vmatprep.subr.mxu0 0.0
    %3404 = vmatpush1.msra.mxu0 %v2112
    %3405 = vmatprep.subr.mxu0 0.0
    %3406 = vmatpush1.msra.mxu0 %v2115
    %3407 = vmatprep.subr.mxu0 0.0
    %3408 = vmatpush1.msra.mxu0 0.0
    %3409 = vmatprep.subr.mxu0 0.0
    %3410 = vmatpush1.msra.mxu0 0.0
    %3411 = vmatprep.subr.mxu0 0.0
    %3412 = vmatpush1.msra.mxu0 0.0
    %3413 = vmatprep.subr.mxu0 0.0
    %3414 = vmatpush1.msra.mxu0 0.0
    %3415 = vmatprep.subr.mxu0 0.0
    %3416 = vmatpush1.msra.mxu0 0.0
    %3417 = vmatprep.subr.mxu0 0.0
    %3418 = vmatpush1.msra.mxu0 0.0
    %3419 = vmatprep.subr.mxu0 0.0
    %3420 = vmatpush1.msra.mxu0 0.0
    %3421 = vmatprep.subr.mxu0 0.0
    %3422 = vmatpush1.msra.mxu0 0.0
    %3423 = vmatprep.subr.mxu0 0.0
    %3424 = vmatpush1.msra.mxu0 0.0
    %3425 = vmatprep.subr.mxu0 0.0
    %3426 = vmatpush1.msra.mxu0 0.0
    %3427 = vmatprep.subr.mxu0 0.0
    %3428 = vmatpush1.msra.mxu0 0.0
    %3429 = vmatprep.subr.mxu0 0.0
    %3430 = vmatpush1.msra.mxu0 0.0
    %3431 = vmatprep.subr.mxu0 0.0
    %3432 = vmatpush1.msra.mxu0 0.0
    %3433 = vmatprep.subr.mxu0 0.0
    %3434 = vmatpush1.msra.mxu0 0.0
    %3435 = vmatprep.subr.mxu0 0.0
    %3436 = vmatpush1.msra.mxu0 0.0
    %3437 = vmatprep.subr.mxu0 0.0
    %3438 = vmatpush1.msra.mxu0 0.0
    %3439 = vmatprep.mubr.f32.mxu0 0.0
    %3440 = vmatmul.mubr.f32.gmra.mrb[0].mxu0 %v3298
    %v3441 = vpop.f32.mrb[0].mxu0
    %v3442 = vadd.f32 0.0, %v3441
    %v3443 = vpop.f32.mrb[0].mxu0
    %3444 = vdwg.mxu0
    %v3445 = vadd.f32 %v3301, %v3371
    %v3446 = vxor.u32 %v3445, 2147483648
    %v3447 = vmul.f32 %v3446, 1.442695
    %v3448 = vpow.pop %v3447
    %v3449 = vadd.f32 %v3448, 1.0
    %v3450 = vrcp.pop %v3449
    %v3451 = vmul.f32 1.0, %v3450
    %v3452 = vadd.f32 %v3302, %v3373
    %v3453 = vxor.u32 %v3452, 2147483648
    %v3454 = vmul.f32 %v3453, 1.442695
    %v3455 = vpow.pop %v3454
    %v3456 = vadd.f32 %v3455, 1.0
    %v3457 = vrcp.pop %v3456
    %v3458 = vmul.f32 1.0, %v3457
    %v3459 = vadd.f32 %v3442, %v2281
    %v3460 = vmul.f32 %v3451, %v3459
    %v3461 = vadd.f32 %v3303, %v3460
    %v3462 = vtanh.pop %v3461
    %v3463 = vsub.f32 1.0, %v3458
    %v3464 = vmul.f32 %v3463, %v3462
    %v3465 = vmul.f32 %v3458, %v3298
    %v3466 = vadd.f32 %v3464, %v3465
    %vm3467 = vcmask 261120
    %3468 = vst.msk [vmem:[#allocation5] sm:$0xff] %vm3467, %v3466
    // Predicated region
    $region38: #{gru_model_forward.1} parent=1 // pred_check
      _
    $region39: #{gru_model_forward.1} parent=1 // pred_check_branch
      %3470 = sbr.rel (0) target = $region41
    $region40: #{gru_model_forward.1} parent=1 // pred_region
      %s3472 = ssub.s32 128, 128
      %3473 = vsyncadd [#allocation6], %s3472
      %s3475 = sshll.u32 [#allocation5], 4
      %s3476 = int_to_ptr.vmem [resolvable:$true] %s3475
      %3478 = dma.vmem_to_hbm [thread:$0]  %s3476, 128, %s9, [#allocation6]
    $region41: #{gru_model_forward.1} parent=1 // pred_fallthru
      _
    // Predicated region
    $region42: #{gru_model_forward.1} parent=1 // pred_check
      _
    $region43: #{gru_model_forward.1} parent=1 // pred_check_branch
      %3480 = sbr.rel (0) target = $region45
    $region44: #{gru_model_forward.1} parent=1 // pred_region
      %3481 = dma.done [#allocation6], 128
    $region45: #{gru_model_forward.1} parent=1 // pred_fallthru
      _
    %3482 = vsyncpa [#allocation6], 1

</llo_original>
